<compile_context>
chip_gen: v7x
topology: tpu7x:2x2x1
jax: 0.10.0
libtpu: 0.0.40
codegen_flags: <defaults>
</compile_context>

<pallas_src>
import functools

import jax
import jax.numpy as jnp
from jax import lax
from jax.experimental import pallas as pl
from jax.experimental.pallas import tpu as pltpu


# ----------------------------------------------------------------------------
# Pallas kernel: both PredictionConv heads fused, one batch element / grid step.
# ----------------------------------------------------------------------------
def _dbnet_heads_kernel(x_ref, w1_ref, w2_ref, w3_ref, b_ref, out_ref, *,
                        H, W, CO, eps=1e-5):
    # x_ref : (1, (H+2)*W, Cin)  bf16  H-padded NHWC input, spatial flattened
    # w1_ref: (3, Cin, 3*CO)     bf16  [dh][ci, dw*CO + head*aux + co]
    # w2_ref: (CO, 4*CO)         bf16  cols = (a, b, head, co), block-diag in head
    # w3_ref: (4*CO, NCOL)       bf16  rows = (a, b, head, ci),
    #                                  cols = (a, a2, b, b2, head, class)
    # b_ref : (1, NCOL)          f32
    # out_ref:(1, H*W, NCOL)     f32   NCOL = 16 * n_heads * num_classes
    HW = H * W
    f32 = jnp.float32

    # --- conv_1: 3x3 / pad 1 -> 3 row-sliced matmuls + shift-and-mask combine --
    rid = lax.broadcasted_iota(jnp.int32, (HW, 1), 0).astype(f32)
    j = rid - float(W) * jnp.floor(rid / float(W))          # j = row % W (exact)
    left_ok = (j > 0.5).astype(f32)                          # j-1 in range
    right_ok = (j < float(W) - 1.5).astype(f32)              # j+1 in range
    zrow = jnp.zeros((1, CO), f32)

    acc = jnp.zeros((HW, CO), f32)
    for dh in range(3):
        xs = x_ref[0, pl.ds(dh * W, HW), :]                               # (HW, Cin)
        t = jnp.dot(xs, w1_ref[dh], preferred_element_type=f32)           # (HW, 3*CO)
        acc = acc + t[:, CO:2 * CO]                                       # dw = 1
        acc = acc + left_ok * jnp.concatenate(
            [zrow, t[:HW - 1, 0:CO]], axis=0)                             # dw = 0
        acc = acc + right_ok * jnp.concatenate(
            [t[1:, 2 * CO:3 * CO], zrow], axis=0)                         # dw = 2

    # --- InstanceNorm2d (no affine, biased var) + ReLU, single-pass stats -----
    inv_n1 = 1.0 / HW
    s1 = jnp.sum(acc, axis=0, keepdims=True)
    q1 = jnp.sum(acc * acc, axis=0, keepdims=True)
    m1 = s1 * inv_n1
    v1 = jnp.maximum(q1 * inv_n1 - m1 * m1, 0.0)
    y1 = jnp.maximum((acc - m1) * lax.rsqrt(v1 + eps), 0.0)

    # --- conv_2: ConvT(2,2,s=2), 4 taps x both heads in ONE matmul -------------
    z = jnp.dot(y1.astype(jnp.bfloat16), w2_ref[...],
                preferred_element_type=f32)                               # (HW, 4*CO)

    # InstanceNorm over the 2H x 2W map: fold the 4 tap column-blocks per channel
    inv_n2 = 1.0 / (4 * HW)
    s2 = jnp.sum(z, axis=0, keepdims=True)
    q2 = jnp.sum(z * z, axis=0, keepdims=True)
    s2c = s2[:, 0:CO] + s2[:, CO:2 * CO] + s2[:, 2 * CO:3 * CO] + s2[:, 3 * CO:4 * CO]
    q2c = q2[:, 0:CO] + q2[:, CO:2 * CO] + q2[:, 2 * CO:3 * CO] + q2[:, 3 * CO:4 * CO]
    m2 = s2c * inv_n2
    v2 = jnp.maximum(q2c * inv_n2 - m2 * m2, 0.0)
    i2 = lax.rsqrt(v2 + eps)
    m2t = jnp.concatenate([m2, m2, m2, m2], axis=1)                       # (1, 4*CO)
    i2t = jnp.concatenate([i2, i2, i2, i2], axis=1)
    y2 = jnp.maximum((z - m2t) * i2t, 0.0)

    # --- conv_3: ConvT(2,2,s=2) + bias, one matmul + one lane-dense store ------
    out = jnp.dot(y2.astype(jnp.bfloat16), w3_ref[...],
                  preferred_element_type=f32)                             # (HW, NCOL)
    out_ref[0, :, :] = out + b_ref[...]


# ----------------------------------------------------------------------------
# Wrapper: fused heads.  PyTorch NCHW in / NCHW out, weights in torch layout.
# ----------------------------------------------------------------------------
def dbnet_heads_pallas(x_nchw, heads_params):
    """x_nchw: (N, Cin, H, W).  heads_params: list of
    (w1 (aux,Cin,3,3), w2 (aux,aux,2,2), w3 (aux,C,2,2), b3 (C,)).
    Returns (N, n_heads, C, 4H, 4W) float32."""
    N, Cin, H, W = x_nchw.shape
    nh = len(heads_params)
    aux = heads_params[0][0].shape[0]
    C = heads_params[0][2].shape[1]
    CO = nh * aux
    NCOL = 16 * nh * C

    # ---- activations: NCHW -> H-padded, flattened NHWC, bf16 (once, both heads)
    x = jnp.transpose(x_nchw.astype(jnp.bfloat16), (0, 2, 3, 1))    # (N, H, W, Cin)
    x = jnp.pad(x, ((0, 0), (1, 1), (0, 0), (0, 0)))
    x = x.reshape(N, (H + 2) * W, Cin)

    # ---- weight packing (taps / heads concatenated along the lane axis) -------
    w1s = jnp.stack([p[0] for p in heads_params]).astype(jnp.float32)  # (nh,aux,Cin,3,3)
    w2s = jnp.stack([p[1] for p in heads_params]).astype(jnp.float32)  # (nh,aux,aux,2,2)
    w3s = jnp.stack([p[2] for p in heads_params]).astype(jnp.float32)  # (nh,aux,C,2,2)
    b3s = jnp.stack([p[3] for p in heads_params]).astype(jnp.float32)  # (nh,C)
    eye_h = jnp.eye(nh, dtype=jnp.float32)
    eye_2 = jnp.eye(2, dtype=jnp.float32)

    # conv_1: (dh, ci, dw, head, co)
    w1p = jnp.transpose(w1s, (3, 2, 4, 0, 1)).reshape(3, Cin, 3 * CO)
    # conv_2: rows (head, ci), cols (a, b, head, co); block-diagonal over head
    w2p = jnp.einsum('hH,hicab->hiabHc', eye_h, w2s).reshape(CO, 4 * CO)
    # conv_3: rows (a, b, head, ci), cols (a, a2, b, b2, head, class)
    w3p = jnp.einsum('aA,bB,hH,hicxy->abhiAxByHc',
                     eye_2, eye_2, eye_h, w3s).reshape(4 * CO, NCOL)
    bp = jnp.broadcast_to(b3s, (2, 2, 2, 2, nh, C)).reshape(1, NCOL)

    w1p = w1p.astype(jnp.bfloat16)
    w2p = w2p.astype(jnp.bfloat16)
    w3p = w3p.astype(jnp.bfloat16)

    kernel = functools.partial(_dbnet_heads_kernel, H=H, W=W, CO=CO)
    out = pl.pallas_call(
        kernel,
        out_shape=jax.ShapeDtypeStruct((N, H * W, NCOL), jnp.float32),
        grid=(N,),
        in_specs=[
            pl.BlockSpec((1, (H + 2) * W, Cin), lambda n: (n, 0, 0)),
            pl.BlockSpec((3, Cin, 3 * CO), lambda n: (0, 0, 0)),
            pl.BlockSpec((CO, 4 * CO), lambda n: (0, 0)),
            pl.BlockSpec((4 * CO, NCOL), lambda n: (0, 0)),
            pl.BlockSpec((1, NCOL), lambda n: (0, 0)),
        ],
        out_specs=pl.BlockSpec((1, H * W, NCOL), lambda n: (n, 0, 0)),
        compiler_params=pltpu.CompilerParams(
            dimension_semantics=("parallel",)),
    )(x, w1p, w2p, w3p, bp)

    # ---- un-interleave: cols = (a, a2, b, b2, head, class), rows = i*W + j ----
    out = out.reshape(N, H, W, 2, 2, 2, 2, nh, C)       # (n, i, j, a, a2, b, b2, h, c)
    out = out.transpose(0, 7, 8, 1, 3, 4, 2, 5, 6)       # (n, h, c, i, a, a2, j, b, b2)
    return out.reshape(N, nh, C, 4 * H, 4 * W)


def dbnet_forward(features, probas_params, thresholds_params, infer=False):
    if infer:
        return dbnet_heads_pallas(features, [probas_params])[:, 0]
    out = dbnet_heads_pallas(features, [probas_params, thresholds_params])
    return out[:, 0], out[:, 1]
# TODO(synk): compute_loss / compute_loss_mining / dice_loss / binarize /
# visualize_outputs are training/logging utilities, not part of forward();
# they are not implemented as kernels.


# ----------------------------------------------------------------------------
# Plain-JAX reference (independent path: XLA conv + einsum) for validation
# ----------------------------------------------------------------------------
def _instance_norm_relu_ref(x, eps=1e-5):
    mean = x.mean(axis=(2, 3), keepdims=True)
    var = ((x - mean) ** 2).mean(axis=(2, 3), keepdims=True)
    return jnp.maximum((x - mean) / jnp.sqrt(var + eps), 0.0)


def _conv3x3_ref(x, w):
    return lax.conv_general_dilated(
        x, w, (1, 1), ((1, 1), (1, 1)),
        dimension_numbers=("NCHW", "OIHW", "NCHW"),
        precision=lax.Precision.HIGHEST)


def _convT2x2_ref(x, w, b=None):
    t = jnp.einsum("nihw,ioab->nohawb", x, w, precision=lax.Precision.HIGHEST)
    N, O, H, _, W, _ = t.shape
    out = t.reshape(N, O, 2 * H, 2 * W)
    if b is not None:
        out = out + b[None, :, None, None]
    return out


def prediction_conv_ref(x, w1, w2, w3, b3):
    y = _instance_norm_relu_ref(_conv3x3_ref(x, w1))
    y = _instance_norm_relu_ref(_convT2x2_ref(y, w2))
    return _convT2x2_ref(y, w3, b3)


# ----------------------------------------------------------------------------
def init_prediction_conv(key, hidden_size, num_classes):
    aux = hidden_size // 4
    k1, k2, k3, k4 = jax.random.split(key, 4)
    w1 = 0.1 * jax.random.normal(k1, (aux, hidden_size, 3, 3), jnp.float32)
    w2 = 0.1 * jax.random.normal(k2, (aux, aux, 2, 2), jnp.float32)
    w3 = 0.1 * jax.random.normal(k3, (aux, num_classes, 2, 2), jnp.float32)
    b3 = 0.1 * jax.random.normal(k4, (num_classes,), jnp.float32)
    return w1, w2, w3, b3


if __name__ == "__main__":
    key = jax.random.PRNGKey(0)
    kx, kp, kt = jax.random.split(key, 3)

    hidden_size, num_classes = 32, 2
    N, H, W = 2, 16, 16

    x = jax.random.normal(kx, (N, hidden_size, H, W), jnp.float32)
    probas_params = init_prediction_conv(kp, hidden_size, num_classes)
    thresholds_params = init_prediction_conv(kt, hidden_size, num_classes)

    probas, thresholds = dbnet_forward(x, probas_params, thresholds_params)
    jax.block_until_ready((probas, thresholds))

    assert probas.shape == (N, num_classes, 4 * H, 4 * W)
    assert thresholds.shape == (N, num_classes, 4 * H, 4 * W)

    probas_ref = prediction_conv_ref(x, *probas_params)
    thresholds_ref = prediction_conv_ref(x, *thresholds_params)
    # bf16 matmul path vs f32 HIGHEST-precision reference -> modest tolerance.
    assert jnp.allclose(probas, probas_ref, atol=3e-2, rtol=3e-2)
    assert jnp.allclose(thresholds, thresholds_ref, atol=3e-2, rtol=3e-2)

    print("KERNEL_OK")
</pallas_src>

<mosaic_0001>
module attributes {stable_mosaic.version = 11 : i64} {
  func.func @_dbnet_heads_kernel(%arg0: i32, %arg1: memref<1x288x32xbf16, #tpu.memory_space<vmem>>, %arg2: memref<3x32x48xbf16, #tpu.memory_space<vmem>>, %arg3: memref<16x64xbf16, #tpu.memory_space<vmem>>, %arg4: memref<64x64xbf16, #tpu.memory_space<vmem>>, %arg5: memref<1x64xf32, #tpu.memory_space<vmem>>, %arg6: memref<1x256x64xf32, #tpu.memory_space<vmem>>) attributes {dimension_semantics = [#tpu.dimension_semantics<parallel>], iteration_bounds = array<i64: 2>, scalar_prefetch = 0 : i64, scratch_operands = 0 : i64, tpu.core_type = #tpu.core_type<tc>, window_params = [{transform_indices = @transform_0, window_bounds = array<i64: 1, 288, 32>}, {pipeline_mode = #tpu.pipeline_mode<synchronous>, transform_indices = @transform_1, window_bounds = array<i64: 3, 32, 48>}, {pipeline_mode = #tpu.pipeline_mode<synchronous>, transform_indices = @transform_2, window_bounds = array<i64: 16, 64>}, {pipeline_mode = #tpu.pipeline_mode<synchronous>, transform_indices = @transform_3, window_bounds = array<i64: 64, 64>}, {pipeline_mode = #tpu.pipeline_mode<synchronous>, transform_indices = @transform_4, window_bounds = array<i64: 1, 64>}, {transform_indices = @transform_5, window_bounds = array<i64: 1, 256, 64>}]} {
    %0 = tpu.iota {dimensions = array<i32: 0>} : vector<256x1xi32>
    %1 = arith.sitofp %0 : vector<256x1xi32> to vector<256x1xf32>
    %cst = arith.constant 1.600000e+01 : f32
    %2 = vector.broadcast %cst : f32 to vector<256x1xf32>
    %3 = arith.divf %1, %2 : vector<256x1xf32>
    %4 = math.floor %3 : vector<256x1xf32>
    %cst_0 = arith.constant 1.600000e+01 : f32
    %5 = vector.broadcast %cst_0 : f32 to vector<256x1xf32>
    %6 = arith.mulf %5, %4 : vector<256x1xf32>
    %7 = arith.subf %1, %6 : vector<256x1xf32>
    %cst_1 = arith.constant 5.000000e-01 : f32
    %8 = vector.broadcast %cst_1 : f32 to vector<256x1xf32>
    %9 = arith.cmpf ogt, %7, %8 : vector<256x1xf32>
    %10 = arith.extui %9 : vector<256x1xi1> to vector<256x1xi32>
    %11 = arith.sitofp %10 : vector<256x1xi32> to vector<256x1xf32>
    %cst_2 = arith.constant 1.450000e+01 : f32
    %12 = vector.broadcast %cst_2 : f32 to vector<256x1xf32>
    %13 = arith.cmpf olt, %7, %12 : vector<256x1xf32>
    %14 = arith.extui %13 : vector<256x1xi1> to vector<256x1xi32>
    %15 = arith.sitofp %14 : vector<256x1xi32> to vector<256x1xf32>
    %cst_3 = arith.constant 0.000000e+00 : f32
    %16 = vector.broadcast %cst_3 : f32 to vector<1x16xf32>
    %cst_4 = arith.constant 0.000000e+00 : f32
    %17 = vector.broadcast %cst_4 : f32 to vector<256x16xf32>
    %c0 = arith.constant 0 : index
    %c0_5 = arith.constant 0 : index
    %c0_6 = arith.constant 0 : index
    %18 = vector.load %arg1[%c0, %c0_5, %c0_6] : memref<1x288x32xbf16, #tpu.memory_space<vmem>>, vector<1x256x32xbf16>
    %19 = vector.shape_cast %18 : vector<1x256x32xbf16> to vector<256x32xbf16>
    %c0_7 = arith.constant 0 : index
    %c0_8 = arith.constant 0 : index
    %c0_9 = arith.constant 0 : index
    %20 = vector.load %arg2[%c0_7, %c0_8, %c0_9] : memref<3x32x48xbf16, #tpu.memory_space<vmem>>, vector<1x32x48xbf16>
    %21 = vector.shape_cast %20 : vector<1x32x48xbf16> to vector<32x48xbf16>
    %cst_10 = arith.constant dense<0.000000e+00> : vector<256x48xf32>
    %22 = tpu.matmul %19, %21, %cst_10 {dimension_numbers = #tpu.dot_dimension_numbers<[1], [0], [0], [1], [0, 0, 1, 1], [], []>} : vector<256x32xbf16>, vector<32x48xbf16>, vector<256x48xf32> -> vector<256x48xf32>
    %23 = vector.extract_strided_slice %22 {offsets = [0, 16], sizes = [256, 16], strides = [1, 1]} : vector<256x48xf32> to vector<256x16xf32>
    %24 = arith.addf %17, %23 : vector<256x16xf32>
    %25 = vector.extract_strided_slice %22 {offsets = [0, 0], sizes = [255, 16], strides = [1, 1]} : vector<256x48xf32> to vector<255x16xf32>
    %26 = tpu.concatenate %16, %25 in 0 : vector<1x16xf32>, vector<255x16xf32> -> vector<256x16xf32>
    %27 = vector.broadcast %11 : vector<256x1xf32> to vector<256x16xf32>
    %28 = arith.mulf %27, %26 : vector<256x16xf32>
    %29 = arith.addf %24, %28 : vector<256x16xf32>
    %30 = vector.extract_strided_slice %22 {offsets = [1, 32], sizes = [255, 16], strides = [1, 1]} : vector<256x48xf32> to vector<255x16xf32>
    %31 = tpu.concatenate %30, %16 in 0 : vector<255x16xf32>, vector<1x16xf32> -> vector<256x16xf32>
    %32 = vector.broadcast %15 : vector<256x1xf32> to vector<256x16xf32>
    %33 = arith.mulf %32, %31 : vector<256x16xf32>
    %34 = arith.addf %29, %33 : vector<256x16xf32>
    %c0_11 = arith.constant 0 : index
    %c16 = arith.constant 16 : index
    %c0_12 = arith.constant 0 : index
    %35 = vector.load %arg1[%c0_11, %c16, %c0_12] : memref<1x288x32xbf16, #tpu.memory_space<vmem>>, vector<1x256x32xbf16>
    %36 = vector.shape_cast %35 : vector<1x256x32xbf16> to vector<256x32xbf16>
    %c1 = arith.constant 1 : index
    %c0_13 = arith.constant 0 : index
    %c0_14 = arith.constant 0 : index
    %37 = vector.load %arg2[%c1, %c0_13, %c0_14] : memref<3x32x48xbf16, #tpu.memory_space<vmem>>, vector<1x32x48xbf16>
    %38 = vector.shape_cast %37 : vector<1x32x48xbf16> to vector<32x48xbf16>
    %cst_15 = arith.constant dense<0.000000e+00> : vector<256x48xf32>
    %39 = tpu.matmul %36, %38, %cst_15 {dimension_numbers = #tpu.dot_dimension_numbers<[1], [0], [0], [1], [0, 0, 1, 1], [], []>} : vector<256x32xbf16>, vector<32x48xbf16>, vector<256x48xf32> -> vector<256x48xf32>
    %40 = vector.extract_strided_slice %39 {offsets = [0, 16], sizes = [256, 16], strides = [1, 1]} : vector<256x48xf32> to vector<256x16xf32>
    %41 = arith.addf %34, %40 : vector<256x16xf32>
    %42 = vector.extract_strided_slice %39 {offsets = [0, 0], sizes = [255, 16], strides = [1, 1]} : vector<256x48xf32> to vector<255x16xf32>
    %43 = tpu.concatenate %16, %42 in 0 : vector<1x16xf32>, vector<255x16xf32> -> vector<256x16xf32>
    %44 = vector.broadcast %11 : vector<256x1xf32> to vector<256x16xf32>
    %45 = arith.mulf %44, %43 : vector<256x16xf32>
    %46 = arith.addf %41, %45 : vector<256x16xf32>
    %47 = vector.extract_strided_slice %39 {offsets = [1, 32], sizes = [255, 16], strides = [1, 1]} : vector<256x48xf32> to vector<255x16xf32>
    %48 = tpu.concatenate %47, %16 in 0 : vector<255x16xf32>, vector<1x16xf32> -> vector<256x16xf32>
    %49 = vector.broadcast %15 : vector<256x1xf32> to vector<256x16xf32>
    %50 = arith.mulf %49, %48 : vector<256x16xf32>
    %51 = arith.addf %46, %50 : vector<256x16xf32>
    %c0_16 = arith.constant 0 : index
    %c32 = arith.constant 32 : index
    %c0_17 = arith.constant 0 : index
    %52 = vector.load %arg1[%c0_16, %c32, %c0_17] : memref<1x288x32xbf16, #tpu.memory_space<vmem>>, vector<1x256x32xbf16>
    %53 = vector.shape_cast %52 : vector<1x256x32xbf16> to vector<256x32xbf16>
    %c2 = arith.constant 2 : index
    %c0_18 = arith.constant 0 : index
    %c0_19 = arith.constant 0 : index
    %54 = vector.load %arg2[%c2, %c0_18, %c0_19] : memref<3x32x48xbf16, #tpu.memory_space<vmem>>, vector<1x32x48xbf16>
    %55 = vector.shape_cast %54 : vector<1x32x48xbf16> to vector<32x48xbf16>
    %cst_20 = arith.constant dense<0.000000e+00> : vector<256x48xf32>
    %56 = tpu.matmul %53, %55, %cst_20 {dimension_numbers = #tpu.dot_dimension_numbers<[1], [0], [0], [1], [0, 0, 1, 1], [], []>} : vector<256x32xbf16>, vector<32x48xbf16>, vector<256x48xf32> -> vector<256x48xf32>
    %57 = vector.extract_strided_slice %56 {offsets = [0, 16], sizes = [256, 16], strides = [1, 1]} : vector<256x48xf32> to vector<256x16xf32>
    %58 = arith.addf %51, %57 : vector<256x16xf32>
    %59 = vector.extract_strided_slice %56 {offsets = [0, 0], sizes = [255, 16], strides = [1, 1]} : vector<256x48xf32> to vector<255x16xf32>
    %60 = tpu.concatenate %16, %59 in 0 : vector<1x16xf32>, vector<255x16xf32> -> vector<256x16xf32>
    %61 = vector.broadcast %11 : vector<256x1xf32> to vector<256x16xf32>
    %62 = arith.mulf %61, %60 : vector<256x16xf32>
    %63 = arith.addf %58, %62 : vector<256x16xf32>
    %64 = vector.extract_strided_slice %56 {offsets = [1, 32], sizes = [255, 16], strides = [1, 1]} : vector<256x48xf32> to vector<255x16xf32>
    %65 = tpu.concatenate %64, %16 in 0 : vector<255x16xf32>, vector<1x16xf32> -> vector<256x16xf32>
    %66 = vector.broadcast %15 : vector<256x1xf32> to vector<256x16xf32>
    %67 = arith.mulf %66, %65 : vector<256x16xf32>
    %68 = arith.addf %63, %67 : vector<256x16xf32>
    %cst_21 = arith.constant dense<0.000000e+00> : vector<16xf32>
    %69 = vector.multi_reduction <add>, %68, %cst_21 [0] : vector<256x16xf32> to vector<16xf32>
    %70 = vector.shape_cast %69 : vector<16xf32> to vector<1x16xf32>
    %71 = arith.mulf %68, %68 : vector<256x16xf32>
    %cst_22 = arith.constant dense<0.000000e+00> : vector<16xf32>
    %72 = vector.multi_reduction <add>, %71, %cst_22 [0] : vector<256x16xf32> to vector<16xf32>
    %73 = vector.shape_cast %72 : vector<16xf32> to vector<1x16xf32>
    %cst_23 = arith.constant 3.906250e-03 : f32
    %74 = vector.broadcast %cst_23 : f32 to vector<1x16xf32>
    %75 = arith.mulf %70, %74 : vector<1x16xf32>
    %cst_24 = arith.constant 3.906250e-03 : f32
    %76 = vector.broadcast %cst_24 : f32 to vector<1x16xf32>
    %77 = arith.mulf %73, %76 : vector<1x16xf32>
    %78 = arith.mulf %75, %75 : vector<1x16xf32>
    %79 = arith.subf %77, %78 : vector<1x16xf32>
    %cst_25 = arith.constant 0.000000e+00 : f32
    %80 = vector.broadcast %cst_25 : f32 to vector<1x16xf32>
    %81 = arith.maximumf %79, %80 : vector<1x16xf32>
    %82 = vector.broadcast %75 : vector<1x16xf32> to vector<256x16xf32>
    %83 = arith.subf %68, %82 : vector<256x16xf32>
    %cst_26 = arith.constant 9.99999974E-6 : f32
    %84 = vector.broadcast %cst_26 : f32 to vector<1x16xf32>
    %85 = arith.addf %81, %84 : vector<1x16xf32>
    %86 = math.rsqrt %85 : vector<1x16xf32>
    %87 = vector.broadcast %86 : vector<1x16xf32> to vector<256x16xf32>
    %88 = arith.mulf %83, %87 : vector<256x16xf32>
    %cst_27 = arith.constant 0.000000e+00 : f32
    %89 = vector.broadcast %cst_27 : f32 to vector<256x16xf32>
    %90 = arith.maximumf %88, %89 : vector<256x16xf32>
    %91 = arith.truncf %90 : vector<256x16xf32> to vector<256x16xbf16>
    %c0_28 = arith.constant 0 : index
    %c0_29 = arith.constant 0 : index
    %92 = vector.load %arg3[%c0_28, %c0_29] : memref<16x64xbf16, #tpu.memory_space<vmem>>, vector<16x64xbf16>
    %cst_30 = arith.constant dense<0.000000e+00> : vector<256x64xf32>
    %93 = tpu.matmul %91, %92, %cst_30 {dimension_numbers = #tpu.dot_dimension_numbers<[1], [0], [0], [1], [0, 0, 1, 1], [], []>} : vector<256x16xbf16>, vector<16x64xbf16>, vector<256x64xf32> -> vector<256x64xf32>
    %cst_31 = arith.constant dense<0.000000e+00> : vector<64xf32>
    %94 = vector.multi_reduction <add>, %93, %cst_31 [0] : vector<256x64xf32> to vector<64xf32>
    %95 = vector.shape_cast %94 : vector<64xf32> to vector<1x64xf32>
    %96 = arith.mulf %93, %93 : vector<256x64xf32>
    %cst_32 = arith.constant dense<0.000000e+00> : vector<64xf32>
    %97 = vector.multi_reduction <add>, %96, %cst_32 [0] : vector<256x64xf32> to vector<64xf32>
    %98 = vector.shape_cast %97 : vector<64xf32> to vector<1x64xf32>
    %99 = vector.extract_strided_slice %95 {offsets = [0, 0], sizes = [1, 16], strides = [1, 1]} : vector<1x64xf32> to vector<1x16xf32>
    %100 = vector.extract_strided_slice %95 {offsets = [0, 16], sizes = [1, 16], strides = [1, 1]} : vector<1x64xf32> to vector<1x16xf32>
    %101 = arith.addf %99, %100 : vector<1x16xf32>
    %102 = vector.extract_strided_slice %95 {offsets = [0, 32], sizes = [1, 16], strides = [1, 1]} : vector<1x64xf32> to vector<1x16xf32>
    %103 = arith.addf %101, %102 : vector<1x16xf32>
    %104 = vector.extract_strided_slice %95 {offsets = [0, 48], sizes = [1, 16], strides = [1, 1]} : vector<1x64xf32> to vector<1x16xf32>
    %105 = arith.addf %103, %104 : vector<1x16xf32>
    %106 = vector.extract_strided_slice %98 {offsets = [0, 0], sizes = [1, 16], strides = [1, 1]} : vector<1x64xf32> to vector<1x16xf32>
    %107 = vector.extract_strided_slice %98 {offsets = [0, 16], sizes = [1, 16], strides = [1, 1]} : vector<1x64xf32> to vector<1x16xf32>
    %108 = arith.addf %106, %107 : vector<1x16xf32>
    %109 = vector.extract_strided_slice %98 {offsets = [0, 32], sizes = [1, 16], strides = [1, 1]} : vector<1x64xf32> to vector<1x16xf32>
    %110 = arith.addf %108, %109 : vector<1x16xf32>
    %111 = vector.extract_strided_slice %98 {offsets = [0, 48], sizes = [1, 16], strides = [1, 1]} : vector<1x64xf32> to vector<1x16xf32>
    %112 = arith.addf %110, %111 : vector<1x16xf32>
    %cst_33 = arith.constant 9.765625E-4 : f32
    %113 = vector.broadcast %cst_33 : f32 to vector<1x16xf32>
    %114 = arith.mulf %105, %113 : vector<1x16xf32>
    %cst_34 = arith.constant 9.765625E-4 : f32
    %115 = vector.broadcast %cst_34 : f32 to vector<1x16xf32>
    %116 = arith.mulf %112, %115 : vector<1x16xf32>
    %117 = arith.mulf %114, %114 : vector<1x16xf32>
    %118 = arith.subf %116, %117 : vector<1x16xf32>
    %cst_35 = arith.constant 0.000000e+00 : f32
    %119 = vector.broadcast %cst_35 : f32 to vector<1x16xf32>
    %120 = arith.maximumf %118, %119 : vector<1x16xf32>
    %cst_36 = arith.constant 9.99999974E-6 : f32
    %121 = vector.broadcast %cst_36 : f32 to vector<1x16xf32>
    %122 = arith.addf %120, %121 : vector<1x16xf32>
    %123 = math.rsqrt %122 : vector<1x16xf32>
    %124 = tpu.concatenate %114, %114, %114, %114 in 1 : vector<1x16xf32>, vector<1x16xf32>, vector<1x16xf32>, vector<1x16xf32> -> vector<1x64xf32>
    %125 = tpu.concatenate %123, %123, %123, %123 in 1 : vector<1x16xf32>, vector<1x16xf32>, vector<1x16xf32>, vector<1x16xf32> -> vector<1x64xf32>
    %126 = vector.broadcast %124 : vector<1x64xf32> to vector<256x64xf32>
    %127 = arith.subf %93, %126 : vector<256x64xf32>
    %128 = vector.broadcast %125 : vector<1x64xf32> to vector<256x64xf32>
    %129 = arith.mulf %127, %128 : vector<256x64xf32>
    %cst_37 = arith.constant 0.000000e+00 : f32
    %130 = vector.broadcast %cst_37 : f32 to vector<256x64xf32>
    %131 = arith.maximumf %129, %130 : vector<256x64xf32>
    %132 = arith.truncf %131 : vector<256x64xf32> to vector<256x64xbf16>
    %c0_38 = arith.constant 0 : index
    %c0_39 = arith.constant 0 : index
    %133 = vector.load %arg4[%c0_38, %c0_39] : memref<64x64xbf16, #tpu.memory_space<vmem>>, vector<64x64xbf16>
    %cst_40 = arith.constant dense<0.000000e+00> : vector<256x64xf32>
    %134 = tpu.matmul %132, %133, %cst_40 {dimension_numbers = #tpu.dot_dimension_numbers<[1], [0], [0], [1], [0, 0, 1, 1], [], []>} : vector<256x64xbf16>, vector<64x64xbf16>, vector<256x64xf32> -> vector<256x64xf32>
    %c0_41 = arith.constant 0 : index
    %c0_42 = arith.constant 0 : index
    %135 = vector.load %arg5[%c0_41, %c0_42] : memref<1x64xf32, #tpu.memory_space<vmem>>, vector<1x64xf32>
    %136 = vector.broadcast %135 : vector<1x64xf32> to vector<256x64xf32>
    %137 = arith.addf %134, %136 : vector<256x64xf32>
    %c0_43 = arith.constant 0 : index
    %c0_44 = arith.constant 0 : index
    %c0_45 = arith.constant 0 : index
    %138 = vector.load %arg6[%c0_43, %c0_44, %c0_45] : memref<1x256x64xf32, #tpu.memory_space<vmem>>, vector<1x256x64xf32>
    %139 = vector.shape_cast %138 : vector<1x256x64xf32> to vector<256x64xf32>
    %140 = vector.shape_cast %137 : vector<256x64xf32> to vector<1x256x64xf32>
    tpu.vector_store %arg6[%c0_43, %c0_44, %c0_45], %140 {strides = array<i32>} : memref<1x256x64xf32, #tpu.memory_space<vmem>>, vector<1x256x64xf32>,
    return
  }
  func.func @transform_0(%arg0: i32) -> (i32, i32, i32) {
    %c0_i32 = arith.constant 0 : i32
    %c0_i32_0 = arith.constant 0 : i32
    %c0_i32_1 = arith.constant 0 : i32
    return %arg0, %c0_i32, %c0_i32_0 : i32, i32, i32
  }
  func.func @transform_1(%arg0: i32) -> (i32, i32, i32) {
    %c0_i32 = arith.constant 0 : i32
    %c0_i32_0 = arith.constant 0 : i32
    %c0_i32_1 = arith.constant 0 : i32
    %c0_i32_2 = arith.constant 0 : i32
    return %c0_i32, %c0_i32_0, %c0_i32_1 : i32, i32, i32
  }
  func.func @transform_2(%arg0: i32) -> (i32, i32) {
    %c0_i32 = arith.constant 0 : i32
    %c0_i32_0 = arith.constant 0 : i32
    %c0_i32_1 = arith.constant 0 : i32
    return %c0_i32, %c0_i32_0 : i32, i32
  }
  func.func @transform_3(%arg0: i32) -> (i32, i32) {
    %c0_i32 = arith.constant 0 : i32
    %c0_i32_0 = arith.constant 0 : i32
    %c0_i32_1 = arith.constant 0 : i32
    return %c0_i32, %c0_i32_0 : i32, i32
  }
  func.func @transform_4(%arg0: i32) -> (i32, i32) {
    %c0_i32 = arith.constant 0 : i32
    %c0_i32_0 = arith.constant 0 : i32
    %c0_i32_1 = arith.constant 0 : i32
    return %c0_i32, %c0_i32_0 : i32, i32
  }
  func.func @transform_5(%arg0: i32) -> (i32, i32, i32) {
    %c0_i32 = arith.constant 0 : i32
    %c0_i32_0 = arith.constant 0 : i32
    %c0_i32_1 = arith.constant 0 : i32
    return %arg0, %c0_i32, %c0_i32_0 : i32, i32, i32
  }
}

</mosaic_0001>

<llo_original>
// kernel: tpu_custom_call.1
$region0: #{tpu_custom_call.1}
  #allocation0 [shape = 'u32[]', space=smem, size = 0x4, offset = 0x4, fixed_abs, tag = 'smem constant byte address 0x4 - core index']
  #allocation1 [shape = 'u32[144,128]{1,0:T(1,128)}', space=vmem, size = 0x12000, scoped, tag = 'internal scratch']
  %s0 = inlined_call_operand.vmem [shape: bf16[2,288,32], index: 0, kind: input, shape index: {}]
  %s1 = inlined_call_operand.vmem [shape: bf16[3,32,48], index: 1, kind: input, shape index: {}]
  %s2 = inlined_call_operand.vmem [shape: bf16[16,64], index: 2, kind: input, shape index: {}]
  %s3 = inlined_call_operand.vmem [shape: bf16[64,64], index: 3, kind: input, shape index: {}]
  %s4 = inlined_call_operand.vmem [shape: f32[1,64], index: 4, kind: input, shape index: {}]
  %s5 = inlined_call_operand.vmem [shape: f32[2,256,64], index: 5, kind: output, shape index: {}]
  %s6 = sld [smem:[#allocation0]]
  $region53: #{tpu_custom_call.1} parent=0
    _
  %s8 = ssub.s32 1, %s6
  %s9 = scalar_select 0, %s8, %s6
  loop: start=0, step=1, limit=4
  $region2: #{tpu_custom_call.1} parent=0 // loop_pre_header
    _
  $region3: #{tpu_custom_call.1} parent=0 // loop_header
    %s11 = sphi 0, %s15
    %p12 = scmp.ge.s32.totalorder %s11, 4
    %s21 = sphi 0, %s23
    %s24 = sphi 0, %s21
    %s25 = sphi 0, %s24
    %s41 = sphi 0, %s25
    %s45 = sphi 0, %s45
    %s47 = sphi 0, %s45
    %s48 = sphi 0, %s47
    %s62 = sphi 0, %s48
    %s66 = sphi 0, %s66
    %s68 = sphi 0, %s66
    %s69 = sphi 0, %s68
    %s83 = sphi 0, %s69
    %s87 = sphi 0, %s87
    %s89 = sphi 0, %s87
    %s90 = sphi 0, %s89
    %s104 = sphi 0, %s90
    %s108 = sphi 0, %s108
    %s110 = sphi 0, %s108
    %s111 = sphi 0, %s110
    %s125 = sphi 0, %s111
    %s131 = sphi 0, %s133
    %s134 = sphi 0, %s131
    %s135 = sphi 0, %s134
    %s151 = sphi 0, %s135
  $region4: #{tpu_custom_call.1} parent=0 // loop_header_branch
    %14 = sbr.rel (%p12) target = $region8
  $region5: #{tpu_custom_call.1} parent=0 // loop_body
    %s16 = ssub.s32 %s11, 1
    %s17 = ssub.s32 %s11, 2
    %s18 = sadd.s32 %s11, 1
    %s19 = ssub.s32 %s11, %s18
    %p20 = scmp.eq.s32.totalorder %s19, 0
    %s22 = sadd.s32 %s21, 1
    %s23 = scalar_select %p20, %s21, %s22
    %p26 = pneg %p20
    %p27 = scmp.eq.s32.totalorder %s11, 1
    %p28 = por %p26, %p27
    %p29 = scmp.ne.s32.totalorder %s21, %s24
    %p30 = scmp.eq.s32.totalorder %s11, 0
    %p31 = por %p29, %p30
    %p32 = scmp.ne.s32.totalorder %s21, %s24
    %p33 = scmp.eq.s32.totalorder %s16, 1
    %p34 = por %p32, %p33
    %p35 = scmp.ne.s32.totalorder %s24, %s25
    %p36 = scmp.eq.s32.totalorder %s16, 0
    %p37 = por %p35, %p36
    %p38 = scmp.ne.s32.totalorder %s24, %s25
    %p39 = scmp.eq.s32.totalorder %s17, 1
    %p40 = por %p38, %p39
    %p42 = scmp.ne.s32.totalorder %s25, %s41
    %p43 = scmp.eq.s32.totalorder %s17, 0
    %p44 = por %p42, %p43
    %s46 = sadd.s32 %s45, 1
    %p49 = scmp.eq.s32.totalorder %s11, 1
    %p50 = scmp.ne.s32.totalorder %s45, %s47
    %p51 = scmp.eq.s32.totalorder %s11, 0
    %p52 = por %p50, %p51
    %p53 = scmp.ne.s32.totalorder %s45, %s47
    %p54 = scmp.eq.s32.totalorder %s16, 1
    %p55 = por %p53, %p54
    %p56 = scmp.ne.s32.totalorder %s47, %s48
    %p57 = scmp.eq.s32.totalorder %s16, 0
    %p58 = por %p56, %p57
    %p59 = scmp.ne.s32.totalorder %s47, %s48
    %p60 = scmp.eq.s32.totalorder %s17, 1
    %p61 = por %p59, %p60
    %p63 = scmp.ne.s32.totalorder %s48, %s62
    %p64 = scmp.eq.s32.totalorder %s17, 0
    %p65 = por %p63, %p64
    %s67 = sadd.s32 %s66, 1
    %p70 = scmp.eq.s32.totalorder %s11, 1
    %p71 = scmp.ne.s32.totalorder %s66, %s68
    %p72 = scmp.eq.s32.totalorder %s11, 0
    %p73 = por %p71, %p72
    %p74 = scmp.ne.s32.totalorder %s66, %s68
    %p75 = scmp.eq.s32.totalorder %s16, 1
    %p76 = por %p74, %p75
    %p77 = scmp.ne.s32.totalorder %s68, %s69
    %p78 = scmp.eq.s32.totalorder %s16, 0
    %p79 = por %p77, %p78
    %p80 = scmp.ne.s32.totalorder %s68, %s69
    %p81 = scmp.eq.s32.totalorder %s17, 1
    %p82 = por %p80, %p81
    %p84 = scmp.ne.s32.totalorder %s69, %s83
    %p85 = scmp.eq.s32.totalorder %s17, 0
    %p86 = por %p84, %p85
    %s88 = sadd.s32 %s87, 1
    %p91 = scmp.eq.s32.totalorder %s11, 1
    %p92 = scmp.ne.s32.totalorder %s87, %s89
    %p93 = scmp.eq.s32.totalorder %s11, 0
    %p94 = por %p92, %p93
    %p95 = scmp.ne.s32.totalorder %s87, %s89
    %p96 = scmp.eq.s32.totalorder %s16, 1
    %p97 = por %p95, %p96
    %p98 = scmp.ne.s32.totalorder %s89, %s90
    %p99 = scmp.eq.s32.totalorder %s16, 0
    %p100 = por %p98, %p99
    %p101 = scmp.ne.s32.totalorder %s89, %s90
    %p102 = scmp.eq.s32.totalorder %s17, 1
    %p103 = por %p101, %p102
    %p105 = scmp.ne.s32.totalorder %s90, %s104
    %p106 = scmp.eq.s32.totalorder %s17, 0
    %p107 = por %p105, %p106
    %s109 = sadd.s32 %s108, 1
    %p112 = scmp.eq.s32.totalorder %s11, 1
    %p113 = scmp.ne.s32.totalorder %s108, %s110
    %p114 = scmp.eq.s32.totalorder %s11, 0
    %p115 = por %p113, %p114
    %p116 = scmp.ne.s32.totalorder %s108, %s110
    %p117 = scmp.eq.s32.totalorder %s16, 1
    %p118 = por %p116, %p117
    %p119 = scmp.ne.s32.totalorder %s110, %s111
    %p120 = scmp.eq.s32.totalorder %s16, 0
    %p121 = por %p119, %p120
    %p122 = scmp.ne.s32.totalorder %s110, %s111
    %p123 = scmp.eq.s32.totalorder %s17, 1
    %p124 = por %p122, %p123
    %p126 = scmp.ne.s32.totalorder %s111, %s125
    %p127 = scmp.eq.s32.totalorder %s17, 0
    %p128 = por %p126, %p127
    %s129 = ssub.s32 %s11, %s18
    %p130 = scmp.eq.s32.totalorder %s129, 0
    %s132 = sadd.s32 %s131, 1
    %s133 = scalar_select %p130, %s131, %s132
    %p136 = pneg %p130
    %p137 = scmp.eq.s32.totalorder %s11, 1
    %p138 = por %p136, %p137
    %p139 = scmp.ne.s32.totalorder %s131, %s134
    %p140 = scmp.eq.s32.totalorder %s11, 0
    %p141 = por %p139, %p140
    %p142 = scmp.ne.s32.totalorder %s131, %s134
    %p143 = scmp.eq.s32.totalorder %s16, 1
    %p144 = por %p142, %p143
    %p145 = scmp.ne.s32.totalorder %s134, %s135
    %p146 = scmp.eq.s32.totalorder %s16, 0
    %p147 = por %p145, %p146
    %p148 = scmp.ne.s32.totalorder %s134, %s135
    %p149 = scmp.eq.s32.totalorder %s17, 1
    %p150 = por %p148, %p149
    %p152 = scmp.ne.s32.totalorder %s135, %s151
    %p153 = scmp.eq.s32.totalorder %s17, 0
    %p154 = por %p152, %p153
    %p155 = scmp.le.s32.totalorder 1, %s11
    %p156 = scmp.lt.s32.totalorder %s11, 3
    %p157 = pnand %p155, %p156
    %p158 = pneg %p157
    // Predicated region
    $region9: #{tpu_custom_call.1} parent=5 // pred_check
      _
    $region10: #{tpu_custom_call.1} parent=5 // pred_check_branch
      %160 = sbr.rel (%p157) target = $region12
    $region11: #{tpu_custom_call.1} parent=5 // pred_region
      %s161 = ssub.s32 %s11, 1
      // Predicated region
      $region13: #{tpu_custom_call.1} parent=11 // pred_check
        %p162 = pneg %p58
      $region14: #{tpu_custom_call.1} parent=11 // pred_check_branch
        %164 = sbr.rel (%p162) target = $region16
      $region15: #{tpu_custom_call.1} parent=11 // pred_region
        _
      $region16: #{tpu_custom_call.1} parent=11 // pred_fallthru
        _
      // Predicated region
      $region17: #{tpu_custom_call.1} parent=11 // pred_check
        %p165 = pneg %p79
      $region18: #{tpu_custom_call.1} parent=11 // pred_check_branch
        %167 = sbr.rel (%p165) target = $region20
      $region19: #{tpu_custom_call.1} parent=11 // pred_region
        _
      $region20: #{tpu_custom_call.1} parent=11 // pred_fallthru
        _
      // Predicated region
      $region21: #{tpu_custom_call.1} parent=11 // pred_check
        %p168 = pneg %p100
      $region22: #{tpu_custom_call.1} parent=11 // pred_check_branch
        %170 = sbr.rel (%p168) target = $region24
      $region23: #{tpu_custom_call.1} parent=11 // pred_region
        _
      $region24: #{tpu_custom_call.1} parent=11 // pred_fallthru
        _
      // Predicated region
      $region25: #{tpu_custom_call.1} parent=11 // pred_check
        %p171 = pneg %p121
      $region26: #{tpu_custom_call.1} parent=11 // pred_check_branch
        %173 = sbr.rel (%p171) target = $region28
      $region27: #{tpu_custom_call.1} parent=11 // pred_region
        _
      $region28: #{tpu_custom_call.1} parent=11 // pred_fallthru
        _
    $region12: #{tpu_custom_call.1} parent=5 // pred_fallthru
      _
    %p174 = scmp.lt.s32.totalorder %s11, 2
    // Predicated region
    $region29: #{tpu_custom_call.1} parent=5 // pred_check
      %p175 = pneg %p174
    $region30: #{tpu_custom_call.1} parent=5 // pred_check_branch
      %177 = sbr.rel (%p175) target = $region32
    $region31: #{tpu_custom_call.1} parent=5 // pred_region
      // Predicated region
      $region33: #{tpu_custom_call.1} parent=31 // pred_check
        %p178 = pneg %p31
      $region34: #{tpu_custom_call.1} parent=31 // pred_check_branch
        %180 = sbr.rel (%p178) target = $region36
      $region35: #{tpu_custom_call.1} parent=31 // pred_region
        %p181 = scmp.lt.s32.totalorder %s11, 1
        %s182 = scalar_select %p181, %s11, 1
        %s183 = smul.addr %s182, 36
        %s184 = smul.addr %s183, 4
        %s185 = scalar_lea.vmem %s0, %s184
      $region36: #{tpu_custom_call.1} parent=31 // pred_fallthru
        _
    $region32: #{tpu_custom_call.1} parent=5 // pred_fallthru
      _
    %p186 = scmp.le.s32.totalorder 1, %s11
    %p187 = scmp.lt.s32.totalorder %s11, 3
    %p188 = pnand %p186, %p187
    %p189 = pneg %p188
    // Predicated region
    $region37: #{tpu_custom_call.1} parent=5 // pred_check
      _
    $region38: #{tpu_custom_call.1} parent=5 // pred_check_branch
      %191 = sbr.rel (%p188) target = $region40
    $region39: #{tpu_custom_call.1} parent=5 // pred_region
      %s192 = ssub.s32 %s11, 1
      %p193 = scmp.lt.s32.totalorder %s16, 1
      %s194 = scalar_select %p193, %s16, 1
      %s195 = smul.addr %s194, 36
      %s196 = smul.addr %s195, 4
      %s197 = scalar_lea.vmem %s0, %s196
      %p198 = pneg %p37
      %p199 = pneg %p34
      %p200 = pneg %p58
      %p201 = pneg %p55
      %p202 = pneg %p79
      %p203 = pneg %p76
      %p204 = pneg %p100
      %p205 = pneg %p97
      %p206 = pneg %p121
      %p207 = pneg %p118
      %p208 = pneg %p147
      %p209 = pneg %p144
      %p210 = scmp.lt.s32.totalorder %s16, 1
      %s211 = scalar_select %p210, %s16, 1
      %s212 = smul.addr %s211, 32
      %s213 = smul.addr %s212, 8
      %s214 = scalar_lea.vmem %s5, %s213
      %p215 = scmp.lt.s32.totalorder %s16, 1
      %s216 = scalar_select %p215, %s16, 1
      %s217 = smul.addr %s216, 36
      %s218 = smul.addr %s217, 4
      %s219 = scalar_lea.vmem %s0, %s218
      %p220 = scmp.lt.s32.totalorder %s16, 1
      %s221 = scalar_select %p220, %s16, 1
      %s222 = smul.addr %s221, 32
      %s223 = smul.addr %s222, 8
      %s224 = scalar_lea.vmem %s5, %s223
      %v226 = vlaneseq
      %v227 = vshrl.u32 %v226, 7
      %v228 = vadd.s32 %v227, 8
      %v229 = vadd.s32 %v227, 16
      %v230 = vadd.s32 %v227, 24
      %v231 = vadd.s32 %v227, 32
      %v232 = vadd.s32 %v227, 40
      %v233 = vadd.s32 %v227, 48
      %v234 = vadd.s32 %v227, 56
      %v235 = vadd.s32 %v227, 64
      %v236 = vadd.s32 %v227, 72
      %v237 = vadd.s32 %v227, 80
      %v238 = vadd.s32 %v227, 88
      %v239 = vadd.s32 %v227, 96
      %v240 = vadd.s32 %v227, 104
      %v241 = vadd.s32 %v227, 112
      %v242 = vadd.s32 %v227, 120
      %v243 = vadd.s32 %v227, 128
      %v244 = vadd.s32 %v227, 136
      %v245 = vadd.s32 %v227, 144
      %v246 = vadd.s32 %v227, 152
      %v247 = vadd.s32 %v227, 160
      %v248 = vadd.s32 %v227, 168
      %v249 = vadd.s32 %v227, 176
      %v250 = vadd.s32 %v227, 184
      %v251 = vadd.s32 %v227, 192
      %v252 = vadd.s32 %v227, 200
      %v253 = vadd.s32 %v227, 208
      %v254 = vadd.s32 %v227, 216
      %v255 = vadd.s32 %v227, 224
      %v256 = vadd.s32 %v227, 232
      %v257 = vadd.s32 %v227, 240
      %v258 = vadd.s32 %v227, 248
      %v259 = vcvt.s32.f32 %v227
      %v260 = vcvt.s32.f32 %v228
      %v261 = vcvt.s32.f32 %v229
      %v262 = vcvt.s32.f32 %v230
      %v263 = vcvt.s32.f32 %v231
      %v264 = vcvt.s32.f32 %v232
      %v265 = vcvt.s32.f32 %v233
      %v266 = vcvt.s32.f32 %v234
      %v267 = vcvt.s32.f32 %v235
      %v268 = vcvt.s32.f32 %v236
      %v269 = vcvt.s32.f32 %v237
      %v270 = vcvt.s32.f32 %v238
      %v271 = vcvt.s32.f32 %v239
      %v272 = vcvt.s32.f32 %v240
      %v273 = vcvt.s32.f32 %v241
      %v274 = vcvt.s32.f32 %v242
      %v275 = vcvt.s32.f32 %v243
      %v276 = vcvt.s32.f32 %v244
      %v277 = vcvt.s32.f32 %v245
      %v278 = vcvt.s32.f32 %v246
      %v279 = vcvt.s32.f32 %v247
      %v280 = vcvt.s32.f32 %v248
      %v281 = vcvt.s32.f32 %v249
      %v282 = vcvt.s32.f32 %v250
      %v283 = vcvt.s32.f32 %v251
      %v284 = vcvt.s32.f32 %v252
      %v285 = vcvt.s32.f32 %v253
      %v286 = vcvt.s32.f32 %v254
      %v287 = vcvt.s32.f32 %v255
      %v288 = vcvt.s32.f32 %v256
      %v289 = vcvt.s32.f32 %v257
      %v290 = vcvt.s32.f32 %v258
      %v291 = vrcp.pop 16.0
      %v292 = vmul.f32 %v259, %v291
      %v293 = vmul.f32 %v260, %v291
      %v294 = vmul.f32 %v261, %v291
      %v295 = vmul.f32 %v262, %v291
      %v296 = vmul.f32 %v263, %v291
      %v297 = vmul.f32 %v264, %v291
      %v298 = vmul.f32 %v265, %v291
      %v299 = vmul.f32 %v266, %v291
      %v300 = vmul.f32 %v267, %v291
      %v301 = vmul.f32 %v268, %v291
      %v302 = vmul.f32 %v269, %v291
      %v303 = vmul.f32 %v270, %v291
      %v304 = vmul.f32 %v271, %v291
      %v305 = vmul.f32 %v272, %v291
      %v306 = vmul.f32 %v273, %v291
      %v307 = vmul.f32 %v274, %v291
      %v308 = vmul.f32 %v275, %v291
      %v309 = vmul.f32 %v276, %v291
      %v310 = vmul.f32 %v277, %v291
      %v311 = vmul.f32 %v278, %v291
      %v312 = vmul.f32 %v279, %v291
      %v313 = vmul.f32 %v280, %v291
      %v314 = vmul.f32 %v281, %v291
      %v315 = vmul.f32 %v282, %v291
      %v316 = vmul.f32 %v283, %v291
      %v317 = vmul.f32 %v284, %v291
      %v318 = vmul.f32 %v285, %v291
      %v319 = vmul.f32 %v286, %v291
      %v320 = vmul.f32 %v287, %v291
      %v321 = vmul.f32 %v288, %v291
      %v322 = vmul.f32 %v289, %v291
      %v323 = vmul.f32 %v290, %v291
      %v324 = vfloor.f32 %v292
      %v325 = vfloor.f32 %v293
      %v326 = vfloor.f32 %v294
      %v327 = vfloor.f32 %v295
      %v328 = vfloor.f32 %v296
      %v329 = vfloor.f32 %v297
      %v330 = vfloor.f32 %v298
      %v331 = vfloor.f32 %v299
      %v332 = vfloor.f32 %v300
      %v333 = vfloor.f32 %v301
      %v334 = vfloor.f32 %v302
      %v335 = vfloor.f32 %v303
      %v336 = vfloor.f32 %v304
      %v337 = vfloor.f32 %v305
      %v338 = vfloor.f32 %v306
      %v339 = vfloor.f32 %v307
      %v340 = vfloor.f32 %v308
      %v341 = vfloor.f32 %v309
      %v342 = vfloor.f32 %v310
      %v343 = vfloor.f32 %v311
      %v344 = vfloor.f32 %v312
      %v345 = vfloor.f32 %v313
      %v346 = vfloor.f32 %v314
      %v347 = vfloor.f32 %v315
      %v348 = vfloor.f32 %v316
      %v349 = vfloor.f32 %v317
      %v350 = vfloor.f32 %v318
      %v351 = vfloor.f32 %v319
      %v352 = vfloor.f32 %v320
      %v353 = vfloor.f32 %v321
      %v354 = vfloor.f32 %v322
      %v355 = vfloor.f32 %v323
      %v356 = vmul.f32 %v324, 16.0
      %v357 = vmul.f32 %v325, 16.0
      %v358 = vmul.f32 %v326, 16.0
      %v359 = vmul.f32 %v327, 16.0
      %v360 = vmul.f32 %v328, 16.0
      %v361 = vmul.f32 %v329, 16.0
      %v362 = vmul.f32 %v330, 16.0
      %v363 = vmul.f32 %v331, 16.0
      %v364 = vmul.f32 %v332, 16.0
      %v365 = vmul.f32 %v333, 16.0
      %v366 = vmul.f32 %v334, 16.0
      %v367 = vmul.f32 %v335, 16.0
      %v368 = vmul.f32 %v336, 16.0
      %v369 = vmul.f32 %v337, 16.0
      %v370 = vmul.f32 %v338, 16.0
      %v371 = vmul.f32 %v339, 16.0
      %v372 = vmul.f32 %v340, 16.0
      %v373 = vmul.f32 %v341, 16.0
      %v374 = vmul.f32 %v342, 16.0
      %v375 = vmul.f32 %v343, 16.0
      %v376 = vmul.f32 %v344, 16.0
      %v377 = vmul.f32 %v345, 16.0
      %v378 = vmul.f32 %v346, 16.0
      %v379 = vmul.f32 %v347, 16.0
      %v380 = vmul.f32 %v348, 16.0
      %v381 = vmul.f32 %v349, 16.0
      %v382 = vmul.f32 %v350, 16.0
      %v383 = vmul.f32 %v351, 16.0
      %v384 = vmul.f32 %v352, 16.0
      %v385 = vmul.f32 %v353, 16.0
      %v386 = vmul.f32 %v354, 16.0
      %v387 = vmul.f32 %v355, 16.0
      %v388 = vsub.f32 %v259, %v356
      %v389 = vsub.f32 %v260, %v357
      %v390 = vsub.f32 %v261, %v358
      %v391 = vsub.f32 %v262, %v359
      %v392 = vsub.f32 %v263, %v360
      %v393 = vsub.f32 %v264, %v361
      %v394 = vsub.f32 %v265, %v362
      %v395 = vsub.f32 %v266, %v363
      %v396 = vsub.f32 %v267, %v364
      %v397 = vsub.f32 %v268, %v365
      %v398 = vsub.f32 %v269, %v366
      %v399 = vsub.f32 %v270, %v367
      %v400 = vsub.f32 %v271, %v368
      %v401 = vsub.f32 %v272, %v369
      %v402 = vsub.f32 %v273, %v370
      %v403 = vsub.f32 %v274, %v371
      %v404 = vsub.f32 %v275, %v372
      %v405 = vsub.f32 %v276, %v373
      %v406 = vsub.f32 %v277, %v374
      %v407 = vsub.f32 %v278, %v375
      %v408 = vsub.f32 %v279, %v376
      %v409 = vsub.f32 %v280, %v377
      %v410 = vsub.f32 %v281, %v378
      %v411 = vsub.f32 %v282, %v379
      %v412 = vsub.f32 %v283, %v380
      %v413 = vsub.f32 %v284, %v381
      %v414 = vsub.f32 %v285, %v382
      %v415 = vsub.f32 %v286, %v383
      %v416 = vsub.f32 %v287, %v384
      %v417 = vsub.f32 %v288, %v385
      %v418 = vsub.f32 %v289, %v386
      %v419 = vsub.f32 %v290, %v387
      %vm420 = vcmp.gt.f32.partialorder %v388, 0.5
      %vm421 = vcmp.gt.f32.partialorder %v389, 0.5
      %vm422 = vcmp.gt.f32.partialorder %v390, 0.5
      %vm423 = vcmp.gt.f32.partialorder %v391, 0.5
      %vm424 = vcmp.gt.f32.partialorder %v392, 0.5
      %vm425 = vcmp.gt.f32.partialorder %v393, 0.5
      %vm426 = vcmp.gt.f32.partialorder %v394, 0.5
      %vm427 = vcmp.gt.f32.partialorder %v395, 0.5
      %vm428 = vcmp.gt.f32.partialorder %v396, 0.5
      %vm429 = vcmp.gt.f32.partialorder %v397, 0.5
      %vm430 = vcmp.gt.f32.partialorder %v398, 0.5
      %vm431 = vcmp.gt.f32.partialorder %v399, 0.5
      %vm432 = vcmp.gt.f32.partialorder %v400, 0.5
      %vm433 = vcmp.gt.f32.partialorder %v401, 0.5
      %vm434 = vcmp.gt.f32.partialorder %v402, 0.5
      %vm435 = vcmp.gt.f32.partialorder %v403, 0.5
      %vm436 = vcmp.gt.f32.partialorder %v404, 0.5
      %vm437 = vcmp.gt.f32.partialorder %v405, 0.5
      %vm438 = vcmp.gt.f32.partialorder %v406, 0.5
      %vm439 = vcmp.gt.f32.partialorder %v407, 0.5
      %vm440 = vcmp.gt.f32.partialorder %v408, 0.5
      %vm441 = vcmp.gt.f32.partialorder %v409, 0.5
      %vm442 = vcmp.gt.f32.partialorder %v410, 0.5
      %vm443 = vcmp.gt.f32.partialorder %v411, 0.5
      %vm444 = vcmp.gt.f32.partialorder %v412, 0.5
      %vm445 = vcmp.gt.f32.partialorder %v413, 0.5
      %vm446 = vcmp.gt.f32.partialorder %v414, 0.5
      %vm447 = vcmp.gt.f32.partialorder %v415, 0.5
      %vm448 = vcmp.gt.f32.partialorder %v416, 0.5
      %vm449 = vcmp.gt.f32.partialorder %v417, 0.5
      %vm450 = vcmp.gt.f32.partialorder %v418, 0.5
      %vm451 = vcmp.gt.f32.partialorder %v419, 0.5
      %v452 = vsel %vm420, 1, 0
      %v453 = vsel %vm421, 1, 0
      %v454 = vsel %vm422, 1, 0
      %v455 = vsel %vm423, 1, 0
      %v456 = vsel %vm424, 1, 0
      %v457 = vsel %vm425, 1, 0
      %v458 = vsel %vm426, 1, 0
      %v459 = vsel %vm427, 1, 0
      %v460 = vsel %vm428, 1, 0
      %v461 = vsel %vm429, 1, 0
      %v462 = vsel %vm430, 1, 0
      %v463 = vsel %vm431, 1, 0
      %v464 = vsel %vm432, 1, 0
      %v465 = vsel %vm433, 1, 0
      %v466 = vsel %vm434, 1, 0
      %v467 = vsel %vm435, 1, 0
      %v468 = vsel %vm436, 1, 0
      %v469 = vsel %vm437, 1, 0
      %v470 = vsel %vm438, 1, 0
      %v471 = vsel %vm439, 1, 0
      %v472 = vsel %vm440, 1, 0
      %v473 = vsel %vm441, 1, 0
      %v474 = vsel %vm442, 1, 0
      %v475 = vsel %vm443, 1, 0
      %v476 = vsel %vm444, 1, 0
      %v477 = vsel %vm445, 1, 0
      %v478 = vsel %vm446, 1, 0
      %v479 = vsel %vm447, 1, 0
      %v480 = vsel %vm448, 1, 0
      %v481 = vsel %vm449, 1, 0
      %v482 = vsel %vm450, 1, 0
      %v483 = vsel %vm451, 1, 0
      %v484 = vcvt.s32.f32 %v452
      %v485 = vcvt.s32.f32 %v453
      %v486 = vcvt.s32.f32 %v454
      %v487 = vcvt.s32.f32 %v455
      %v488 = vcvt.s32.f32 %v456
      %v489 = vcvt.s32.f32 %v457
      %v490 = vcvt.s32.f32 %v458
      %v491 = vcvt.s32.f32 %v459
      %v492 = vcvt.s32.f32 %v460
      %v493 = vcvt.s32.f32 %v461
      %v494 = vcvt.s32.f32 %v462
      %v495 = vcvt.s32.f32 %v463
      %v496 = vcvt.s32.f32 %v464
      %v497 = vcvt.s32.f32 %v465
      %v498 = vcvt.s32.f32 %v466
      %v499 = vcvt.s32.f32 %v467
      %v500 = vcvt.s32.f32 %v468
      %v501 = vcvt.s32.f32 %v469
      %v502 = vcvt.s32.f32 %v470
      %v503 = vcvt.s32.f32 %v471
      %v504 = vcvt.s32.f32 %v472
      %v505 = vcvt.s32.f32 %v473
      %v506 = vcvt.s32.f32 %v474
      %v507 = vcvt.s32.f32 %v475
      %v508 = vcvt.s32.f32 %v476
      %v509 = vcvt.s32.f32 %v477
      %v510 = vcvt.s32.f32 %v478
      %v511 = vcvt.s32.f32 %v479
      %v512 = vcvt.s32.f32 %v480
      %v513 = vcvt.s32.f32 %v481
      %v514 = vcvt.s32.f32 %v482
      %v515 = vcvt.s32.f32 %v483
      %vm516 = vcmp.lt.f32.partialorder %v388, 14.5
      %vm517 = vcmp.lt.f32.partialorder %v389, 14.5
      %vm518 = vcmp.lt.f32.partialorder %v390, 14.5
      %vm519 = vcmp.lt.f32.partialorder %v391, 14.5
      %vm520 = vcmp.lt.f32.partialorder %v392, 14.5
      %vm521 = vcmp.lt.f32.partialorder %v393, 14.5
      %vm522 = vcmp.lt.f32.partialorder %v394, 14.5
      %vm523 = vcmp.lt.f32.partialorder %v395, 14.5
      %vm524 = vcmp.lt.f32.partialorder %v396, 14.5
      %vm525 = vcmp.lt.f32.partialorder %v397, 14.5
      %vm526 = vcmp.lt.f32.partialorder %v398, 14.5
      %vm527 = vcmp.lt.f32.partialorder %v399, 14.5
      %vm528 = vcmp.lt.f32.partialorder %v400, 14.5
      %vm529 = vcmp.lt.f32.partialorder %v401, 14.5
      %vm530 = vcmp.lt.f32.partialorder %v402, 14.5
      %vm531 = vcmp.lt.f32.partialorder %v403, 14.5
      %vm532 = vcmp.lt.f32.partialorder %v404, 14.5
      %vm533 = vcmp.lt.f32.partialorder %v405, 14.5
      %vm534 = vcmp.lt.f32.partialorder %v406, 14.5
      %vm535 = vcmp.lt.f32.partialorder %v407, 14.5
      %vm536 = vcmp.lt.f32.partialorder %v408, 14.5
      %vm537 = vcmp.lt.f32.partialorder %v409, 14.5
      %vm538 = vcmp.lt.f32.partialorder %v410, 14.5
      %vm539 = vcmp.lt.f32.partialorder %v411, 14.5
      %vm540 = vcmp.lt.f32.partialorder %v412, 14.5
      %vm541 = vcmp.lt.f32.partialorder %v413, 14.5
      %vm542 = vcmp.lt.f32.partialorder %v414, 14.5
      %vm543 = vcmp.lt.f32.partialorder %v415, 14.5
      %vm544 = vcmp.lt.f32.partialorder %v416, 14.5
      %vm545 = vcmp.lt.f32.partialorder %v417, 14.5
      %vm546 = vcmp.lt.f32.partialorder %v418, 14.5
      %vm547 = vcmp.lt.f32.partialorder %v419, 14.5
      %v548 = vsel %vm516, 1, 0
      %v549 = vsel %vm517, 1, 0
      %v550 = vsel %vm518, 1, 0
      %v551 = vsel %vm519, 1, 0
      %v552 = vsel %vm520, 1, 0
      %v553 = vsel %vm521, 1, 0
      %v554 = vsel %vm522, 1, 0
      %v555 = vsel %vm523, 1, 0
      %v556 = vsel %vm524, 1, 0
      %v557 = vsel %vm525, 1, 0
      %v558 = vsel %vm526, 1, 0
      %v559 = vsel %vm527, 1, 0
      %v560 = vsel %vm528, 1, 0
      %v561 = vsel %vm529, 1, 0
      %v562 = vsel %vm530, 1, 0
      %v563 = vsel %vm531, 1, 0
      %v564 = vsel %vm532, 1, 0
      %v565 = vsel %vm533, 1, 0
      %v566 = vsel %vm534, 1, 0
      %v567 = vsel %vm535, 1, 0
      %v568 = vsel %vm536, 1, 0
      %v569 = vsel %vm537, 1, 0
      %v570 = vsel %vm538, 1, 0
      %v571 = vsel %vm539, 1, 0
      %v572 = vsel %vm540, 1, 0
      %v573 = vsel %vm541, 1, 0
      %v574 = vsel %vm542, 1, 0
      %v575 = vsel %vm543, 1, 0
      %v576 = vsel %vm544, 1, 0
      %v577 = vsel %vm545, 1, 0
      %v578 = vsel %vm546, 1, 0
      %v579 = vsel %vm547, 1, 0
      %v580 = vcvt.s32.f32 %v548
      %v581 = vcvt.s32.f32 %v549
      %v582 = vcvt.s32.f32 %v550
      %v583 = vcvt.s32.f32 %v551
      %v584 = vcvt.s32.f32 %v552
      %v585 = vcvt.s32.f32 %v553
      %v586 = vcvt.s32.f32 %v554
      %v587 = vcvt.s32.f32 %v555
      %v588 = vcvt.s32.f32 %v556
      %v589 = vcvt.s32.f32 %v557
      %v590 = vcvt.s32.f32 %v558
      %v591 = vcvt.s32.f32 %v559
      %v592 = vcvt.s32.f32 %v560
      %v593 = vcvt.s32.f32 %v561
      %v594 = vcvt.s32.f32 %v562
      %v595 = vcvt.s32.f32 %v563
      %v596 = vcvt.s32.f32 %v564
      %v597 = vcvt.s32.f32 %v565
      %v598 = vcvt.s32.f32 %v566
      %v599 = vcvt.s32.f32 %v567
      %v600 = vcvt.s32.f32 %v568
      %v601 = vcvt.s32.f32 %v569
      %v602 = vcvt.s32.f32 %v570
      %v603 = vcvt.s32.f32 %v571
      %v604 = vcvt.s32.f32 %v572
      %v605 = vcvt.s32.f32 %v573
      %v606 = vcvt.s32.f32 %v574
      %v607 = vcvt.s32.f32 %v575
      %v608 = vcvt.s32.f32 %v576
      %v609 = vcvt.s32.f32 %v577
      %v610 = vcvt.s32.f32 %v578
      %v611 = vcvt.s32.f32 %v579
      %v612 = vld [vmem:[%s219] sm:$0xf]
      %v613 = vld [vmem:[%s219 + $0x4] sm:$0xf]
      %v614 = vld [vmem:[%s219 + $0x8] sm:$0xf]
      %v615 = vld [vmem:[%s219 + $0xc] sm:$0xf]
      %v616 = vld [vmem:[%s219 + $0x10] sm:$0xf]
      %v617 = vld [vmem:[%s219 + $0x14] sm:$0xf]
      %v618 = vld [vmem:[%s219 + $0x18] sm:$0xf]
      %v619 = vld [vmem:[%s219 + $0x1c] sm:$0xf]
      %v620 = vld [vmem:[%s219 + $0x20] sm:$0xf]
      %v621 = vld [vmem:[%s219 + $0x24] sm:$0xf]
      %v622 = vld [vmem:[%s219 + $0x28] sm:$0xf]
      %v623 = vld [vmem:[%s219 + $0x2c] sm:$0xf]
      %v624 = vld [vmem:[%s219 + $0x30] sm:$0xf]
      %v625 = vld [vmem:[%s219 + $0x34] sm:$0xf]
      %v626 = vld [vmem:[%s219 + $0x38] sm:$0xf]
      %v627 = vld [vmem:[%s219 + $0x3c] sm:$0xf]
      %v628 = vld [vmem:[%s219 + $0x40] sm:$0xf]
      %v629 = vld [vmem:[%s219 + $0x44] sm:$0xf]
      %v630 = vld [vmem:[%s219 + $0x48] sm:$0xf]
      %v631 = vld [vmem:[%s219 + $0x4c] sm:$0xf]
      %v632 = vld [vmem:[%s219 + $0x50] sm:$0xf]
      %v633 = vld [vmem:[%s219 + $0x54] sm:$0xf]
      %v634 = vld [vmem:[%s219 + $0x58] sm:$0xf]
      %v635 = vld [vmem:[%s219 + $0x5c] sm:$0xf]
      %v636 = vld [vmem:[%s219 + $0x60] sm:$0xf]
      %v637 = vld [vmem:[%s219 + $0x64] sm:$0xf]
      %v638 = vld [vmem:[%s219 + $0x68] sm:$0xf]
      %v639 = vld [vmem:[%s219 + $0x6c] sm:$0xf]
      %v640 = vld [vmem:[%s219 + $0x70] sm:$0xf]
      %v641 = vld [vmem:[%s219 + $0x74] sm:$0xf]
      %v642 = vld [vmem:[%s219 + $0x78] sm:$0xf]
      %v643 = vld [vmem:[%s219 + $0x7c] sm:$0xf]
      %v644 = vld [vmem:[%s1] sm:$0xf]
      %v645 = vld [vmem:[%s1 + $0x4] sm:$0xf]
      %v646 = vld [vmem:[%s1 + $0x8] sm:$0xf]
      %v647 = vld [vmem:[%s1 + $0xc] sm:$0xf]
      %v680 = vunpack.c.l.b16 %v612
      %v681 = vunpack.c.l.b16 %v613
      %v682 = vunpack.c.l.b16 %v614
      %v683 = vunpack.c.l.b16 %v615
      %v684 = vunpack.c.l.b16 %v616
      %v685 = vunpack.c.l.b16 %v617
      %v686 = vunpack.c.l.b16 %v618
      %v687 = vunpack.c.l.b16 %v619
      %v688 = vunpack.c.l.b16 %v620
      %v689 = vunpack.c.l.b16 %v621
      %v690 = vunpack.c.l.b16 %v622
      %v691 = vunpack.c.l.b16 %v623
      %v692 = vunpack.c.l.b16 %v624
      %v693 = vunpack.c.l.b16 %v625
      %v694 = vunpack.c.l.b16 %v626
      %v695 = vunpack.c.l.b16 %v627
      %v696 = vunpack.c.l.b16 %v628
      %v697 = vunpack.c.l.b16 %v629
      %v698 = vunpack.c.l.b16 %v630
      %v699 = vunpack.c.l.b16 %v631
      %v700 = vunpack.c.l.b16 %v632
      %v701 = vunpack.c.l.b16 %v633
      %v702 = vunpack.c.l.b16 %v634
      %v703 = vunpack.c.l.b16 %v635
      %v704 = vunpack.c.l.b16 %v636
      %v705 = vunpack.c.l.b16 %v637
      %v706 = vunpack.c.l.b16 %v638
      %v707 = vunpack.c.l.b16 %v639
      %v708 = vunpack.c.l.b16 %v640
      %v709 = vunpack.c.l.b16 %v641
      %v710 = vunpack.c.l.b16 %v642
      %v711 = vunpack.c.l.b16 %v643
      %v712 = vpack.c.b16 %v681, %v680
      %v713 = vpack.c.b16 %v683, %v682
      %v714 = vpack.c.b16 %v685, %v684
      %v715 = vpack.c.b16 %v687, %v686
      %v716 = vpack.c.b16 %v689, %v688
      %v717 = vpack.c.b16 %v691, %v690
      %v718 = vpack.c.b16 %v693, %v692
      %v719 = vpack.c.b16 %v695, %v694
      %v720 = vpack.c.b16 %v697, %v696
      %v721 = vpack.c.b16 %v699, %v698
      %v722 = vpack.c.b16 %v701, %v700
      %v723 = vpack.c.b16 %v703, %v702
      %v724 = vpack.c.b16 %v705, %v704
      %v725 = vpack.c.b16 %v707, %v706
      %v726 = vpack.c.b16 %v709, %v708
      %v727 = vpack.c.b16 %v711, %v710
      %v732 = vunpack.c.l.b16 %v644
      %v733 = vunpack.c.l.b16 %v645
      %v734 = vunpack.c.l.b16 %v646
      %v735 = vunpack.c.l.b16 %v647
      %v736 = vpack.c.b16 %v733, %v732
      %v737 = vpack.c.b16 %v735, %v734
      %vm740 = vcmask 261120
      %v742 = vsel %vm740, %v712, 0
      %v745 = vsel %vm740, %v713, 0
      %v748 = vsel %vm740, %v714, 0
      %v751 = vsel %vm740, %v715, 0
      %v754 = vsel %vm740, %v716, 0
      %v757 = vsel %vm740, %v717, 0
      %v760 = vsel %vm740, %v718, 0
      %v763 = vsel %vm740, %v719, 0
      %v766 = vsel %vm740, %v720, 0
      %v769 = vsel %vm740, %v721, 0
      %v772 = vsel %vm740, %v722, 0
      %v775 = vsel %vm740, %v723, 0
      %v778 = vsel %vm740, %v724, 0
      %v781 = vsel %vm740, %v725, 0
      %v784 = vsel %vm740, %v726, 0
      %v787 = vsel %vm740, %v727, 0
      %789 = vmatprep.subr.bf16.mxu0 0
      %790 = vmatpush1.bf16.msra.mxu0 %v736
      %791 = vmatprep.subr.bf16.mxu0 0
      %792 = vmatpush1.bf16.msra.mxu0 %v737
      %793 = vmatprep.subr.bf16.mxu0 0
      %794 = vmatpush1.bf16.msra.mxu0 0
      %795 = vmatprep.subr.bf16.mxu0 0
      %796 = vmatpush1.bf16.msra.mxu0 0
      %797 = vmatprep.subr.bf16.mxu0 0
      %798 = vmatpush1.bf16.msra.mxu0 0
      %799 = vmatprep.subr.bf16.mxu0 0
      %800 = vmatpush1.bf16.msra.mxu0 0
      %801 = vmatprep.subr.bf16.mxu0 0
      %802 = vmatpush1.bf16.msra.mxu0 0
      %803 = vmatprep.subr.bf16.mxu0 0
      %804 = vmatpush1.bf16.msra.mxu0 0
      %805 = vmatprep.subr.bf16.mxu0 0
      %806 = vmatpush1.bf16.msra.mxu0 0
      %807 = vmatprep.subr.bf16.mxu0 0
      %808 = vmatpush1.bf16.msra.mxu0 0
      %809 = vmatprep.subr.bf16.mxu0 0
      %810 = vmatpush1.bf16.msra.mxu0 0
      %811 = vmatprep.subr.bf16.mxu0 0
      %812 = vmatpush1.bf16.msra.mxu0 0
      %813 = vmatprep.subr.bf16.mxu0 0
      %814 = vmatpush1.bf16.msra.mxu0 0
      %815 = vmatprep.subr.bf16.mxu0 0
      %816 = vmatpush1.bf16.msra.mxu0 0
      %817 = vmatprep.subr.bf16.mxu0 0
      %818 = vmatpush1.bf16.msra.mxu0 0
      %819 = vmatprep.subr.bf16.mxu0 0
      %820 = vmatpush1.bf16.msra.mxu0 0
      %821 = vmatprep.mubr.bf16.mxu0 0
      %822 = vmatmul.mubr.bf16.gmra.mrb[0].mxu0 %v742
      %v823 = vpop.f32.mrb[0].mxu0
      %v824 = vadd.f32 0.0, %v823
      %v825 = vpop.f32.mrb[0].mxu0
      %v826 = vpop.f32.mrb[0].mxu0
      %v827 = vadd.f32 0.0, %v826
      %v828 = vpop.f32.mrb[0].mxu0
      %829 = vmatprep.mubr.bf16.mxu0 0
      %830 = vmatmul.mubr.bf16.gmra.mrb[0].mxu0 %v745
      %v831 = vpop.f32.mrb[0].mxu0
      %v832 = vadd.f32 0.0, %v831
      %v833 = vpop.f32.mrb[0].mxu0
      %v834 = vpop.f32.mrb[0].mxu0
      %v835 = vadd.f32 0.0, %v834
      %v836 = vpop.f32.mrb[0].mxu0
      %837 = vmatprep.mubr.bf16.mxu0 0
      %838 = vmatmul.mubr.bf16.gmra.mrb[0].mxu0 %v748
      %v839 = vpop.f32.mrb[0].mxu0
      %v840 = vadd.f32 0.0, %v839
      %v841 = vpop.f32.mrb[0].mxu0
      %v842 = vpop.f32.mrb[0].mxu0
      %v843 = vadd.f32 0.0, %v842
      %v844 = vpop.f32.mrb[0].mxu0
      %845 = vmatprep.mubr.bf16.mxu0 0
      %846 = vmatmul.mubr.bf16.gmra.mrb[0].mxu0 %v751
      %v847 = vpop.f32.mrb[0].mxu0
      %v848 = vadd.f32 0.0, %v847
      %v849 = vpop.f32.mrb[0].mxu0
      %v850 = vpop.f32.mrb[0].mxu0
      %v851 = vadd.f32 0.0, %v850
      %v852 = vpop.f32.mrb[0].mxu0
      %853 = vmatprep.mubr.bf16.mxu0 0
      %854 = vmatmul.mubr.bf16.gmra.mrb[0].mxu0 %v754
      %v855 = vpop.f32.mrb[0].mxu0
      %v856 = vadd.f32 0.0, %v855
      %v857 = vpop.f32.mrb[0].mxu0
      %v858 = vpop.f32.mrb[0].mxu0
      %v859 = vadd.f32 0.0, %v858
      %v860 = vpop.f32.mrb[0].mxu0
      %861 = vmatprep.mubr.bf16.mxu0 0
      %862 = vmatmul.mubr.bf16.gmra.mrb[0].mxu0 %v757
      %v863 = vpop.f32.mrb[0].mxu0
      %v864 = vadd.f32 0.0, %v863
      %v865 = vpop.f32.mrb[0].mxu0
      %v866 = vpop.f32.mrb[0].mxu0
      %v867 = vadd.f32 0.0, %v866
      %v868 = vpop.f32.mrb[0].mxu0
      %869 = vmatprep.mubr.bf16.mxu0 0
      %870 = vmatmul.mubr.bf16.gmra.mrb[0].mxu0 %v760
      %v871 = vpop.f32.mrb[0].mxu0
      %v872 = vadd.f32 0.0, %v871
      %v873 = vpop.f32.mrb[0].mxu0
      %v874 = vpop.f32.mrb[0].mxu0
      %v875 = vadd.f32 0.0, %v874
      %v876 = vpop.f32.mrb[0].mxu0
      %877 = vmatprep.mubr.bf16.mxu0 0
      %878 = vmatmul.mubr.bf16.gmra.mrb[0].mxu0 %v763
      %v879 = vpop.f32.mrb[0].mxu0
      %v880 = vadd.f32 0.0, %v879
      %v881 = vpop.f32.mrb[0].mxu0
      %v882 = vpop.f32.mrb[0].mxu0
      %v883 = vadd.f32 0.0, %v882
      %v884 = vpop.f32.mrb[0].mxu0
      %885 = vmatprep.mubr.bf16.mxu0 0
      %886 = vmatmul.mubr.bf16.gmra.mrb[0].mxu0 %v766
      %v887 = vpop.f32.mrb[0].mxu0
      %v888 = vadd.f32 0.0, %v887
      %v889 = vpop.f32.mrb[0].mxu0
      %v890 = vpop.f32.mrb[0].mxu0
      %v891 = vadd.f32 0.0, %v890
      %v892 = vpop.f32.mrb[0].mxu0
      %893 = vmatprep.mubr.bf16.mxu0 0
      %894 = vmatmul.mubr.bf16.gmra.mrb[0].mxu0 %v769
      %v895 = vpop.f32.mrb[0].mxu0
      %v896 = vadd.f32 0.0, %v895
      %v897 = vpop.f32.mrb[0].mxu0
      %v898 = vpop.f32.mrb[0].mxu0
      %v899 = vadd.f32 0.0, %v898
      %v900 = vpop.f32.mrb[0].mxu0
      %901 = vmatprep.mubr.bf16.mxu0 0
      %902 = vmatmul.mubr.bf16.gmra.mrb[0].mxu0 %v772
      %v903 = vpop.f32.mrb[0].mxu0
      %v904 = vadd.f32 0.0, %v903
      %v905 = vpop.f32.mrb[0].mxu0
      %v906 = vpop.f32.mrb[0].mxu0
      %v907 = vadd.f32 0.0, %v906
      %v908 = vpop.f32.mrb[0].mxu0
      %909 = vmatprep.mubr.bf16.mxu0 0
      %910 = vmatmul.mubr.bf16.gmra.mrb[0].mxu0 %v775
      %v911 = vpop.f32.mrb[0].mxu0
      %v912 = vadd.f32 0.0, %v911
      %v913 = vpop.f32.mrb[0].mxu0
      %v914 = vpop.f32.mrb[0].mxu0
      %v915 = vadd.f32 0.0, %v914
      %v916 = vpop.f32.mrb[0].mxu0
      %917 = vmatprep.mubr.bf16.mxu0 0
      %918 = vmatmul.mubr.bf16.gmra.mrb[0].mxu0 %v778
      %v919 = vpop.f32.mrb[0].mxu0
      %v920 = vadd.f32 0.0, %v919
      %v921 = vpop.f32.mrb[0].mxu0
      %v922 = vpop.f32.mrb[0].mxu0
      %v923 = vadd.f32 0.0, %v922
      %v924 = vpop.f32.mrb[0].mxu0
      %925 = vmatprep.mubr.bf16.mxu0 0
      %926 = vmatmul.mubr.bf16.gmra.mrb[0].mxu0 %v781
      %v927 = vpop.f32.mrb[0].mxu0
      %v928 = vadd.f32 0.0, %v927
      %v929 = vpop.f32.mrb[0].mxu0
      %v930 = vpop.f32.mrb[0].mxu0
      %v931 = vadd.f32 0.0, %v930
      %v932 = vpop.f32.mrb[0].mxu0
      %933 = vmatprep.mubr.bf16.mxu0 0
      %934 = vmatmul.mubr.bf16.gmra.mrb[0].mxu0 %v784
      %v935 = vpop.f32.mrb[0].mxu0
      %v936 = vadd.f32 0.0, %v935
      %v937 = vpop.f32.mrb[0].mxu0
      %v938 = vpop.f32.mrb[0].mxu0
      %v939 = vadd.f32 0.0, %v938
      %v940 = vpop.f32.mrb[0].mxu0
      %941 = vmatprep.mubr.bf16.mxu0 0
      %942 = vmatmul.mubr.bf16.gmra.mrb[0].mxu0 %v787
      %v943 = vpop.f32.mrb[0].mxu0
      %v944 = vadd.f32 0.0, %v943
      %v945 = vpop.f32.mrb[0].mxu0
      %v946 = vpop.f32.mrb[0].mxu0
      %v947 = vadd.f32 0.0, %v946
      %v948 = vpop.f32.mrb[0].mxu0
      %949 = vdwg.mxu0
      %v950 = vadd.f32 %v824, 0.0
      %v951 = vadd.f32 %v827, 0.0
      %v952 = vadd.f32 %v832, 0.0
      %v953 = vadd.f32 %v835, 0.0
      %v954 = vadd.f32 %v840, 0.0
      %v955 = vadd.f32 %v843, 0.0
      %v956 = vadd.f32 %v848, 0.0
      %v957 = vadd.f32 %v851, 0.0
      %v958 = vadd.f32 %v856, 0.0
      %v959 = vadd.f32 %v859, 0.0
      %v960 = vadd.f32 %v864, 0.0
      %v961 = vadd.f32 %v867, 0.0
      %v962 = vadd.f32 %v872, 0.0
      %v963 = vadd.f32 %v875, 0.0
      %v964 = vadd.f32 %v880, 0.0
      %v965 = vadd.f32 %v883, 0.0
      %v966 = vadd.f32 %v888, 0.0
      %v967 = vadd.f32 %v891, 0.0
      %v968 = vadd.f32 %v896, 0.0
      %v969 = vadd.f32 %v899, 0.0
      %v970 = vadd.f32 %v904, 0.0
      %v971 = vadd.f32 %v907, 0.0
      %v972 = vadd.f32 %v912, 0.0
      %v973 = vadd.f32 %v915, 0.0
      %v974 = vadd.f32 %v920, 0.0
      %v975 = vadd.f32 %v923, 0.0
      %v976 = vadd.f32 %v928, 0.0
      %v977 = vadd.f32 %v931, 0.0
      %v978 = vadd.f32 %v936, 0.0
      %v979 = vadd.f32 %v939, 0.0
      %v980 = vadd.f32 %v944, 0.0
      %v981 = vadd.f32 %v947, 0.0
      %vm1014 = vcmask 1040384
      %v1015 = vrot.slane %v824, 7
      %v1016 = vrot.slane %v827, 7
      %v1017 = vsel %vm1014, %v1015, %v1016
      %v1018 = vrot.slane %v832, 7
      %v1019 = vsel %vm1014, %v1016, %v1018
      %v1020 = vrot.slane %v835, 7
      %v1021 = vsel %vm1014, %v1018, %v1020
      %v1022 = vrot.slane %v840, 7
      %v1023 = vsel %vm1014, %v1020, %v1022
      %v1024 = vrot.slane %v843, 7
      %v1025 = vsel %vm1014, %v1022, %v1024
      %v1026 = vrot.slane %v848, 7
      %v1027 = vsel %vm1014, %v1024, %v1026
      %v1028 = vrot.slane %v851, 7
      %v1029 = vsel %vm1014, %v1026, %v1028
      %v1030 = vrot.slane %v856, 7
      %v1031 = vsel %vm1014, %v1028, %v1030
      %v1032 = vrot.slane %v859, 7
      %v1033 = vsel %vm1014, %v1030, %v1032
      %v1034 = vrot.slane %v864, 7
      %v1035 = vsel %vm1014, %v1032, %v1034
      %v1036 = vrot.slane %v867, 7
      %v1037 = vsel %vm1014, %v1034, %v1036
      %v1038 = vrot.slane %v872, 7
      %v1039 = vsel %vm1014, %v1036, %v1038
      %v1040 = vrot.slane %v875, 7
      %v1041 = vsel %vm1014, %v1038, %v1040
      %v1042 = vrot.slane %v880, 7
      %v1043 = vsel %vm1014, %v1040, %v1042
      %v1044 = vrot.slane %v883, 7
      %v1045 = vsel %vm1014, %v1042, %v1044
      %v1046 = vrot.slane %v888, 7
      %v1047 = vsel %vm1014, %v1044, %v1046
      %v1048 = vrot.slane %v891, 7
      %v1049 = vsel %vm1014, %v1046, %v1048
      %v1050 = vrot.slane %v896, 7
      %v1051 = vsel %vm1014, %v1048, %v1050
      %v1052 = vrot.slane %v899, 7
      %v1053 = vsel %vm1014, %v1050, %v1052
      %v1054 = vrot.slane %v904, 7
      %v1055 = vsel %vm1014, %v1052, %v1054
      %v1056 = vrot.slane %v907, 7
      %v1057 = vsel %vm1014, %v1054, %v1056
      %v1058 = vrot.slane %v912, 7
      %v1059 = vsel %vm1014, %v1056, %v1058
      %v1060 = vrot.slane %v915, 7
      %v1061 = vsel %vm1014, %v1058, %v1060
      %v1062 = vrot.slane %v920, 7
      %v1063 = vsel %vm1014, %v1060, %v1062
      %v1064 = vrot.slane %v923, 7
      %v1065 = vsel %vm1014, %v1062, %v1064
      %v1066 = vrot.slane %v928, 7
      %v1067 = vsel %vm1014, %v1064, %v1066
      %v1068 = vrot.slane %v931, 7
      %v1069 = vsel %vm1014, %v1066, %v1068
      %v1070 = vrot.slane %v936, 7
      %v1071 = vsel %vm1014, %v1068, %v1070
      %v1072 = vrot.slane %v939, 7
      %v1073 = vsel %vm1014, %v1070, %v1072
      %v1074 = vrot.slane %v944, 7
      %v1075 = vsel %vm1014, %v1072, %v1074
      %v1076 = vrot.slane %v947, 7
      %v1077 = vsel %vm1014, %v1074, %v1076
      %v1110 = vsel %vm1014, 0.0, %v1015
      %v1111 = vmul.f32 %v484, %v1110
      %v1112 = vmul.f32 %v485, %v1017
      %v1113 = vmul.f32 %v486, %v1019
      %v1114 = vmul.f32 %v487, %v1021
      %v1115 = vmul.f32 %v488, %v1023
      %v1116 = vmul.f32 %v489, %v1025
      %v1117 = vmul.f32 %v490, %v1027
      %v1118 = vmul.f32 %v491, %v1029
      %v1119 = vmul.f32 %v492, %v1031
      %v1120 = vmul.f32 %v493, %v1033
      %v1121 = vmul.f32 %v494, %v1035
      %v1122 = vmul.f32 %v495, %v1037
      %v1123 = vmul.f32 %v496, %v1039
      %v1124 = vmul.f32 %v497, %v1041
      %v1125 = vmul.f32 %v498, %v1043
      %v1126 = vmul.f32 %v499, %v1045
      %v1127 = vmul.f32 %v500, %v1047
      %v1128 = vmul.f32 %v501, %v1049
      %v1129 = vmul.f32 %v502, %v1051
      %v1130 = vmul.f32 %v503, %v1053
      %v1131 = vmul.f32 %v504, %v1055
      %v1132 = vmul.f32 %v505, %v1057
      %v1133 = vmul.f32 %v506, %v1059
      %v1134 = vmul.f32 %v507, %v1061
      %v1135 = vmul.f32 %v508, %v1063
      %v1136 = vmul.f32 %v509, %v1065
      %v1137 = vmul.f32 %v510, %v1067
      %v1138 = vmul.f32 %v511, %v1069
      %v1139 = vmul.f32 %v512, %v1071
      %v1140 = vmul.f32 %v513, %v1073
      %v1141 = vmul.f32 %v514, %v1075
      %v1142 = vmul.f32 %v515, %v1077
      %1175 = vrot.lane.b32.xlu0 %v1111, 16
      %v1176 = vpop.permute.xlu0 %1175
      %1177 = vrot.lane.b32.xlu0 %v1112, 16
      %v1178 = vpop.permute.xlu0 %1177
      %1179 = vrot.lane.b32.xlu0 %v1113, 16
      %v1180 = vpop.permute.xlu0 %1179
      %1181 = vrot.lane.b32.xlu0 %v1114, 16
      %v1182 = vpop.permute.xlu0 %1181
      %1183 = vrot.lane.b32.xlu0 %v1115, 16
      %v1184 = vpop.permute.xlu0 %1183
      %1185 = vrot.lane.b32.xlu0 %v1116, 16
      %v1186 = vpop.permute.xlu0 %1185
      %1187 = vrot.lane.b32.xlu0 %v1117, 16
      %v1188 = vpop.permute.xlu0 %1187
      %1189 = vrot.lane.b32.xlu0 %v1118, 16
      %v1190 = vpop.permute.xlu0 %1189
      %1191 = vrot.lane.b32.xlu0 %v1119, 16
      %v1192 = vpop.permute.xlu0 %1191
      %1193 = vrot.lane.b32.xlu0 %v1120, 16
      %v1194 = vpop.permute.xlu0 %1193
      %1195 = vrot.lane.b32.xlu0 %v1121, 16
      %v1196 = vpop.permute.xlu0 %1195
      %1197 = vrot.lane.b32.xlu0 %v1122, 16
      %v1198 = vpop.permute.xlu0 %1197
      %1199 = vrot.lane.b32.xlu0 %v1123, 16
      %v1200 = vpop.permute.xlu0 %1199
      %1201 = vrot.lane.b32.xlu0 %v1124, 16
      %v1202 = vpop.permute.xlu0 %1201
      %1203 = vrot.lane.b32.xlu0 %v1125, 16
      %v1204 = vpop.permute.xlu0 %1203
      %1205 = vrot.lane.b32.xlu0 %v1126, 16
      %v1206 = vpop.permute.xlu0 %1205
      %1207 = vrot.lane.b32.xlu0 %v1127, 16
      %v1208 = vpop.permute.xlu0 %1207
      %1209 = vrot.lane.b32.xlu0 %v1128, 16
      %v1210 = vpop.permute.xlu0 %1209
      %1211 = vrot.lane.b32.xlu0 %v1129, 16
      %v1212 = vpop.permute.xlu0 %1211
      %1213 = vrot.lane.b32.xlu0 %v1130, 16
      %v1214 = vpop.permute.xlu0 %1213
      %1215 = vrot.lane.b32.xlu0 %v1131, 16
      %v1216 = vpop.permute.xlu0 %1215
      %1217 = vrot.lane.b32.xlu0 %v1132, 16
      %v1218 = vpop.permute.xlu0 %1217
      %1219 = vrot.lane.b32.xlu0 %v1133, 16
      %v1220 = vpop.permute.xlu0 %1219
      %1221 = vrot.lane.b32.xlu0 %v1134, 16
      %v1222 = vpop.permute.xlu0 %1221
      %1223 = vrot.lane.b32.xlu0 %v1135, 16
      %v1224 = vpop.permute.xlu0 %1223
      %1225 = vrot.lane.b32.xlu0 %v1136, 16
      %v1226 = vpop.permute.xlu0 %1225
      %1227 = vrot.lane.b32.xlu0 %v1137, 16
      %v1228 = vpop.permute.xlu0 %1227
      %1229 = vrot.lane.b32.xlu0 %v1138, 16
      %v1230 = vpop.permute.xlu0 %1229
      %1231 = vrot.lane.b32.xlu0 %v1139, 16
      %v1232 = vpop.permute.xlu0 %1231
      %1233 = vrot.lane.b32.xlu0 %v1140, 16
      %v1234 = vpop.permute.xlu0 %1233
      %1235 = vrot.lane.b32.xlu0 %v1141, 16
      %v1236 = vpop.permute.xlu0 %1235
      %1237 = vrot.lane.b32.xlu0 %v1142, 16
      %v1238 = vpop.permute.xlu0 %1237
      %v1271 = vadd.f32 %v950, %v1176
      %v1272 = vadd.f32 %v951, %v1178
      %v1273 = vadd.f32 %v952, %v1180
      %v1274 = vadd.f32 %v953, %v1182
      %v1275 = vadd.f32 %v954, %v1184
      %v1276 = vadd.f32 %v955, %v1186
      %v1277 = vadd.f32 %v956, %v1188
      %v1278 = vadd.f32 %v957, %v1190
      %v1279 = vadd.f32 %v958, %v1192
      %v1280 = vadd.f32 %v959, %v1194
      %v1281 = vadd.f32 %v960, %v1196
      %v1282 = vadd.f32 %v961, %v1198
      %v1283 = vadd.f32 %v962, %v1200
      %v1284 = vadd.f32 %v963, %v1202
      %v1285 = vadd.f32 %v964, %v1204
      %v1286 = vadd.f32 %v965, %v1206
      %v1287 = vadd.f32 %v966, %v1208
      %v1288 = vadd.f32 %v967, %v1210
      %v1289 = vadd.f32 %v968, %v1212
      %v1290 = vadd.f32 %v969, %v1214
      %v1291 = vadd.f32 %v970, %v1216
      %v1292 = vadd.f32 %v971, %v1218
      %v1293 = vadd.f32 %v972, %v1220
      %v1294 = vadd.f32 %v973, %v1222
      %v1295 = vadd.f32 %v974, %v1224
      %v1296 = vadd.f32 %v975, %v1226
      %v1297 = vadd.f32 %v976, %v1228
      %v1298 = vadd.f32 %v977, %v1230
      %v1299 = vadd.f32 %v978, %v1232
      %v1300 = vadd.f32 %v979, %v1234
      %v1301 = vadd.f32 %v980, %v1236
      %v1302 = vadd.f32 %v981, %v1238
      %vm1303 = vcmask 1046528
      %v1304 = vrot.slane %v824, 1
      %v1305 = vrot.slane %v827, 1
      %v1306 = vsel %vm1303, %v1304, %v1305
      %v1307 = vrot.slane %v832, 1
      %v1308 = vsel %vm1303, %v1305, %v1307
      %v1309 = vrot.slane %v835, 1
      %v1310 = vsel %vm1303, %v1307, %v1309
      %v1311 = vrot.slane %v840, 1
      %v1312 = vsel %vm1303, %v1309, %v1311
      %v1313 = vrot.slane %v843, 1
      %v1314 = vsel %vm1303, %v1311, %v1313
      %v1315 = vrot.slane %v848, 1
      %v1316 = vsel %vm1303, %v1313, %v1315
      %v1317 = vrot.slane %v851, 1
      %v1318 = vsel %vm1303, %v1315, %v1317
      %v1319 = vrot.slane %v856, 1
      %v1320 = vsel %vm1303, %v1317, %v1319
      %v1321 = vrot.slane %v859, 1
      %v1322 = vsel %vm1303, %v1319, %v1321
      %v1323 = vrot.slane %v864, 1
      %v1324 = vsel %vm1303, %v1321, %v1323
      %v1325 = vrot.slane %v867, 1
      %v1326 = vsel %vm1303, %v1323, %v1325
      %v1327 = vrot.slane %v872, 1
      %v1328 = vsel %vm1303, %v1325, %v1327
      %v1329 = vrot.slane %v875, 1
      %v1330 = vsel %vm1303, %v1327, %v1329
      %v1331 = vrot.slane %v880, 1
      %v1332 = vsel %vm1303, %v1329, %v1331
      %v1333 = vrot.slane %v883, 1
      %v1334 = vsel %vm1303, %v1331, %v1333
      %v1335 = vrot.slane %v888, 1
      %v1336 = vsel %vm1303, %v1333, %v1335
      %v1337 = vrot.slane %v891, 1
      %v1338 = vsel %vm1303, %v1335, %v1337
      %v1339 = vrot.slane %v896, 1
      %v1340 = vsel %vm1303, %v1337, %v1339
      %v1341 = vrot.slane %v899, 1
      %v1342 = vsel %vm1303, %v1339, %v1341
      %v1343 = vrot.slane %v904, 1
      %v1344 = vsel %vm1303, %v1341, %v1343
      %v1345 = vrot.slane %v907, 1
      %v1346 = vsel %vm1303, %v1343, %v1345
      %v1347 = vrot.slane %v912, 1
      %v1348 = vsel %vm1303, %v1345, %v1347
      %v1349 = vrot.slane %v915, 1
      %v1350 = vsel %vm1303, %v1347, %v1349
      %v1351 = vrot.slane %v920, 1
      %v1352 = vsel %vm1303, %v1349, %v1351
      %v1353 = vrot.slane %v923, 1
      %v1354 = vsel %vm1303, %v1351, %v1353
      %v1355 = vrot.slane %v928, 1
      %v1356 = vsel %vm1303, %v1353, %v1355
      %v1357 = vrot.slane %v931, 1
      %v1358 = vsel %vm1303, %v1355, %v1357
      %v1359 = vrot.slane %v936, 1
      %v1360 = vsel %vm1303, %v1357, %v1359
      %v1361 = vrot.slane %v939, 1
      %v1362 = vsel %vm1303, %v1359, %v1361
      %v1363 = vrot.slane %v944, 1
      %v1364 = vsel %vm1303, %v1361, %v1363
      %v1365 = vrot.slane %v947, 1
      %v1366 = vsel %vm1303, %v1363, %v1365
      %v1399 = vsel %vm1303, %v1365, 0.0
      %v1400 = vmul.f32 %v580, %v1306
      %v1401 = vmul.f32 %v581, %v1308
      %v1402 = vmul.f32 %v582, %v1310
      %v1403 = vmul.f32 %v583, %v1312
      %v1404 = vmul.f32 %v584, %v1314
      %v1405 = vmul.f32 %v585, %v1316
      %v1406 = vmul.f32 %v586, %v1318
      %v1407 = vmul.f32 %v587, %v1320
      %v1408 = vmul.f32 %v588, %v1322
      %v1409 = vmul.f32 %v589, %v1324
      %v1410 = vmul.f32 %v590, %v1326
      %v1411 = vmul.f32 %v591, %v1328
      %v1412 = vmul.f32 %v592, %v1330
      %v1413 = vmul.f32 %v593, %v1332
      %v1414 = vmul.f32 %v594, %v1334
      %v1415 = vmul.f32 %v595, %v1336
      %v1416 = vmul.f32 %v596, %v1338
      %v1417 = vmul.f32 %v597, %v1340
      %v1418 = vmul.f32 %v598, %v1342
      %v1419 = vmul.f32 %v599, %v1344
      %v1420 = vmul.f32 %v600, %v1346
      %v1421 = vmul.f32 %v601, %v1348
      %v1422 = vmul.f32 %v602, %v1350
      %v1423 = vmul.f32 %v603, %v1352
      %v1424 = vmul.f32 %v604, %v1354
      %v1425 = vmul.f32 %v605, %v1356
      %v1426 = vmul.f32 %v606, %v1358
      %v1427 = vmul.f32 %v607, %v1360
      %v1428 = vmul.f32 %v608, %v1362
      %v1429 = vmul.f32 %v609, %v1364
      %v1430 = vmul.f32 %v610, %v1366
      %v1431 = vmul.f32 %v611, %v1399
      %1464 = vrot.lane.b32.xlu0 %v1400, 112
      %v1465 = vpop.permute.xlu0 %1464
      %1466 = vrot.lane.b32.xlu0 %v1401, 112
      %v1467 = vpop.permute.xlu0 %1466
      %1468 = vrot.lane.b32.xlu0 %v1402, 112
      %v1469 = vpop.permute.xlu0 %1468
      %1470 = vrot.lane.b32.xlu0 %v1403, 112
      %v1471 = vpop.permute.xlu0 %1470
      %1472 = vrot.lane.b32.xlu0 %v1404, 112
      %v1473 = vpop.permute.xlu0 %1472
      %1474 = vrot.lane.b32.xlu0 %v1405, 112
      %v1475 = vpop.permute.xlu0 %1474
      %1476 = vrot.lane.b32.xlu0 %v1406, 112
      %v1477 = vpop.permute.xlu0 %1476
      %1478 = vrot.lane.b32.xlu0 %v1407, 112
      %v1479 = vpop.permute.xlu0 %1478
      %1480 = vrot.lane.b32.xlu0 %v1408, 112
      %v1481 = vpop.permute.xlu0 %1480
      %1482 = vrot.lane.b32.xlu0 %v1409, 112
      %v1483 = vpop.permute.xlu0 %1482
      %1484 = vrot.lane.b32.xlu0 %v1410, 112
      %v1485 = vpop.permute.xlu0 %1484
      %1486 = vrot.lane.b32.xlu0 %v1411, 112
      %v1487 = vpop.permute.xlu0 %1486
      %1488 = vrot.lane.b32.xlu0 %v1412, 112
      %v1489 = vpop.permute.xlu0 %1488
      %1490 = vrot.lane.b32.xlu0 %v1413, 112
      %v1491 = vpop.permute.xlu0 %1490
      %1492 = vrot.lane.b32.xlu0 %v1414, 112
      %v1493 = vpop.permute.xlu0 %1492
      %1494 = vrot.lane.b32.xlu0 %v1415, 112
      %v1495 = vpop.permute.xlu0 %1494
      %1496 = vrot.lane.b32.xlu0 %v1416, 112
      %v1497 = vpop.permute.xlu0 %1496
      %1498 = vrot.lane.b32.xlu0 %v1417, 112
      %v1499 = vpop.permute.xlu0 %1498
      %1500 = vrot.lane.b32.xlu0 %v1418, 112
      %v1501 = vpop.permute.xlu0 %1500
      %1502 = vrot.lane.b32.xlu0 %v1419, 112
      %v1503 = vpop.permute.xlu0 %1502
      %1504 = vrot.lane.b32.xlu0 %v1420, 112
      %v1505 = vpop.permute.xlu0 %1504
      %1506 = vrot.lane.b32.xlu0 %v1421, 112
      %v1507 = vpop.permute.xlu0 %1506
      %1508 = vrot.lane.b32.xlu0 %v1422, 112
      %v1509 = vpop.permute.xlu0 %1508
      %1510 = vrot.lane.b32.xlu0 %v1423, 112
      %v1511 = vpop.permute.xlu0 %1510
      %1512 = vrot.lane.b32.xlu0 %v1424, 112
      %v1513 = vpop.permute.xlu0 %1512
      %1514 = vrot.lane.b32.xlu0 %v1425, 112
      %v1515 = vpop.permute.xlu0 %1514
      %1516 = vrot.lane.b32.xlu0 %v1426, 112
      %v1517 = vpop.permute.xlu0 %1516
      %1518 = vrot.lane.b32.xlu0 %v1427, 112
      %v1519 = vpop.permute.xlu0 %1518
      %1520 = vrot.lane.b32.xlu0 %v1428, 112
      %v1521 = vpop.permute.xlu0 %1520
      %1522 = vrot.lane.b32.xlu0 %v1429, 112
      %v1523 = vpop.permute.xlu0 %1522
      %1524 = vrot.lane.b32.xlu0 %v1430, 112
      %v1525 = vpop.permute.xlu0 %1524
      %1526 = vrot.lane.b32.xlu0 %v1431, 112
      %v1527 = vpop.permute.xlu0 %1526
      %v1560 = vadd.f32 %v1271, %v1465
      %v1561 = vadd.f32 %v1272, %v1467
      %v1562 = vadd.f32 %v1273, %v1469
      %v1563 = vadd.f32 %v1274, %v1471
      %v1564 = vadd.f32 %v1275, %v1473
      %v1565 = vadd.f32 %v1276, %v1475
      %v1566 = vadd.f32 %v1277, %v1477
      %v1567 = vadd.f32 %v1278, %v1479
      %v1568 = vadd.f32 %v1279, %v1481
      %v1569 = vadd.f32 %v1280, %v1483
      %v1570 = vadd.f32 %v1281, %v1485
      %v1571 = vadd.f32 %v1282, %v1487
      %v1572 = vadd.f32 %v1283, %v1489
      %v1573 = vadd.f32 %v1284, %v1491
      %v1574 = vadd.f32 %v1285, %v1493
      %v1575 = vadd.f32 %v1286, %v1495
      %v1576 = vadd.f32 %v1287, %v1497
      %v1577 = vadd.f32 %v1288, %v1499
      %v1578 = vadd.f32 %v1289, %v1501
      %v1579 = vadd.f32 %v1290, %v1503
      %v1580 = vadd.f32 %v1291, %v1505
      %v1581 = vadd.f32 %v1292, %v1507
      %v1582 = vadd.f32 %v1293, %v1509
      %v1583 = vadd.f32 %v1294, %v1511
      %v1584 = vadd.f32 %v1295, %v1513
      %v1585 = vadd.f32 %v1296, %v1515
      %v1586 = vadd.f32 %v1297, %v1517
      %v1587 = vadd.f32 %v1298, %v1519
      %v1588 = vadd.f32 %v1299, %v1521
      %v1589 = vadd.f32 %v1300, %v1523
      %v1590 = vadd.f32 %v1301, %v1525
      %v1591 = vadd.f32 %v1302, %v1527
      %v1592 = vld [vmem:[%s219 + $0x8] sm:$0xf]
      %v1593 = vld [vmem:[%s219 + $0xc] sm:$0xf]
      %v1594 = vld [vmem:[%s219 + $0x10] sm:$0xf]
      %v1595 = vld [vmem:[%s219 + $0x14] sm:$0xf]
      %v1596 = vld [vmem:[%s219 + $0x18] sm:$0xf]
      %v1597 = vld [vmem:[%s219 + $0x1c] sm:$0xf]
      %v1598 = vld [vmem:[%s219 + $0x20] sm:$0xf]
      %v1599 = vld [vmem:[%s219 + $0x24] sm:$0xf]
      %v1600 = vld [vmem:[%s219 + $0x28] sm:$0xf]
      %v1601 = vld [vmem:[%s219 + $0x2c] sm:$0xf]
      %v1602 = vld [vmem:[%s219 + $0x30] sm:$0xf]
      %v1603 = vld [vmem:[%s219 + $0x34] sm:$0xf]
      %v1604 = vld [vmem:[%s219 + $0x38] sm:$0xf]
      %v1605 = vld [vmem:[%s219 + $0x3c] sm:$0xf]
      %v1606 = vld [vmem:[%s219 + $0x40] sm:$0xf]
      %v1607 = vld [vmem:[%s219 + $0x44] sm:$0xf]
      %v1608 = vld [vmem:[%s219 + $0x48] sm:$0xf]
      %v1609 = vld [vmem:[%s219 + $0x4c] sm:$0xf]
      %v1610 = vld [vmem:[%s219 + $0x50] sm:$0xf]
      %v1611 = vld [vmem:[%s219 + $0x54] sm:$0xf]
      %v1612 = vld [vmem:[%s219 + $0x58] sm:$0xf]
      %v1613 = vld [vmem:[%s219 + $0x5c] sm:$0xf]
      %v1614 = vld [vmem:[%s219 + $0x60] sm:$0xf]
      %v1615 = vld [vmem:[%s219 + $0x64] sm:$0xf]
      %v1616 = vld [vmem:[%s219 + $0x68] sm:$0xf]
      %v1617 = vld [vmem:[%s219 + $0x6c] sm:$0xf]
      %v1618 = vld [vmem:[%s219 + $0x70] sm:$0xf]
      %v1619 = vld [vmem:[%s219 + $0x74] sm:$0xf]
      %v1620 = vld [vmem:[%s219 + $0x78] sm:$0xf]
      %v1621 = vld [vmem:[%s219 + $0x7c] sm:$0xf]
      %v1622 = vld [vmem:[%s219 + $0x80] sm:$0xf]
      %v1623 = vld [vmem:[%s219 + $0x84] sm:$0xf]
      %s1624 = scalar_lea.vmem %s1, 16
      %v1625 = vld [vmem:[%s1624] sm:$0xf]
      %v1626 = vld [vmem:[%s1624 + $0x4] sm:$0xf]
      %v1627 = vld [vmem:[%s1624 + $0x8] sm:$0xf]
      %v1628 = vld [vmem:[%s1624 + $0xc] sm:$0xf]
      %v1661 = vunpack.c.l.b16 %v1592
      %v1662 = vunpack.c.l.b16 %v1593
      %v1663 = vunpack.c.l.b16 %v1594
      %v1664 = vunpack.c.l.b16 %v1595
      %v1665 = vunpack.c.l.b16 %v1596
      %v1666 = vunpack.c.l.b16 %v1597
      %v1667 = vunpack.c.l.b16 %v1598
      %v1668 = vunpack.c.l.b16 %v1599
      %v1669 = vunpack.c.l.b16 %v1600
      %v1670 = vunpack.c.l.b16 %v1601
      %v1671 = vunpack.c.l.b16 %v1602
      %v1672 = vunpack.c.l.b16 %v1603
      %v1673 = vunpack.c.l.b16 %v1604
      %v1674 = vunpack.c.l.b16 %v1605
      %v1675 = vunpack.c.l.b16 %v1606
      %v1676 = vunpack.c.l.b16 %v1607
      %v1677 = vunpack.c.l.b16 %v1608
      %v1678 = vunpack.c.l.b16 %v1609
      %v1679 = vunpack.c.l.b16 %v1610
      %v1680 = vunpack.c.l.b16 %v1611
      %v1681 = vunpack.c.l.b16 %v1612
      %v1682 = vunpack.c.l.b16 %v1613
      %v1683 = vunpack.c.l.b16 %v1614
      %v1684 = vunpack.c.l.b16 %v1615
      %v1685 = vunpack.c.l.b16 %v1616
      %v1686 = vunpack.c.l.b16 %v1617
      %v1687 = vunpack.c.l.b16 %v1618
      %v1688 = vunpack.c.l.b16 %v1619
      %v1689 = vunpack.c.l.b16 %v1620
      %v1690 = vunpack.c.l.b16 %v1621
      %v1691 = vunpack.c.l.b16 %v1622
      %v1692 = vunpack.c.l.b16 %v1623
      %v1693 = vpack.c.b16 %v1662, %v1661
      %v1694 = vpack.c.b16 %v1664, %v1663
      %v1695 = vpack.c.b16 %v1666, %v1665
      %v1696 = vpack.c.b16 %v1668, %v1667
      %v1697 = vpack.c.b16 %v1670, %v1669
      %v1698 = vpack.c.b16 %v1672, %v1671
      %v1699 = vpack.c.b16 %v1674, %v1673
      %v1700 = vpack.c.b16 %v1676, %v1675
      %v1701 = vpack.c.b16 %v1678, %v1677
      %v1702 = vpack.c.b16 %v1680, %v1679
      %v1703 = vpack.c.b16 %v1682, %v1681
      %v1704 = vpack.c.b16 %v1684, %v1683
      %v1705 = vpack.c.b16 %v1686, %v1685
      %v1706 = vpack.c.b16 %v1688, %v1687
      %v1707 = vpack.c.b16 %v1690, %v1689
      %v1708 = vpack.c.b16 %v1692, %v1691
      %v1713 = vunpack.c.l.b16 %v1625
      %v1714 = vunpack.c.l.b16 %v1626
      %v1715 = vunpack.c.l.b16 %v1627
      %v1716 = vunpack.c.l.b16 %v1628
      %v1717 = vpack.c.b16 %v1714, %v1713
      %v1718 = vpack.c.b16 %v1716, %v1715
      %v1722 = vsel %vm740, %v1693, 0
      %v1725 = vsel %vm740, %v1694, 0
      %v1728 = vsel %vm740, %v1695, 0
      %v1731 = vsel %vm740, %v1696, 0
      %v1734 = vsel %vm740, %v1697, 0
      %v1737 = vsel %vm740, %v1698, 0
      %v1740 = vsel %vm740, %v1699, 0
      %v1743 = vsel %vm740, %v1700, 0
      %v1746 = vsel %vm740, %v1701, 0
      %v1749 = vsel %vm740, %v1702, 0
      %v1752 = vsel %vm740, %v1703, 0
      %v1755 = vsel %vm740, %v1704, 0
      %v1758 = vsel %vm740, %v1705, 0
      %v1761 = vsel %vm740, %v1706, 0
      %v1764 = vsel %vm740, %v1707, 0
      %v1767 = vsel %vm740, %v1708, 0
      %1769 = vmatprep.subr.bf16.mxu0 0
      %1770 = vmatpush1.bf16.msra.mxu0 %v1717
      %1771 = vmatprep.subr.bf16.mxu0 0
      %1772 = vmatpush1.bf16.msra.mxu0 %v1718
      %1773 = vmatprep.subr.bf16.mxu0 0
      %1774 = vmatpush1.bf16.msra.mxu0 0
      %1775 = vmatprep.subr.bf16.mxu0 0
      %1776 = vmatpush1.bf16.msra.mxu0 0
      %1777 = vmatprep.subr.bf16.mxu0 0
      %1778 = vmatpush1.bf16.msra.mxu0 0
      %1779 = vmatprep.subr.bf16.mxu0 0
      %1780 = vmatpush1.bf16.msra.mxu0 0
      %1781 = vmatprep.subr.bf16.mxu0 0
      %1782 = vmatpush1.bf16.msra.mxu0 0
      %1783 = vmatprep.subr.bf16.mxu0 0
      %1784 = vmatpush1.bf16.msra.mxu0 0
      %1785 = vmatprep.subr.bf16.mxu0 0
      %1786 = vmatpush1.bf16.msra.mxu0 0
      %1787 = vmatprep.subr.bf16.mxu0 0
      %1788 = vmatpush1.bf16.msra.mxu0 0
      %1789 = vmatprep.subr.bf16.mxu0 0
      %1790 = vmatpush1.bf16.msra.mxu0 0
      %1791 = vmatprep.subr.bf16.mxu0 0
      %1792 = vmatpush1.bf16.msra.mxu0 0
      %1793 = vmatprep.subr.bf16.mxu0 0
      %1794 = vmatpush1.bf16.msra.mxu0 0
      %1795 = vmatprep.subr.bf16.mxu0 0
      %1796 = vmatpush1.bf16.msra.mxu0 0
      %1797 = vmatprep.subr.bf16.mxu0 0
      %1798 = vmatpush1.bf16.msra.mxu0 0
      %1799 = vmatprep.subr.bf16.mxu0 0
      %1800 = vmatpush1.bf16.msra.mxu0 0
      %1801 = vmatprep.mubr.bf16.mxu0 0
      %1802 = vmatmul.mubr.bf16.gmra.mrb[0].mxu0 %v1722
      %v1803 = vpop.f32.mrb[0].mxu0
      %v1804 = vadd.f32 0.0, %v1803
      %v1805 = vpop.f32.mrb[0].mxu0
      %v1806 = vpop.f32.mrb[0].mxu0
      %v1807 = vadd.f32 0.0, %v1806
      %v1808 = vpop.f32.mrb[0].mxu0
      %1809 = vmatprep.mubr.bf16.mxu0 0
      %1810 = vmatmul.mubr.bf16.gmra.mrb[0].mxu0 %v1725
      %v1811 = vpop.f32.mrb[0].mxu0
      %v1812 = vadd.f32 0.0, %v1811
      %v1813 = vpop.f32.mrb[0].mxu0
      %v1814 = vpop.f32.mrb[0].mxu0
      %v1815 = vadd.f32 0.0, %v1814
      %v1816 = vpop.f32.mrb[0].mxu0
      %1817 = vmatprep.mubr.bf16.mxu0 0
      %1818 = vmatmul.mubr.bf16.gmra.mrb[0].mxu0 %v1728
      %v1819 = vpop.f32.mrb[0].mxu0
      %v1820 = vadd.f32 0.0, %v1819
      %v1821 = vpop.f32.mrb[0].mxu0
      %v1822 = vpop.f32.mrb[0].mxu0
      %v1823 = vadd.f32 0.0, %v1822
      %v1824 = vpop.f32.mrb[0].mxu0
      %1825 = vmatprep.mubr.bf16.mxu0 0
      %1826 = vmatmul.mubr.bf16.gmra.mrb[0].mxu0 %v1731
      %v1827 = vpop.f32.mrb[0].mxu0
      %v1828 = vadd.f32 0.0, %v1827
      %v1829 = vpop.f32.mrb[0].mxu0
      %v1830 = vpop.f32.mrb[0].mxu0
      %v1831 = vadd.f32 0.0, %v1830
      %v1832 = vpop.f32.mrb[0].mxu0
      %1833 = vmatprep.mubr.bf16.mxu0 0
      %1834 = vmatmul.mubr.bf16.gmra.mrb[0].mxu0 %v1734
      %v1835 = vpop.f32.mrb[0].mxu0
      %v1836 = vadd.f32 0.0, %v1835
      %v1837 = vpop.f32.mrb[0].mxu0
      %v1838 = vpop.f32.mrb[0].mxu0
      %v1839 = vadd.f32 0.0, %v1838
      %v1840 = vpop.f32.mrb[0].mxu0
      %1841 = vmatprep.mubr.bf16.mxu0 0
      %1842 = vmatmul.mubr.bf16.gmra.mrb[0].mxu0 %v1737
      %v1843 = vpop.f32.mrb[0].mxu0
      %v1844 = vadd.f32 0.0, %v1843
      %v1845 = vpop.f32.mrb[0].mxu0
      %v1846 = vpop.f32.mrb[0].mxu0
      %v1847 = vadd.f32 0.0, %v1846
      %v1848 = vpop.f32.mrb[0].mxu0
      %1849 = vmatprep.mubr.bf16.mxu0 0
      %1850 = vmatmul.mubr.bf16.gmra.mrb[0].mxu0 %v1740
      %v1851 = vpop.f32.mrb[0].mxu0
      %v1852 = vadd.f32 0.0, %v1851
      %v1853 = vpop.f32.mrb[0].mxu0
      %v1854 = vpop.f32.mrb[0].mxu0
      %v1855 = vadd.f32 0.0, %v1854
      %v1856 = vpop.f32.mrb[0].mxu0
      %1857 = vmatprep.mubr.bf16.mxu0 0
      %1858 = vmatmul.mubr.bf16.gmra.mrb[0].mxu0 %v1743
      %v1859 = vpop.f32.mrb[0].mxu0
      %v1860 = vadd.f32 0.0, %v1859
      %v1861 = vpop.f32.mrb[0].mxu0
      %v1862 = vpop.f32.mrb[0].mxu0
      %v1863 = vadd.f32 0.0, %v1862
      %v1864 = vpop.f32.mrb[0].mxu0
      %1865 = vmatprep.mubr.bf16.mxu0 0
      %1866 = vmatmul.mubr.bf16.gmra.mrb[0].mxu0 %v1746
      %v1867 = vpop.f32.mrb[0].mxu0
      %v1868 = vadd.f32 0.0, %v1867
      %v1869 = vpop.f32.mrb[0].mxu0
      %v1870 = vpop.f32.mrb[0].mxu0
      %v1871 = vadd.f32 0.0, %v1870
      %v1872 = vpop.f32.mrb[0].mxu0
      %1873 = vmatprep.mubr.bf16.mxu0 0
      %1874 = vmatmul.mubr.bf16.gmra.mrb[0].mxu0 %v1749
      %v1875 = vpop.f32.mrb[0].mxu0
      %v1876 = vadd.f32 0.0, %v1875
      %v1877 = vpop.f32.mrb[0].mxu0
      %v1878 = vpop.f32.mrb[0].mxu0
      %v1879 = vadd.f32 0.0, %v1878
      %v1880 = vpop.f32.mrb[0].mxu0
      %1881 = vmatprep.mubr.bf16.mxu0 0
      %1882 = vmatmul.mubr.bf16.gmra.mrb[0].mxu0 %v1752
      %v1883 = vpop.f32.mrb[0].mxu0
      %v1884 = vadd.f32 0.0, %v1883
      %v1885 = vpop.f32.mrb[0].mxu0
      %v1886 = vpop.f32.mrb[0].mxu0
      %v1887 = vadd.f32 0.0, %v1886
      %v1888 = vpop.f32.mrb[0].mxu0
      %1889 = vmatprep.mubr.bf16.mxu0 0
      %1890 = vmatmul.mubr.bf16.gmra.mrb[0].mxu0 %v1755
      %v1891 = vpop.f32.mrb[0].mxu0
      %v1892 = vadd.f32 0.0, %v1891
      %v1893 = vpop.f32.mrb[0].mxu0
      %v1894 = vpop.f32.mrb[0].mxu0
      %v1895 = vadd.f32 0.0, %v1894
      %v1896 = vpop.f32.mrb[0].mxu0
      %1897 = vmatprep.mubr.bf16.mxu0 0
      %1898 = vmatmul.mubr.bf16.gmra.mrb[0].mxu0 %v1758
      %v1899 = vpop.f32.mrb[0].mxu0
      %v1900 = vadd.f32 0.0, %v1899
      %v1901 = vpop.f32.mrb[0].mxu0
      %v1902 = vpop.f32.mrb[0].mxu0
      %v1903 = vadd.f32 0.0, %v1902
      %v1904 = vpop.f32.mrb[0].mxu0
      %1905 = vmatprep.mubr.bf16.mxu0 0
      %1906 = vmatmul.mubr.bf16.gmra.mrb[0].mxu0 %v1761
      %v1907 = vpop.f32.mrb[0].mxu0
      %v1908 = vadd.f32 0.0, %v1907
      %v1909 = vpop.f32.mrb[0].mxu0
      %v1910 = vpop.f32.mrb[0].mxu0
      %v1911 = vadd.f32 0.0, %v1910
      %v1912 = vpop.f32.mrb[0].mxu0
      %1913 = vmatprep.mubr.bf16.mxu0 0
      %1914 = vmatmul.mubr.bf16.gmra.mrb[0].mxu0 %v1764
      %v1915 = vpop.f32.mrb[0].mxu0
      %v1916 = vadd.f32 0.0, %v1915
      %v1917 = vpop.f32.mrb[0].mxu0
      %v1918 = vpop.f32.mrb[0].mxu0
      %v1919 = vadd.f32 0.0, %v1918
      %v1920 = vpop.f32.mrb[0].mxu0
      %1921 = vmatprep.mubr.bf16.mxu0 0
      %1922 = vmatmul.mubr.bf16.gmra.mrb[0].mxu0 %v1767
      %v1923 = vpop.f32.mrb[0].mxu0
      %v1924 = vadd.f32 0.0, %v1923
      %v1925 = vpop.f32.mrb[0].mxu0
      %v1926 = vpop.f32.mrb[0].mxu0
      %v1927 = vadd.f32 0.0, %v1926
      %v1928 = vpop.f32.mrb[0].mxu0
      %1929 = vdwg.mxu0
      %v1930 = vadd.f32 %v1560, %v1804
      %v1931 = vadd.f32 %v1561, %v1807
      %v1932 = vadd.f32 %v1562, %v1812
      %v1933 = vadd.f32 %v1563, %v1815
      %v1934 = vadd.f32 %v1564, %v1820
      %v1935 = vadd.f32 %v1565, %v1823
      %v1936 = vadd.f32 %v1566, %v1828
      %v1937 = vadd.f32 %v1567, %v1831
      %v1938 = vadd.f32 %v1568, %v1836
      %v1939 = vadd.f32 %v1569, %v1839
      %v1940 = vadd.f32 %v1570, %v1844
      %v1941 = vadd.f32 %v1571, %v1847
      %v1942 = vadd.f32 %v1572, %v1852
      %v1943 = vadd.f32 %v1573, %v1855
      %v1944 = vadd.f32 %v1574, %v1860
      %v1945 = vadd.f32 %v1575, %v1863
      %v1946 = vadd.f32 %v1576, %v1868
      %v1947 = vadd.f32 %v1577, %v1871
      %v1948 = vadd.f32 %v1578, %v1876
      %v1949 = vadd.f32 %v1579, %v1879
      %v1950 = vadd.f32 %v1580, %v1884
      %v1951 = vadd.f32 %v1581, %v1887
      %v1952 = vadd.f32 %v1582, %v1892
      %v1953 = vadd.f32 %v1583, %v1895
      %v1954 = vadd.f32 %v1584, %v1900
      %v1955 = vadd.f32 %v1585, %v1903
      %v1956 = vadd.f32 %v1586, %v1908
      %v1957 = vadd.f32 %v1587, %v1911
      %v1958 = vadd.f32 %v1588, %v1916
      %v1959 = vadd.f32 %v1589, %v1919
      %v1960 = vadd.f32 %v1590, %v1924
      %v1961 = vadd.f32 %v1591, %v1927
      %v1994 = vrot.slane %v1804, 7
      %v1995 = vrot.slane %v1807, 7
      %v1996 = vsel %vm1014, %v1994, %v1995
      %v1997 = vrot.slane %v1812, 7
      %v1998 = vsel %vm1014, %v1995, %v1997
      %v1999 = vrot.slane %v1815, 7
      %v2000 = vsel %vm1014, %v1997, %v1999
      %v2001 = vrot.slane %v1820, 7
      %v2002 = vsel %vm1014, %v1999, %v2001
      %v2003 = vrot.slane %v1823, 7
      %v2004 = vsel %vm1014, %v2001, %v2003
      %v2005 = vrot.slane %v1828, 7
      %v2006 = vsel %vm1014, %v2003, %v2005
      %v2007 = vrot.slane %v1831, 7
      %v2008 = vsel %vm1014, %v2005, %v2007
      %v2009 = vrot.slane %v1836, 7
      %v2010 = vsel %vm1014, %v2007, %v2009
      %v2011 = vrot.slane %v1839, 7
      %v2012 = vsel %vm1014, %v2009, %v2011
      %v2013 = vrot.slane %v1844, 7
      %v2014 = vsel %vm1014, %v2011, %v2013
      %v2015 = vrot.slane %v1847, 7
      %v2016 = vsel %vm1014, %v2013, %v2015
      %v2017 = vrot.slane %v1852, 7
      %v2018 = vsel %vm1014, %v2015, %v2017
      %v2019 = vrot.slane %v1855, 7
      %v2020 = vsel %vm1014, %v2017, %v2019
      %v2021 = vrot.slane %v1860, 7
      %v2022 = vsel %vm1014, %v2019, %v2021
      %v2023 = vrot.slane %v1863, 7
      %v2024 = vsel %vm1014, %v2021, %v2023
      %v2025 = vrot.slane %v1868, 7
      %v2026 = vsel %vm1014, %v2023, %v2025
      %v2027 = vrot.slane %v1871, 7
      %v2028 = vsel %vm1014, %v2025, %v2027
      %v2029 = vrot.slane %v1876, 7
      %v2030 = vsel %vm1014, %v2027, %v2029
      %v2031 = vrot.slane %v1879, 7
      %v2032 = vsel %vm1014, %v2029, %v2031
      %v2033 = vrot.slane %v1884, 7
      %v2034 = vsel %vm1014, %v2031, %v2033
      %v2035 = vrot.slane %v1887, 7
      %v2036 = vsel %vm1014, %v2033, %v2035
      %v2037 = vrot.slane %v1892, 7
      %v2038 = vsel %vm1014, %v2035, %v2037
      %v2039 = vrot.slane %v1895, 7
      %v2040 = vsel %vm1014, %v2037, %v2039
      %v2041 = vrot.slane %v1900, 7
      %v2042 = vsel %vm1014, %v2039, %v2041
      %v2043 = vrot.slane %v1903, 7
      %v2044 = vsel %vm1014, %v2041, %v2043
      %v2045 = vrot.slane %v1908, 7
      %v2046 = vsel %vm1014, %v2043, %v2045
      %v2047 = vrot.slane %v1911, 7
      %v2048 = vsel %vm1014, %v2045, %v2047
      %v2049 = vrot.slane %v1916, 7
      %v2050 = vsel %vm1014, %v2047, %v2049
      %v2051 = vrot.slane %v1919, 7
      %v2052 = vsel %vm1014, %v2049, %v2051
      %v2053 = vrot.slane %v1924, 7
      %v2054 = vsel %vm1014, %v2051, %v2053
      %v2055 = vrot.slane %v1927, 7
      %v2056 = vsel %vm1014, %v2053, %v2055
      %v2089 = vsel %vm1014, 0.0, %v1994
      %v2090 = vmul.f32 %v484, %v2089
      %v2091 = vmul.f32 %v485, %v1996
      %v2092 = vmul.f32 %v486, %v1998
      %v2093 = vmul.f32 %v487, %v2000
      %v2094 = vmul.f32 %v488, %v2002
      %v2095 = vmul.f32 %v489, %v2004
      %v2096 = vmul.f32 %v490, %v2006
      %v2097 = vmul.f32 %v491, %v2008
      %v2098 = vmul.f32 %v492, %v2010
      %v2099 = vmul.f32 %v493, %v2012
      %v2100 = vmul.f32 %v494, %v2014
      %v2101 = vmul.f32 %v495, %v2016
      %v2102 = vmul.f32 %v496, %v2018
      %v2103 = vmul.f32 %v497, %v2020
      %v2104 = vmul.f32 %v498, %v2022
      %v2105 = vmul.f32 %v499, %v2024
      %v2106 = vmul.f32 %v500, %v2026
      %v2107 = vmul.f32 %v501, %v2028
      %v2108 = vmul.f32 %v502, %v2030
      %v2109 = vmul.f32 %v503, %v2032
      %v2110 = vmul.f32 %v504, %v2034
      %v2111 = vmul.f32 %v505, %v2036
      %v2112 = vmul.f32 %v506, %v2038
      %v2113 = vmul.f32 %v507, %v2040
      %v2114 = vmul.f32 %v508, %v2042
      %v2115 = vmul.f32 %v509, %v2044
      %v2116 = vmul.f32 %v510, %v2046
      %v2117 = vmul.f32 %v511, %v2048
      %v2118 = vmul.f32 %v512, %v2050
      %v2119 = vmul.f32 %v513, %v2052
      %v2120 = vmul.f32 %v514, %v2054
      %v2121 = vmul.f32 %v515, %v2056
      %2154 = vrot.lane.b32.xlu0 %v2090, 16
      %v2155 = vpop.permute.xlu0 %2154
      %2156 = vrot.lane.b32.xlu0 %v2091, 16
      %v2157 = vpop.permute.xlu0 %2156
      %2158 = vrot.lane.b32.xlu0 %v2092, 16
      %v2159 = vpop.permute.xlu0 %2158
      %2160 = vrot.lane.b32.xlu0 %v2093, 16
      %v2161 = vpop.permute.xlu0 %2160
      %2162 = vrot.lane.b32.xlu0 %v2094, 16
      %v2163 = vpop.permute.xlu0 %2162
      %2164 = vrot.lane.b32.xlu0 %v2095, 16
      %v2165 = vpop.permute.xlu0 %2164
      %2166 = vrot.lane.b32.xlu0 %v2096, 16
      %v2167 = vpop.permute.xlu0 %2166
      %2168 = vrot.lane.b32.xlu0 %v2097, 16
      %v2169 = vpop.permute.xlu0 %2168
      %2170 = vrot.lane.b32.xlu0 %v2098, 16
      %v2171 = vpop.permute.xlu0 %2170
      %2172 = vrot.lane.b32.xlu0 %v2099, 16
      %v2173 = vpop.permute.xlu0 %2172
      %2174 = vrot.lane.b32.xlu0 %v2100, 16
      %v2175 = vpop.permute.xlu0 %2174
      %2176 = vrot.lane.b32.xlu0 %v2101, 16
      %v2177 = vpop.permute.xlu0 %2176
      %2178 = vrot.lane.b32.xlu0 %v2102, 16
      %v2179 = vpop.permute.xlu0 %2178
      %2180 = vrot.lane.b32.xlu0 %v2103, 16
      %v2181 = vpop.permute.xlu0 %2180
      %2182 = vrot.lane.b32.xlu0 %v2104, 16
      %v2183 = vpop.permute.xlu0 %2182
      %2184 = vrot.lane.b32.xlu0 %v2105, 16
      %v2185 = vpop.permute.xlu0 %2184
      %2186 = vrot.lane.b32.xlu0 %v2106, 16
      %v2187 = vpop.permute.xlu0 %2186
      %2188 = vrot.lane.b32.xlu0 %v2107, 16
      %v2189 = vpop.permute.xlu0 %2188
      %2190 = vrot.lane.b32.xlu0 %v2108, 16
      %v2191 = vpop.permute.xlu0 %2190
      %2192 = vrot.lane.b32.xlu0 %v2109, 16
      %v2193 = vpop.permute.xlu0 %2192
      %2194 = vrot.lane.b32.xlu0 %v2110, 16
      %v2195 = vpop.permute.xlu0 %2194
      %2196 = vrot.lane.b32.xlu0 %v2111, 16
      %v2197 = vpop.permute.xlu0 %2196
      %2198 = vrot.lane.b32.xlu0 %v2112, 16
      %v2199 = vpop.permute.xlu0 %2198
      %2200 = vrot.lane.b32.xlu0 %v2113, 16
      %v2201 = vpop.permute.xlu0 %2200
      %2202 = vrot.lane.b32.xlu0 %v2114, 16
      %v2203 = vpop.permute.xlu0 %2202
      %2204 = vrot.lane.b32.xlu0 %v2115, 16
      %v2205 = vpop.permute.xlu0 %2204
      %2206 = vrot.lane.b32.xlu0 %v2116, 16
      %v2207 = vpop.permute.xlu0 %2206
      %2208 = vrot.lane.b32.xlu0 %v2117, 16
      %v2209 = vpop.permute.xlu0 %2208
      %2210 = vrot.lane.b32.xlu0 %v2118, 16
      %v2211 = vpop.permute.xlu0 %2210
      %2212 = vrot.lane.b32.xlu0 %v2119, 16
      %v2213 = vpop.permute.xlu0 %2212
      %2214 = vrot.lane.b32.xlu0 %v2120, 16
      %v2215 = vpop.permute.xlu0 %2214
      %2216 = vrot.lane.b32.xlu0 %v2121, 16
      %v2217 = vpop.permute.xlu0 %2216
      %v2250 = vadd.f32 %v1930, %v2155
      %v2251 = vadd.f32 %v1931, %v2157
      %v2252 = vadd.f32 %v1932, %v2159
      %v2253 = vadd.f32 %v1933, %v2161
      %v2254 = vadd.f32 %v1934, %v2163
      %v2255 = vadd.f32 %v1935, %v2165
      %v2256 = vadd.f32 %v1936, %v2167
      %v2257 = vadd.f32 %v1937, %v2169
      %v2258 = vadd.f32 %v1938, %v2171
      %v2259 = vadd.f32 %v1939, %v2173
      %v2260 = vadd.f32 %v1940, %v2175
      %v2261 = vadd.f32 %v1941, %v2177
      %v2262 = vadd.f32 %v1942, %v2179
      %v2263 = vadd.f32 %v1943, %v2181
      %v2264 = vadd.f32 %v1944, %v2183
      %v2265 = vadd.f32 %v1945, %v2185
      %v2266 = vadd.f32 %v1946, %v2187
      %v2267 = vadd.f32 %v1947, %v2189
      %v2268 = vadd.f32 %v1948, %v2191
      %v2269 = vadd.f32 %v1949, %v2193
      %v2270 = vadd.f32 %v1950, %v2195
      %v2271 = vadd.f32 %v1951, %v2197
      %v2272 = vadd.f32 %v1952, %v2199
      %v2273 = vadd.f32 %v1953, %v2201
      %v2274 = vadd.f32 %v1954, %v2203
      %v2275 = vadd.f32 %v1955, %v2205
      %v2276 = vadd.f32 %v1956, %v2207
      %v2277 = vadd.f32 %v1957, %v2209
      %v2278 = vadd.f32 %v1958, %v2211
      %v2279 = vadd.f32 %v1959, %v2213
      %v2280 = vadd.f32 %v1960, %v2215
      %v2281 = vadd.f32 %v1961, %v2217
      %v2282 = vrot.slane %v1804, 1
      %v2283 = vrot.slane %v1807, 1
      %v2284 = vsel %vm1303, %v2282, %v2283
      %v2285 = vrot.slane %v1812, 1
      %v2286 = vsel %vm1303, %v2283, %v2285
      %v2287 = vrot.slane %v1815, 1
      %v2288 = vsel %vm1303, %v2285, %v2287
      %v2289 = vrot.slane %v1820, 1
      %v2290 = vsel %vm1303, %v2287, %v2289
      %v2291 = vrot.slane %v1823, 1
      %v2292 = vsel %vm1303, %v2289, %v2291
      %v2293 = vrot.slane %v1828, 1
      %v2294 = vsel %vm1303, %v2291, %v2293
      %v2295 = vrot.slane %v1831, 1
      %v2296 = vsel %vm1303, %v2293, %v2295
      %v2297 = vrot.slane %v1836, 1
      %v2298 = vsel %vm1303, %v2295, %v2297
      %v2299 = vrot.slane %v1839, 1
      %v2300 = vsel %vm1303, %v2297, %v2299
      %v2301 = vrot.slane %v1844, 1
      %v2302 = vsel %vm1303, %v2299, %v2301
      %v2303 = vrot.slane %v1847, 1
      %v2304 = vsel %vm1303, %v2301, %v2303
      %v2305 = vrot.slane %v1852, 1
      %v2306 = vsel %vm1303, %v2303, %v2305
      %v2307 = vrot.slane %v1855, 1
      %v2308 = vsel %vm1303, %v2305, %v2307
      %v2309 = vrot.slane %v1860, 1
      %v2310 = vsel %vm1303, %v2307, %v2309
      %v2311 = vrot.slane %v1863, 1
      %v2312 = vsel %vm1303, %v2309, %v2311
      %v2313 = vrot.slane %v1868, 1
      %v2314 = vsel %vm1303, %v2311, %v2313
      %v2315 = vrot.slane %v1871, 1
      %v2316 = vsel %vm1303, %v2313, %v2315
      %v2317 = vrot.slane %v1876, 1
      %v2318 = vsel %vm1303, %v2315, %v2317
      %v2319 = vrot.slane %v1879, 1
      %v2320 = vsel %vm1303, %v2317, %v2319
      %v2321 = vrot.slane %v1884, 1
      %v2322 = vsel %vm1303, %v2319, %v2321
      %v2323 = vrot.slane %v1887, 1
      %v2324 = vsel %vm1303, %v2321, %v2323
      %v2325 = vrot.slane %v1892, 1
      %v2326 = vsel %vm1303, %v2323, %v2325
      %v2327 = vrot.slane %v1895, 1
      %v2328 = vsel %vm1303, %v2325, %v2327
      %v2329 = vrot.slane %v1900, 1
      %v2330 = vsel %vm1303, %v2327, %v2329
      %v2331 = vrot.slane %v1903, 1
      %v2332 = vsel %vm1303, %v2329, %v2331
      %v2333 = vrot.slane %v1908, 1
      %v2334 = vsel %vm1303, %v2331, %v2333
      %v2335 = vrot.slane %v1911, 1
      %v2336 = vsel %vm1303, %v2333, %v2335
      %v2337 = vrot.slane %v1916, 1
      %v2338 = vsel %vm1303, %v2335, %v2337
      %v2339 = vrot.slane %v1919, 1
      %v2340 = vsel %vm1303, %v2337, %v2339
      %v2341 = vrot.slane %v1924, 1
      %v2342 = vsel %vm1303, %v2339, %v2341
      %v2343 = vrot.slane %v1927, 1
      %v2344 = vsel %vm1303, %v2341, %v2343
      %v2377 = vsel %vm1303, %v2343, 0.0
      %v2378 = vmul.f32 %v580, %v2284
      %v2379 = vmul.f32 %v581, %v2286
      %v2380 = vmul.f32 %v582, %v2288
      %v2381 = vmul.f32 %v583, %v2290
      %v2382 = vmul.f32 %v584, %v2292
      %v2383 = vmul.f32 %v585, %v2294
      %v2384 = vmul.f32 %v586, %v2296
      %v2385 = vmul.f32 %v587, %v2298
      %v2386 = vmul.f32 %v588, %v2300
      %v2387 = vmul.f32 %v589, %v2302
      %v2388 = vmul.f32 %v590, %v2304
      %v2389 = vmul.f32 %v591, %v2306
      %v2390 = vmul.f32 %v592, %v2308
      %v2391 = vmul.f32 %v593, %v2310
      %v2392 = vmul.f32 %v594, %v2312
      %v2393 = vmul.f32 %v595, %v2314
      %v2394 = vmul.f32 %v596, %v2316
      %v2395 = vmul.f32 %v597, %v2318
      %v2396 = vmul.f32 %v598, %v2320
      %v2397 = vmul.f32 %v599, %v2322
      %v2398 = vmul.f32 %v600, %v2324
      %v2399 = vmul.f32 %v601, %v2326
      %v2400 = vmul.f32 %v602, %v2328
      %v2401 = vmul.f32 %v603, %v2330
      %v2402 = vmul.f32 %v604, %v2332
      %v2403 = vmul.f32 %v605, %v2334
      %v2404 = vmul.f32 %v606, %v2336
      %v2405 = vmul.f32 %v607, %v2338
      %v2406 = vmul.f32 %v608, %v2340
      %v2407 = vmul.f32 %v609, %v2342
      %v2408 = vmul.f32 %v610, %v2344
      %v2409 = vmul.f32 %v611, %v2377
      %2442 = vrot.lane.b32.xlu0 %v2378, 112
      %v2443 = vpop.permute.xlu0 %2442
      %2444 = vrot.lane.b32.xlu0 %v2379, 112
      %v2445 = vpop.permute.xlu0 %2444
      %2446 = vrot.lane.b32.xlu0 %v2380, 112
      %v2447 = vpop.permute.xlu0 %2446
      %2448 = vrot.lane.b32.xlu0 %v2381, 112
      %v2449 = vpop.permute.xlu0 %2448
      %2450 = vrot.lane.b32.xlu0 %v2382, 112
      %v2451 = vpop.permute.xlu0 %2450
      %2452 = vrot.lane.b32.xlu0 %v2383, 112
      %v2453 = vpop.permute.xlu0 %2452
      %2454 = vrot.lane.b32.xlu0 %v2384, 112
      %v2455 = vpop.permute.xlu0 %2454
      %2456 = vrot.lane.b32.xlu0 %v2385, 112
      %v2457 = vpop.permute.xlu0 %2456
      %2458 = vrot.lane.b32.xlu0 %v2386, 112
      %v2459 = vpop.permute.xlu0 %2458
      %2460 = vrot.lane.b32.xlu0 %v2387, 112
      %v2461 = vpop.permute.xlu0 %2460
      %2462 = vrot.lane.b32.xlu0 %v2388, 112
      %v2463 = vpop.permute.xlu0 %2462
      %2464 = vrot.lane.b32.xlu0 %v2389, 112
      %v2465 = vpop.permute.xlu0 %2464
      %2466 = vrot.lane.b32.xlu0 %v2390, 112
      %v2467 = vpop.permute.xlu0 %2466
      %2468 = vrot.lane.b32.xlu0 %v2391, 112
      %v2469 = vpop.permute.xlu0 %2468
      %2470 = vrot.lane.b32.xlu0 %v2392, 112
      %v2471 = vpop.permute.xlu0 %2470
      %2472 = vrot.lane.b32.xlu0 %v2393, 112
      %v2473 = vpop.permute.xlu0 %2472
      %2474 = vrot.lane.b32.xlu0 %v2394, 112
      %v2475 = vpop.permute.xlu0 %2474
      %2476 = vrot.lane.b32.xlu0 %v2395, 112
      %v2477 = vpop.permute.xlu0 %2476
      %2478 = vrot.lane.b32.xlu0 %v2396, 112
      %v2479 = vpop.permute.xlu0 %2478
      %2480 = vrot.lane.b32.xlu0 %v2397, 112
      %v2481 = vpop.permute.xlu0 %2480
      %2482 = vrot.lane.b32.xlu0 %v2398, 112
      %v2483 = vpop.permute.xlu0 %2482
      %2484 = vrot.lane.b32.xlu0 %v2399, 112
      %v2485 = vpop.permute.xlu0 %2484
      %2486 = vrot.lane.b32.xlu0 %v2400, 112
      %v2487 = vpop.permute.xlu0 %2486
      %2488 = vrot.lane.b32.xlu0 %v2401, 112
      %v2489 = vpop.permute.xlu0 %2488
      %2490 = vrot.lane.b32.xlu0 %v2402, 112
      %v2491 = vpop.permute.xlu0 %2490
      %2492 = vrot.lane.b32.xlu0 %v2403, 112
      %v2493 = vpop.permute.xlu0 %2492
      %2494 = vrot.lane.b32.xlu0 %v2404, 112
      %v2495 = vpop.permute.xlu0 %2494
      %2496 = vrot.lane.b32.xlu0 %v2405, 112
      %v2497 = vpop.permute.xlu0 %2496
      %2498 = vrot.lane.b32.xlu0 %v2406, 112
      %v2499 = vpop.permute.xlu0 %2498
      %2500 = vrot.lane.b32.xlu0 %v2407, 112
      %v2501 = vpop.permute.xlu0 %2500
      %2502 = vrot.lane.b32.xlu0 %v2408, 112
      %v2503 = vpop.permute.xlu0 %2502
      %2504 = vrot.lane.b32.xlu0 %v2409, 112
      %v2505 = vpop.permute.xlu0 %2504
      %v2538 = vadd.f32 %v2250, %v2443
      %v2539 = vadd.f32 %v2251, %v2445
      %v2540 = vadd.f32 %v2252, %v2447
      %v2541 = vadd.f32 %v2253, %v2449
      %v2542 = vadd.f32 %v2254, %v2451
      %v2543 = vadd.f32 %v2255, %v2453
      %v2544 = vadd.f32 %v2256, %v2455
      %v2545 = vadd.f32 %v2257, %v2457
      %v2546 = vadd.f32 %v2258, %v2459
      %v2547 = vadd.f32 %v2259, %v2461
      %v2548 = vadd.f32 %v2260, %v2463
      %v2549 = vadd.f32 %v2261, %v2465
      %v2550 = vadd.f32 %v2262, %v2467
      %v2551 = vadd.f32 %v2263, %v2469
      %v2552 = vadd.f32 %v2264, %v2471
      %v2553 = vadd.f32 %v2265, %v2473
      %v2554 = vadd.f32 %v2266, %v2475
      %v2555 = vadd.f32 %v2267, %v2477
      %v2556 = vadd.f32 %v2268, %v2479
      %v2557 = vadd.f32 %v2269, %v2481
      %v2558 = vadd.f32 %v2270, %v2483
      %v2559 = vadd.f32 %v2271, %v2485
      %v2560 = vadd.f32 %v2272, %v2487
      %v2561 = vadd.f32 %v2273, %v2489
      %v2562 = vadd.f32 %v2274, %v2491
      %v2563 = vadd.f32 %v2275, %v2493
      %v2564 = vadd.f32 %v2276, %v2495
      %v2565 = vadd.f32 %v2277, %v2497
      %v2566 = vadd.f32 %v2278, %v2499
      %v2567 = vadd.f32 %v2279, %v2501
      %v2568 = vadd.f32 %v2280, %v2503
      %v2569 = vadd.f32 %v2281, %v2505
      %v2570 = vld [vmem:[%s219 + $0x10] sm:$0xf]
      %v2571 = vld [vmem:[%s219 + $0x14] sm:$0xf]
      %v2572 = vld [vmem:[%s219 + $0x18] sm:$0xf]
      %v2573 = vld [vmem:[%s219 + $0x1c] sm:$0xf]
      %v2574 = vld [vmem:[%s219 + $0x20] sm:$0xf]
      %v2575 = vld [vmem:[%s219 + $0x24] sm:$0xf]
      %v2576 = vld [vmem:[%s219 + $0x28] sm:$0xf]
      %v2577 = vld [vmem:[%s219 + $0x2c] sm:$0xf]
      %v2578 = vld [vmem:[%s219 + $0x30] sm:$0xf]
      %v2579 = vld [vmem:[%s219 + $0x34] sm:$0xf]
      %v2580 = vld [vmem:[%s219 + $0x38] sm:$0xf]
      %v2581 = vld [vmem:[%s219 + $0x3c] sm:$0xf]
      %v2582 = vld [vmem:[%s219 + $0x40] sm:$0xf]
      %v2583 = vld [vmem:[%s219 + $0x44] sm:$0xf]
      %v2584 = vld [vmem:[%s219 + $0x48] sm:$0xf]
      %v2585 = vld [vmem:[%s219 + $0x4c] sm:$0xf]
      %v2586 = vld [vmem:[%s219 + $0x50] sm:$0xf]
      %v2587 = vld [vmem:[%s219 + $0x54] sm:$0xf]
      %v2588 = vld [vmem:[%s219 + $0x58] sm:$0xf]
      %v2589 = vld [vmem:[%s219 + $0x5c] sm:$0xf]
      %v2590 = vld [vmem:[%s219 + $0x60] sm:$0xf]
      %v2591 = vld [vmem:[%s219 + $0x64] sm:$0xf]
      %v2592 = vld [vmem:[%s219 + $0x68] sm:$0xf]
      %v2593 = vld [vmem:[%s219 + $0x6c] sm:$0xf]
      %v2594 = vld [vmem:[%s219 + $0x70] sm:$0xf]
      %v2595 = vld [vmem:[%s219 + $0x74] sm:$0xf]
      %v2596 = vld [vmem:[%s219 + $0x78] sm:$0xf]
      %v2597 = vld [vmem:[%s219 + $0x7c] sm:$0xf]
      %v2598 = vld [vmem:[%s219 + $0x80] sm:$0xf]
      %v2599 = vld [vmem:[%s219 + $0x84] sm:$0xf]
      %v2600 = vld [vmem:[%s219 + $0x88] sm:$0xf]
      %v2601 = vld [vmem:[%s219 + $0x8c] sm:$0xf]
      %s2602 = scalar_lea.vmem %s1, 32
      %v2603 = vld [vmem:[%s2602] sm:$0xf]
      %v2604 = vld [vmem:[%s2602 + $0x4] sm:$0xf]
      %v2605 = vld [vmem:[%s2602 + $0x8] sm:$0xf]
      %v2606 = vld [vmem:[%s2602 + $0xc] sm:$0xf]
      %v2639 = vunpack.c.l.b16 %v2570
      %v2640 = vunpack.c.l.b16 %v2571
      %v2641 = vunpack.c.l.b16 %v2572
      %v2642 = vunpack.c.l.b16 %v2573
      %v2643 = vunpack.c.l.b16 %v2574
      %v2644 = vunpack.c.l.b16 %v2575
      %v2645 = vunpack.c.l.b16 %v2576
      %v2646 = vunpack.c.l.b16 %v2577
      %v2647 = vunpack.c.l.b16 %v2578
      %v2648 = vunpack.c.l.b16 %v2579
      %v2649 = vunpack.c.l.b16 %v2580
      %v2650 = vunpack.c.l.b16 %v2581
      %v2651 = vunpack.c.l.b16 %v2582
      %v2652 = vunpack.c.l.b16 %v2583
      %v2653 = vunpack.c.l.b16 %v2584
      %v2654 = vunpack.c.l.b16 %v2585
      %v2655 = vunpack.c.l.b16 %v2586
      %v2656 = vunpack.c.l.b16 %v2587
      %v2657 = vunpack.c.l.b16 %v2588
      %v2658 = vunpack.c.l.b16 %v2589
      %v2659 = vunpack.c.l.b16 %v2590
      %v2660 = vunpack.c.l.b16 %v2591
      %v2661 = vunpack.c.l.b16 %v2592
      %v2662 = vunpack.c.l.b16 %v2593
      %v2663 = vunpack.c.l.b16 %v2594
      %v2664 = vunpack.c.l.b16 %v2595
      %v2665 = vunpack.c.l.b16 %v2596
      %v2666 = vunpack.c.l.b16 %v2597
      %v2667 = vunpack.c.l.b16 %v2598
      %v2668 = vunpack.c.l.b16 %v2599
      %v2669 = vunpack.c.l.b16 %v2600
      %v2670 = vunpack.c.l.b16 %v2601
      %v2671 = vpack.c.b16 %v2640, %v2639
      %v2672 = vpack.c.b16 %v2642, %v2641
      %v2673 = vpack.c.b16 %v2644, %v2643
      %v2674 = vpack.c.b16 %v2646, %v2645
      %v2675 = vpack.c.b16 %v2648, %v2647
      %v2676 = vpack.c.b16 %v2650, %v2649
      %v2677 = vpack.c.b16 %v2652, %v2651
      %v2678 = vpack.c.b16 %v2654, %v2653
      %v2679 = vpack.c.b16 %v2656, %v2655
      %v2680 = vpack.c.b16 %v2658, %v2657
      %v2681 = vpack.c.b16 %v2660, %v2659
      %v2682 = vpack.c.b16 %v2662, %v2661
      %v2683 = vpack.c.b16 %v2664, %v2663
      %v2684 = vpack.c.b16 %v2666, %v2665
      %v2685 = vpack.c.b16 %v2668, %v2667
      %v2686 = vpack.c.b16 %v2670, %v2669
      %v2691 = vunpack.c.l.b16 %v2603
      %v2692 = vunpack.c.l.b16 %v2604
      %v2693 = vunpack.c.l.b16 %v2605
      %v2694 = vunpack.c.l.b16 %v2606
      %v2695 = vpack.c.b16 %v2692, %v2691
      %v2696 = vpack.c.b16 %v2694, %v2693
      %v2700 = vsel %vm740, %v2671, 0
      %v2703 = vsel %vm740, %v2672, 0
      %v2706 = vsel %vm740, %v2673, 0
      %v2709 = vsel %vm740, %v2674, 0
      %v2712 = vsel %vm740, %v2675, 0
      %v2715 = vsel %vm740, %v2676, 0
      %v2718 = vsel %vm740, %v2677, 0
      %v2721 = vsel %vm740, %v2678, 0
      %v2724 = vsel %vm740, %v2679, 0
      %v2727 = vsel %vm740, %v2680, 0
      %v2730 = vsel %vm740, %v2681, 0
      %v2733 = vsel %vm740, %v2682, 0
      %v2736 = vsel %vm740, %v2683, 0
      %v2739 = vsel %vm740, %v2684, 0
      %v2742 = vsel %vm740, %v2685, 0
      %v2745 = vsel %vm740, %v2686, 0
      %2747 = vmatprep.subr.bf16.mxu0 0
      %2748 = vmatpush1.bf16.msra.mxu0 %v2695
      %2749 = vmatprep.subr.bf16.mxu0 0
      %2750 = vmatpush1.bf16.msra.mxu0 %v2696
      %2751 = vmatprep.subr.bf16.mxu0 0
      %2752 = vmatpush1.bf16.msra.mxu0 0
      %2753 = vmatprep.subr.bf16.mxu0 0
      %2754 = vmatpush1.bf16.msra.mxu0 0
      %2755 = vmatprep.subr.bf16.mxu0 0
      %2756 = vmatpush1.bf16.msra.mxu0 0
      %2757 = vmatprep.subr.bf16.mxu0 0
      %2758 = vmatpush1.bf16.msra.mxu0 0
      %2759 = vmatprep.subr.bf16.mxu0 0
      %2760 = vmatpush1.bf16.msra.mxu0 0
      %2761 = vmatprep.subr.bf16.mxu0 0
      %2762 = vmatpush1.bf16.msra.mxu0 0
      %2763 = vmatprep.subr.bf16.mxu0 0
      %2764 = vmatpush1.bf16.msra.mxu0 0
      %2765 = vmatprep.subr.bf16.mxu0 0
      %2766 = vmatpush1.bf16.msra.mxu0 0
      %2767 = vmatprep.subr.bf16.mxu0 0
      %2768 = vmatpush1.bf16.msra.mxu0 0
      %2769 = vmatprep.subr.bf16.mxu0 0
      %2770 = vmatpush1.bf16.msra.mxu0 0
      %2771 = vmatprep.subr.bf16.mxu0 0
      %2772 = vmatpush1.bf16.msra.mxu0 0
      %2773 = vmatprep.subr.bf16.mxu0 0
      %2774 = vmatpush1.bf16.msra.mxu0 0
      %2775 = vmatprep.subr.bf16.mxu0 0
      %2776 = vmatpush1.bf16.msra.mxu0 0
      %2777 = vmatprep.subr.bf16.mxu0 0
      %2778 = vmatpush1.bf16.msra.mxu0 0
      %2779 = vmatprep.mubr.bf16.mxu0 0
      %2780 = vmatmul.mubr.bf16.gmra.mrb[0].mxu0 %v2700
      %v2781 = vpop.f32.mrb[0].mxu0
      %v2782 = vadd.f32 0.0, %v2781
      %v2783 = vpop.f32.mrb[0].mxu0
      %v2784 = vpop.f32.mrb[0].mxu0
      %v2785 = vadd.f32 0.0, %v2784
      %v2786 = vpop.f32.mrb[0].mxu0
      %2787 = vmatprep.mubr.bf16.mxu0 0
      %2788 = vmatmul.mubr.bf16.gmra.mrb[0].mxu0 %v2703
      %v2789 = vpop.f32.mrb[0].mxu0
      %v2790 = vadd.f32 0.0, %v2789
      %v2791 = vpop.f32.mrb[0].mxu0
      %v2792 = vpop.f32.mrb[0].mxu0
      %v2793 = vadd.f32 0.0, %v2792
      %v2794 = vpop.f32.mrb[0].mxu0
      %2795 = vmatprep.mubr.bf16.mxu0 0
      %2796 = vmatmul.mubr.bf16.gmra.mrb[0].mxu0 %v2706
      %v2797 = vpop.f32.mrb[0].mxu0
      %v2798 = vadd.f32 0.0, %v2797
      %v2799 = vpop.f32.mrb[0].mxu0
      %v2800 = vpop.f32.mrb[0].mxu0
      %v2801 = vadd.f32 0.0, %v2800
      %v2802 = vpop.f32.mrb[0].mxu0
      %2803 = vmatprep.mubr.bf16.mxu0 0
      %2804 = vmatmul.mubr.bf16.gmra.mrb[0].mxu0 %v2709
      %v2805 = vpop.f32.mrb[0].mxu0
      %v2806 = vadd.f32 0.0, %v2805
      %v2807 = vpop.f32.mrb[0].mxu0
      %v2808 = vpop.f32.mrb[0].mxu0
      %v2809 = vadd.f32 0.0, %v2808
      %v2810 = vpop.f32.mrb[0].mxu0
      %2811 = vmatprep.mubr.bf16.mxu0 0
      %2812 = vmatmul.mubr.bf16.gmra.mrb[0].mxu0 %v2712
      %v2813 = vpop.f32.mrb[0].mxu0
      %v2814 = vadd.f32 0.0, %v2813
      %v2815 = vpop.f32.mrb[0].mxu0
      %v2816 = vpop.f32.mrb[0].mxu0
      %v2817 = vadd.f32 0.0, %v2816
      %v2818 = vpop.f32.mrb[0].mxu0
      %2819 = vmatprep.mubr.bf16.mxu0 0
      %2820 = vmatmul.mubr.bf16.gmra.mrb[0].mxu0 %v2715
      %v2821 = vpop.f32.mrb[0].mxu0
      %v2822 = vadd.f32 0.0, %v2821
      %v2823 = vpop.f32.mrb[0].mxu0
      %v2824 = vpop.f32.mrb[0].mxu0
      %v2825 = vadd.f32 0.0, %v2824
      %v2826 = vpop.f32.mrb[0].mxu0
      %2827 = vmatprep.mubr.bf16.mxu0 0
      %2828 = vmatmul.mubr.bf16.gmra.mrb[0].mxu0 %v2718
      %v2829 = vpop.f32.mrb[0].mxu0
      %v2830 = vadd.f32 0.0, %v2829
      %v2831 = vpop.f32.mrb[0].mxu0
      %v2832 = vpop.f32.mrb[0].mxu0
      %v2833 = vadd.f32 0.0, %v2832
      %v2834 = vpop.f32.mrb[0].mxu0
      %2835 = vmatprep.mubr.bf16.mxu0 0
      %2836 = vmatmul.mubr.bf16.gmra.mrb[0].mxu0 %v2721
      %v2837 = vpop.f32.mrb[0].mxu0
      %v2838 = vadd.f32 0.0, %v2837
      %v2839 = vpop.f32.mrb[0].mxu0
      %v2840 = vpop.f32.mrb[0].mxu0
      %v2841 = vadd.f32 0.0, %v2840
      %v2842 = vpop.f32.mrb[0].mxu0
      %2843 = vmatprep.mubr.bf16.mxu0 0
      %2844 = vmatmul.mubr.bf16.gmra.mrb[0].mxu0 %v2724
      %v2845 = vpop.f32.mrb[0].mxu0
      %v2846 = vadd.f32 0.0, %v2845
      %v2847 = vpop.f32.mrb[0].mxu0
      %v2848 = vpop.f32.mrb[0].mxu0
      %v2849 = vadd.f32 0.0, %v2848
      %v2850 = vpop.f32.mrb[0].mxu0
      %2851 = vmatprep.mubr.bf16.mxu0 0
      %2852 = vmatmul.mubr.bf16.gmra.mrb[0].mxu0 %v2727
      %v2853 = vpop.f32.mrb[0].mxu0
      %v2854 = vadd.f32 0.0, %v2853
      %v2855 = vpop.f32.mrb[0].mxu0
      %v2856 = vpop.f32.mrb[0].mxu0
      %v2857 = vadd.f32 0.0, %v2856
      %v2858 = vpop.f32.mrb[0].mxu0
      %2859 = vmatprep.mubr.bf16.mxu0 0
      %2860 = vmatmul.mubr.bf16.gmra.mrb[0].mxu0 %v2730
      %v2861 = vpop.f32.mrb[0].mxu0
      %v2862 = vadd.f32 0.0, %v2861
      %v2863 = vpop.f32.mrb[0].mxu0
      %v2864 = vpop.f32.mrb[0].mxu0
      %v2865 = vadd.f32 0.0, %v2864
      %v2866 = vpop.f32.mrb[0].mxu0
      %2867 = vmatprep.mubr.bf16.mxu0 0
      %2868 = vmatmul.mubr.bf16.gmra.mrb[0].mxu0 %v2733
      %v2869 = vpop.f32.mrb[0].mxu0
      %v2870 = vadd.f32 0.0, %v2869
      %v2871 = vpop.f32.mrb[0].mxu0
      %v2872 = vpop.f32.mrb[0].mxu0
      %v2873 = vadd.f32 0.0, %v2872
      %v2874 = vpop.f32.mrb[0].mxu0
      %2875 = vmatprep.mubr.bf16.mxu0 0
      %2876 = vmatmul.mubr.bf16.gmra.mrb[0].mxu0 %v2736
      %v2877 = vpop.f32.mrb[0].mxu0
      %v2878 = vadd.f32 0.0, %v2877
      %v2879 = vpop.f32.mrb[0].mxu0
      %v2880 = vpop.f32.mrb[0].mxu0
      %v2881 = vadd.f32 0.0, %v2880
      %v2882 = vpop.f32.mrb[0].mxu0
      %2883 = vmatprep.mubr.bf16.mxu0 0
      %2884 = vmatmul.mubr.bf16.gmra.mrb[0].mxu0 %v2739
      %v2885 = vpop.f32.mrb[0].mxu0
      %v2886 = vadd.f32 0.0, %v2885
      %v2887 = vpop.f32.mrb[0].mxu0
      %v2888 = vpop.f32.mrb[0].mxu0
      %v2889 = vadd.f32 0.0, %v2888
      %v2890 = vpop.f32.mrb[0].mxu0
      %2891 = vmatprep.mubr.bf16.mxu0 0
      %2892 = vmatmul.mubr.bf16.gmra.mrb[0].mxu0 %v2742
      %v2893 = vpop.f32.mrb[0].mxu0
      %v2894 = vadd.f32 0.0, %v2893
      %v2895 = vpop.f32.mrb[0].mxu0
      %v2896 = vpop.f32.mrb[0].mxu0
      %v2897 = vadd.f32 0.0, %v2896
      %v2898 = vpop.f32.mrb[0].mxu0
      %2899 = vmatprep.mubr.bf16.mxu0 0
      %2900 = vmatmul.mubr.bf16.gmra.mrb[0].mxu0 %v2745
      %v2901 = vpop.f32.mrb[0].mxu0
      %v2902 = vadd.f32 0.0, %v2901
      %v2903 = vpop.f32.mrb[0].mxu0
      %v2904 = vpop.f32.mrb[0].mxu0
      %v2905 = vadd.f32 0.0, %v2904
      %v2906 = vpop.f32.mrb[0].mxu0
      %2907 = vdwg.mxu0
      %v2908 = vadd.f32 %v2538, %v2782
      %v2909 = vadd.f32 %v2539, %v2785
      %v2910 = vadd.f32 %v2540, %v2790
      %v2911 = vadd.f32 %v2541, %v2793
      %v2912 = vadd.f32 %v2542, %v2798
      %v2913 = vadd.f32 %v2543, %v2801
      %v2914 = vadd.f32 %v2544, %v2806
      %v2915 = vadd.f32 %v2545, %v2809
      %v2916 = vadd.f32 %v2546, %v2814
      %v2917 = vadd.f32 %v2547, %v2817
      %v2918 = vadd.f32 %v2548, %v2822
      %v2919 = vadd.f32 %v2549, %v2825
      %v2920 = vadd.f32 %v2550, %v2830
      %v2921 = vadd.f32 %v2551, %v2833
      %v2922 = vadd.f32 %v2552, %v2838
      %v2923 = vadd.f32 %v2553, %v2841
      %v2924 = vadd.f32 %v2554, %v2846
      %v2925 = vadd.f32 %v2555, %v2849
      %v2926 = vadd.f32 %v2556, %v2854
      %v2927 = vadd.f32 %v2557, %v2857
      %v2928 = vadd.f32 %v2558, %v2862
      %v2929 = vadd.f32 %v2559, %v2865
      %v2930 = vadd.f32 %v2560, %v2870
      %v2931 = vadd.f32 %v2561, %v2873
      %v2932 = vadd.f32 %v2562, %v2878
      %v2933 = vadd.f32 %v2563, %v2881
      %v2934 = vadd.f32 %v2564, %v2886
      %v2935 = vadd.f32 %v2565, %v2889
      %v2936 = vadd.f32 %v2566, %v2894
      %v2937 = vadd.f32 %v2567, %v2897
      %v2938 = vadd.f32 %v2568, %v2902
      %v2939 = vadd.f32 %v2569, %v2905
      %v2972 = vrot.slane %v2782, 7
      %v2973 = vrot.slane %v2785, 7
      %v2974 = vsel %vm1014, %v2972, %v2973
      %v2975 = vrot.slane %v2790, 7
      %v2976 = vsel %vm1014, %v2973, %v2975
      %v2977 = vrot.slane %v2793, 7
      %v2978 = vsel %vm1014, %v2975, %v2977
      %v2979 = vrot.slane %v2798, 7
      %v2980 = vsel %vm1014, %v2977, %v2979
      %v2981 = vrot.slane %v2801, 7
      %v2982 = vsel %vm1014, %v2979, %v2981
      %v2983 = vrot.slane %v2806, 7
      %v2984 = vsel %vm1014, %v2981, %v2983
      %v2985 = vrot.slane %v2809, 7
      %v2986 = vsel %vm1014, %v2983, %v2985
      %v2987 = vrot.slane %v2814, 7
      %v2988 = vsel %vm1014, %v2985, %v2987
      %v2989 = vrot.slane %v2817, 7
      %v2990 = vsel %vm1014, %v2987, %v2989
      %v2991 = vrot.slane %v2822, 7
      %v2992 = vsel %vm1014, %v2989, %v2991
      %v2993 = vrot.slane %v2825, 7
      %v2994 = vsel %vm1014, %v2991, %v2993
      %v2995 = vrot.slane %v2830, 7
      %v2996 = vsel %vm1014, %v2993, %v2995
      %v2997 = vrot.slane %v2833, 7
      %v2998 = vsel %vm1014, %v2995, %v2997
      %v2999 = vrot.slane %v2838, 7
      %v3000 = vsel %vm1014, %v2997, %v2999
      %v3001 = vrot.slane %v2841, 7
      %v3002 = vsel %vm1014, %v2999, %v3001
      %v3003 = vrot.slane %v2846, 7
      %v3004 = vsel %vm1014, %v3001, %v3003
      %v3005 = vrot.slane %v2849, 7
      %v3006 = vsel %vm1014, %v3003, %v3005
      %v3007 = vrot.slane %v2854, 7
      %v3008 = vsel %vm1014, %v3005, %v3007
      %v3009 = vrot.slane %v2857, 7
      %v3010 = vsel %vm1014, %v3007, %v3009
      %v3011 = vrot.slane %v2862, 7
      %v3012 = vsel %vm1014, %v3009, %v3011
      %v3013 = vrot.slane %v2865, 7
      %v3014 = vsel %vm1014, %v3011, %v3013
      %v3015 = vrot.slane %v2870, 7
      %v3016 = vsel %vm1014, %v3013, %v3015
      %v3017 = vrot.slane %v2873, 7
      %v3018 = vsel %vm1014, %v3015, %v3017
      %v3019 = vrot.slane %v2878, 7
      %v3020 = vsel %vm1014, %v3017, %v3019
      %v3021 = vrot.slane %v2881, 7
      %v3022 = vsel %vm1014, %v3019, %v3021
      %v3023 = vrot.slane %v2886, 7
      %v3024 = vsel %vm1014, %v3021, %v3023
      %v3025 = vrot.slane %v2889, 7
      %v3026 = vsel %vm1014, %v3023, %v3025
      %v3027 = vrot.slane %v2894, 7
      %v3028 = vsel %vm1014, %v3025, %v3027
      %v3029 = vrot.slane %v2897, 7
      %v3030 = vsel %vm1014, %v3027, %v3029
      %v3031 = vrot.slane %v2902, 7
      %v3032 = vsel %vm1014, %v3029, %v3031
      %v3033 = vrot.slane %v2905, 7
      %v3034 = vsel %vm1014, %v3031, %v3033
      %v3067 = vsel %vm1014, 0.0, %v2972
      %v3068 = vmul.f32 %v484, %v3067
      %v3069 = vmul.f32 %v485, %v2974
      %v3070 = vmul.f32 %v486, %v2976
      %v3071 = vmul.f32 %v487, %v2978
      %v3072 = vmul.f32 %v488, %v2980
      %v3073 = vmul.f32 %v489, %v2982
      %v3074 = vmul.f32 %v490, %v2984
      %v3075 = vmul.f32 %v491, %v2986
      %v3076 = vmul.f32 %v492, %v2988
      %v3077 = vmul.f32 %v493, %v2990
      %v3078 = vmul.f32 %v494, %v2992
      %v3079 = vmul.f32 %v495, %v2994
      %v3080 = vmul.f32 %v496, %v2996
      %v3081 = vmul.f32 %v497, %v2998
      %v3082 = vmul.f32 %v498, %v3000
      %v3083 = vmul.f32 %v499, %v3002
      %v3084 = vmul.f32 %v500, %v3004
      %v3085 = vmul.f32 %v501, %v3006
      %v3086 = vmul.f32 %v502, %v3008
      %v3087 = vmul.f32 %v503, %v3010
      %v3088 = vmul.f32 %v504, %v3012
      %v3089 = vmul.f32 %v505, %v3014
      %v3090 = vmul.f32 %v506, %v3016
      %v3091 = vmul.f32 %v507, %v3018
      %v3092 = vmul.f32 %v508, %v3020
      %v3093 = vmul.f32 %v509, %v3022
      %v3094 = vmul.f32 %v510, %v3024
      %v3095 = vmul.f32 %v511, %v3026
      %v3096 = vmul.f32 %v512, %v3028
      %v3097 = vmul.f32 %v513, %v3030
      %v3098 = vmul.f32 %v514, %v3032
      %v3099 = vmul.f32 %v515, %v3034
      %3132 = vrot.lane.b32.xlu0 %v3068, 16
      %v3133 = vpop.permute.xlu0 %3132
      %3134 = vrot.lane.b32.xlu0 %v3069, 16
      %v3135 = vpop.permute.xlu0 %3134
      %3136 = vrot.lane.b32.xlu0 %v3070, 16
      %v3137 = vpop.permute.xlu0 %3136
      %3138 = vrot.lane.b32.xlu0 %v3071, 16
      %v3139 = vpop.permute.xlu0 %3138
      %3140 = vrot.lane.b32.xlu0 %v3072, 16
      %v3141 = vpop.permute.xlu0 %3140
      %3142 = vrot.lane.b32.xlu0 %v3073, 16
      %v3143 = vpop.permute.xlu0 %3142
      %3144 = vrot.lane.b32.xlu0 %v3074, 16
      %v3145 = vpop.permute.xlu0 %3144
      %3146 = vrot.lane.b32.xlu0 %v3075, 16
      %v3147 = vpop.permute.xlu0 %3146
      %3148 = vrot.lane.b32.xlu0 %v3076, 16
      %v3149 = vpop.permute.xlu0 %3148
      %3150 = vrot.lane.b32.xlu0 %v3077, 16
      %v3151 = vpop.permute.xlu0 %3150
      %3152 = vrot.lane.b32.xlu0 %v3078, 16
      %v3153 = vpop.permute.xlu0 %3152
      %3154 = vrot.lane.b32.xlu0 %v3079, 16
      %v3155 = vpop.permute.xlu0 %3154
      %3156 = vrot.lane.b32.xlu0 %v3080, 16
      %v3157 = vpop.permute.xlu0 %3156
      %3158 = vrot.lane.b32.xlu0 %v3081, 16
      %v3159 = vpop.permute.xlu0 %3158
      %3160 = vrot.lane.b32.xlu0 %v3082, 16
      %v3161 = vpop.permute.xlu0 %3160
      %3162 = vrot.lane.b32.xlu0 %v3083, 16
      %v3163 = vpop.permute.xlu0 %3162
      %3164 = vrot.lane.b32.xlu0 %v3084, 16
      %v3165 = vpop.permute.xlu0 %3164
      %3166 = vrot.lane.b32.xlu0 %v3085, 16
      %v3167 = vpop.permute.xlu0 %3166
      %3168 = vrot.lane.b32.xlu0 %v3086, 16
      %v3169 = vpop.permute.xlu0 %3168
      %3170 = vrot.lane.b32.xlu0 %v3087, 16
      %v3171 = vpop.permute.xlu0 %3170
      %3172 = vrot.lane.b32.xlu0 %v3088, 16
      %v3173 = vpop.permute.xlu0 %3172
      %3174 = vrot.lane.b32.xlu0 %v3089, 16
      %v3175 = vpop.permute.xlu0 %3174
      %3176 = vrot.lane.b32.xlu0 %v3090, 16
      %v3177 = vpop.permute.xlu0 %3176
      %3178 = vrot.lane.b32.xlu0 %v3091, 16
      %v3179 = vpop.permute.xlu0 %3178
      %3180 = vrot.lane.b32.xlu0 %v3092, 16
      %v3181 = vpop.permute.xlu0 %3180
      %3182 = vrot.lane.b32.xlu0 %v3093, 16
      %v3183 = vpop.permute.xlu0 %3182
      %3184 = vrot.lane.b32.xlu0 %v3094, 16
      %v3185 = vpop.permute.xlu0 %3184
      %3186 = vrot.lane.b32.xlu0 %v3095, 16
      %v3187 = vpop.permute.xlu0 %3186
      %3188 = vrot.lane.b32.xlu0 %v3096, 16
      %v3189 = vpop.permute.xlu0 %3188
      %3190 = vrot.lane.b32.xlu0 %v3097, 16
      %v3191 = vpop.permute.xlu0 %3190
      %3192 = vrot.lane.b32.xlu0 %v3098, 16
      %v3193 = vpop.permute.xlu0 %3192
      %3194 = vrot.lane.b32.xlu0 %v3099, 16
      %v3195 = vpop.permute.xlu0 %3194
      %v3228 = vadd.f32 %v2908, %v3133
      %v3229 = vadd.f32 %v2909, %v3135
      %v3230 = vadd.f32 %v2910, %v3137
      %v3231 = vadd.f32 %v2911, %v3139
      %v3232 = vadd.f32 %v2912, %v3141
      %v3233 = vadd.f32 %v2913, %v3143
      %v3234 = vadd.f32 %v2914, %v3145
      %v3235 = vadd.f32 %v2915, %v3147
      %v3236 = vadd.f32 %v2916, %v3149
      %v3237 = vadd.f32 %v2917, %v3151
      %v3238 = vadd.f32 %v2918, %v3153
      %v3239 = vadd.f32 %v2919, %v3155
      %v3240 = vadd.f32 %v2920, %v3157
      %v3241 = vadd.f32 %v2921, %v3159
      %v3242 = vadd.f32 %v2922, %v3161
      %v3243 = vadd.f32 %v2923, %v3163
      %v3244 = vadd.f32 %v2924, %v3165
      %v3245 = vadd.f32 %v2925, %v3167
      %v3246 = vadd.f32 %v2926, %v3169
      %v3247 = vadd.f32 %v2927, %v3171
      %v3248 = vadd.f32 %v2928, %v3173
      %v3249 = vadd.f32 %v2929, %v3175
      %v3250 = vadd.f32 %v2930, %v3177
      %v3251 = vadd.f32 %v2931, %v3179
      %v3252 = vadd.f32 %v2932, %v3181
      %v3253 = vadd.f32 %v2933, %v3183
      %v3254 = vadd.f32 %v2934, %v3185
      %v3255 = vadd.f32 %v2935, %v3187
      %v3256 = vadd.f32 %v2936, %v3189
      %v3257 = vadd.f32 %v2937, %v3191
      %v3258 = vadd.f32 %v2938, %v3193
      %v3259 = vadd.f32 %v2939, %v3195
      %v3260 = vrot.slane %v2782, 1
      %v3261 = vrot.slane %v2785, 1
      %v3262 = vsel %vm1303, %v3260, %v3261
      %v3263 = vrot.slane %v2790, 1
      %v3264 = vsel %vm1303, %v3261, %v3263
      %v3265 = vrot.slane %v2793, 1
      %v3266 = vsel %vm1303, %v3263, %v3265
      %v3267 = vrot.slane %v2798, 1
      %v3268 = vsel %vm1303, %v3265, %v3267
      %v3269 = vrot.slane %v2801, 1
      %v3270 = vsel %vm1303, %v3267, %v3269
      %v3271 = vrot.slane %v2806, 1
      %v3272 = vsel %vm1303, %v3269, %v3271
      %v3273 = vrot.slane %v2809, 1
      %v3274 = vsel %vm1303, %v3271, %v3273
      %v3275 = vrot.slane %v2814, 1
      %v3276 = vsel %vm1303, %v3273, %v3275
      %v3277 = vrot.slane %v2817, 1
      %v3278 = vsel %vm1303, %v3275, %v3277
      %v3279 = vrot.slane %v2822, 1
      %v3280 = vsel %vm1303, %v3277, %v3279
      %v3281 = vrot.slane %v2825, 1
      %v3282 = vsel %vm1303, %v3279, %v3281
      %v3283 = vrot.slane %v2830, 1
      %v3284 = vsel %vm1303, %v3281, %v3283
      %v3285 = vrot.slane %v2833, 1
      %v3286 = vsel %vm1303, %v3283, %v3285
      %v3287 = vrot.slane %v2838, 1
      %v3288 = vsel %vm1303, %v3285, %v3287
      %v3289 = vrot.slane %v2841, 1
      %v3290 = vsel %vm1303, %v3287, %v3289
      %v3291 = vrot.slane %v2846, 1
      %v3292 = vsel %vm1303, %v3289, %v3291
      %v3293 = vrot.slane %v2849, 1
      %v3294 = vsel %vm1303, %v3291, %v3293
      %v3295 = vrot.slane %v2854, 1
      %v3296 = vsel %vm1303, %v3293, %v3295
      %v3297 = vrot.slane %v2857, 1
      %v3298 = vsel %vm1303, %v3295, %v3297
      %v3299 = vrot.slane %v2862, 1
      %v3300 = vsel %vm1303, %v3297, %v3299
      %v3301 = vrot.slane %v2865, 1
      %v3302 = vsel %vm1303, %v3299, %v3301
      %v3303 = vrot.slane %v2870, 1
      %v3304 = vsel %vm1303, %v3301, %v3303
      %v3305 = vrot.slane %v2873, 1
      %v3306 = vsel %vm1303, %v3303, %v3305
      %v3307 = vrot.slane %v2878, 1
      %v3308 = vsel %vm1303, %v3305, %v3307
      %v3309 = vrot.slane %v2881, 1
      %v3310 = vsel %vm1303, %v3307, %v3309
      %v3311 = vrot.slane %v2886, 1
      %v3312 = vsel %vm1303, %v3309, %v3311
      %v3313 = vrot.slane %v2889, 1
      %v3314 = vsel %vm1303, %v3311, %v3313
      %v3315 = vrot.slane %v2894, 1
      %v3316 = vsel %vm1303, %v3313, %v3315
      %v3317 = vrot.slane %v2897, 1
      %v3318 = vsel %vm1303, %v3315, %v3317
      %v3319 = vrot.slane %v2902, 1
      %v3320 = vsel %vm1303, %v3317, %v3319
      %v3321 = vrot.slane %v2905, 1
      %v3322 = vsel %vm1303, %v3319, %v3321
      %v3355 = vsel %vm1303, %v3321, 0.0
      %v3356 = vmul.f32 %v580, %v3262
      %v3357 = vmul.f32 %v581, %v3264
      %v3358 = vmul.f32 %v582, %v3266
      %v3359 = vmul.f32 %v583, %v3268
      %v3360 = vmul.f32 %v584, %v3270
      %v3361 = vmul.f32 %v585, %v3272
      %v3362 = vmul.f32 %v586, %v3274
      %v3363 = vmul.f32 %v587, %v3276
      %v3364 = vmul.f32 %v588, %v3278
      %v3365 = vmul.f32 %v589, %v3280
      %v3366 = vmul.f32 %v590, %v3282
      %v3367 = vmul.f32 %v591, %v3284
      %v3368 = vmul.f32 %v592, %v3286
      %v3369 = vmul.f32 %v593, %v3288
      %v3370 = vmul.f32 %v594, %v3290
      %v3371 = vmul.f32 %v595, %v3292
      %v3372 = vmul.f32 %v596, %v3294
      %v3373 = vmul.f32 %v597, %v3296
      %v3374 = vmul.f32 %v598, %v3298
      %v3375 = vmul.f32 %v599, %v3300
      %v3376 = vmul.f32 %v600, %v3302
      %v3377 = vmul.f32 %v601, %v3304
      %v3378 = vmul.f32 %v602, %v3306
      %v3379 = vmul.f32 %v603, %v3308
      %v3380 = vmul.f32 %v604, %v3310
      %v3381 = vmul.f32 %v605, %v3312
      %v3382 = vmul.f32 %v606, %v3314
      %v3383 = vmul.f32 %v607, %v3316
      %v3384 = vmul.f32 %v608, %v3318
      %v3385 = vmul.f32 %v609, %v3320
      %v3386 = vmul.f32 %v610, %v3322
      %v3387 = vmul.f32 %v611, %v3355
      %3420 = vrot.lane.b32.xlu0 %v3356, 112
      %v3421 = vpop.permute.xlu0 %3420
      %3422 = vrot.lane.b32.xlu0 %v3357, 112
      %v3423 = vpop.permute.xlu0 %3422
      %3424 = vrot.lane.b32.xlu0 %v3358, 112
      %v3425 = vpop.permute.xlu0 %3424
      %3426 = vrot.lane.b32.xlu0 %v3359, 112
      %v3427 = vpop.permute.xlu0 %3426
      %3428 = vrot.lane.b32.xlu0 %v3360, 112
      %v3429 = vpop.permute.xlu0 %3428
      %3430 = vrot.lane.b32.xlu0 %v3361, 112
      %v3431 = vpop.permute.xlu0 %3430
      %3432 = vrot.lane.b32.xlu0 %v3362, 112
      %v3433 = vpop.permute.xlu0 %3432
      %3434 = vrot.lane.b32.xlu0 %v3363, 112
      %v3435 = vpop.permute.xlu0 %3434
      %3436 = vrot.lane.b32.xlu0 %v3364, 112
      %v3437 = vpop.permute.xlu0 %3436
      %3438 = vrot.lane.b32.xlu0 %v3365, 112
      %v3439 = vpop.permute.xlu0 %3438
      %3440 = vrot.lane.b32.xlu0 %v3366, 112
      %v3441 = vpop.permute.xlu0 %3440
      %3442 = vrot.lane.b32.xlu0 %v3367, 112
      %v3443 = vpop.permute.xlu0 %3442
      %3444 = vrot.lane.b32.xlu0 %v3368, 112
      %v3445 = vpop.permute.xlu0 %3444
      %3446 = vrot.lane.b32.xlu0 %v3369, 112
      %v3447 = vpop.permute.xlu0 %3446
      %3448 = vrot.lane.b32.xlu0 %v3370, 112
      %v3449 = vpop.permute.xlu0 %3448
      %3450 = vrot.lane.b32.xlu0 %v3371, 112
      %v3451 = vpop.permute.xlu0 %3450
      %3452 = vrot.lane.b32.xlu0 %v3372, 112
      %v3453 = vpop.permute.xlu0 %3452
      %3454 = vrot.lane.b32.xlu0 %v3373, 112
      %v3455 = vpop.permute.xlu0 %3454
      %3456 = vrot.lane.b32.xlu0 %v3374, 112
      %v3457 = vpop.permute.xlu0 %3456
      %3458 = vrot.lane.b32.xlu0 %v3375, 112
      %v3459 = vpop.permute.xlu0 %3458
      %3460 = vrot.lane.b32.xlu0 %v3376, 112
      %v3461 = vpop.permute.xlu0 %3460
      %3462 = vrot.lane.b32.xlu0 %v3377, 112
      %v3463 = vpop.permute.xlu0 %3462
      %3464 = vrot.lane.b32.xlu0 %v3378, 112
      %v3465 = vpop.permute.xlu0 %3464
      %3466 = vrot.lane.b32.xlu0 %v3379, 112
      %v3467 = vpop.permute.xlu0 %3466
      %3468 = vrot.lane.b32.xlu0 %v3380, 112
      %v3469 = vpop.permute.xlu0 %3468
      %3470 = vrot.lane.b32.xlu0 %v3381, 112
      %v3471 = vpop.permute.xlu0 %3470
      %3472 = vrot.lane.b32.xlu0 %v3382, 112
      %v3473 = vpop.permute.xlu0 %3472
      %3474 = vrot.lane.b32.xlu0 %v3383, 112
      %v3475 = vpop.permute.xlu0 %3474
      %3476 = vrot.lane.b32.xlu0 %v3384, 112
      %v3477 = vpop.permute.xlu0 %3476
      %3478 = vrot.lane.b32.xlu0 %v3385, 112
      %v3479 = vpop.permute.xlu0 %3478
      %3480 = vrot.lane.b32.xlu0 %v3386, 112
      %v3481 = vpop.permute.xlu0 %3480
      %3482 = vrot.lane.b32.xlu0 %v3387, 112
      %v3483 = vpop.permute.xlu0 %3482
      %v3516 = vadd.f32 %v3228, %v3421
      %v3517 = vadd.f32 %v3229, %v3423
      %v3518 = vadd.f32 %v3230, %v3425
      %v3519 = vadd.f32 %v3231, %v3427
      %v3520 = vadd.f32 %v3232, %v3429
      %v3521 = vadd.f32 %v3233, %v3431
      %v3522 = vadd.f32 %v3234, %v3433
      %v3523 = vadd.f32 %v3235, %v3435
      %v3524 = vadd.f32 %v3236, %v3437
      %v3525 = vadd.f32 %v3237, %v3439
      %v3526 = vadd.f32 %v3238, %v3441
      %v3527 = vadd.f32 %v3239, %v3443
      %v3528 = vadd.f32 %v3240, %v3445
      %v3529 = vadd.f32 %v3241, %v3447
      %v3530 = vadd.f32 %v3242, %v3449
      %v3531 = vadd.f32 %v3243, %v3451
      %v3532 = vadd.f32 %v3244, %v3453
      %v3533 = vadd.f32 %v3245, %v3455
      %v3534 = vadd.f32 %v3246, %v3457
      %v3535 = vadd.f32 %v3247, %v3459
      %v3536 = vadd.f32 %v3248, %v3461
      %v3537 = vadd.f32 %v3249, %v3463
      %v3538 = vadd.f32 %v3250, %v3465
      %v3539 = vadd.f32 %v3251, %v3467
      %v3540 = vadd.f32 %v3252, %v3469
      %v3541 = vadd.f32 %v3253, %v3471
      %v3542 = vadd.f32 %v3254, %v3473
      %v3543 = vadd.f32 %v3255, %v3475
      %v3544 = vadd.f32 %v3256, %v3477
      %v3545 = vadd.f32 %v3257, %v3479
      %v3546 = vadd.f32 %v3258, %v3481
      %v3547 = vadd.f32 %v3259, %v3483
      %vm3548 = vcmask 261248
      %v3549 = vsel %vm3548, %v3516, 0.0
      %v3550 = vsel %vm3548, %v3517, 0.0
      %v3551 = vadd.f32 %v3549, %v3550
      %v3552 = vsel %vm3548, %v3518, 0.0
      %v3553 = vadd.f32 %v3551, %v3552
      %v3554 = vsel %vm3548, %v3519, 0.0
      %v3555 = vadd.f32 %v3553, %v3554
      %v3556 = vsel %vm3548, %v3520, 0.0
      %v3557 = vadd.f32 %v3555, %v3556
      %v3558 = vsel %vm3548, %v3521, 0.0
      %v3559 = vadd.f32 %v3557, %v3558
      %v3560 = vsel %vm3548, %v3522, 0.0
      %v3561 = vadd.f32 %v3559, %v3560
      %v3562 = vsel %vm3548, %v3523, 0.0
      %v3563 = vadd.f32 %v3561, %v3562
      %v3564 = vsel %vm3548, %v3524, 0.0
      %v3565 = vadd.f32 %v3563, %v3564
      %v3566 = vsel %vm3548, %v3525, 0.0
      %v3567 = vadd.f32 %v3565, %v3566
      %v3568 = vsel %vm3548, %v3526, 0.0
      %v3569 = vadd.f32 %v3567, %v3568
      %v3570 = vsel %vm3548, %v3527, 0.0
      %v3571 = vadd.f32 %v3569, %v3570
      %v3572 = vsel %vm3548, %v3528, 0.0
      %v3573 = vadd.f32 %v3571, %v3572
      %v3574 = vsel %vm3548, %v3529, 0.0
      %v3575 = vadd.f32 %v3573, %v3574
      %v3576 = vsel %vm3548, %v3530, 0.0
      %v3577 = vadd.f32 %v3575, %v3576
      %v3578 = vsel %vm3548, %v3531, 0.0
      %v3579 = vadd.f32 %v3577, %v3578
      %v3580 = vsel %vm3548, %v3532, 0.0
      %v3581 = vadd.f32 %v3579, %v3580
      %v3582 = vsel %vm3548, %v3533, 0.0
      %v3583 = vadd.f32 %v3581, %v3582
      %v3584 = vsel %vm3548, %v3534, 0.0
      %v3585 = vadd.f32 %v3583, %v3584
      %v3586 = vsel %vm3548, %v3535, 0.0
      %v3587 = vadd.f32 %v3585, %v3586
      %v3588 = vsel %vm3548, %v3536, 0.0
      %v3589 = vadd.f32 %v3587, %v3588
      %v3590 = vsel %vm3548, %v3537, 0.0
      %v3591 = vadd.f32 %v3589, %v3590
      %v3592 = vsel %vm3548, %v3538, 0.0
      %v3593 = vadd.f32 %v3591, %v3592
      %v3594 = vsel %vm3548, %v3539, 0.0
      %v3595 = vadd.f32 %v3593, %v3594
      %v3596 = vsel %vm3548, %v3540, 0.0
      %v3597 = vadd.f32 %v3595, %v3596
      %v3598 = vsel %vm3548, %v3541, 0.0
      %v3599 = vadd.f32 %v3597, %v3598
      %v3600 = vsel %vm3548, %v3542, 0.0
      %v3601 = vadd.f32 %v3599, %v3600
      %v3602 = vsel %vm3548, %v3543, 0.0
      %v3603 = vadd.f32 %v3601, %v3602
      %v3604 = vsel %vm3548, %v3544, 0.0
      %v3605 = vadd.f32 %v3603, %v3604
      %v3606 = vsel %vm3548, %v3545, 0.0
      %v3607 = vadd.f32 %v3605, %v3606
      %v3608 = vsel %vm3548, %v3546, 0.0
      %v3609 = vadd.f32 %v3607, %v3608
      %v3610 = vsel %vm3548, %v3547, 0.0
      %v3611 = vadd.f32 %v3609, %v3610
      %v3612 = vrot.slane %v3611, 4
      %v3613 = vadd.f32 %v3611, %v3612
      %v3614 = vrot.slane %v3613, 2
      %v3615 = vadd.f32 %v3613, %v3614
      %v3616 = vrot.slane %v3615, 1
      %v3617 = vadd.f32 %v3615, %v3616
      %v3618 = vmul.f32 %v3516, %v3516
      %v3619 = vmul.f32 %v3517, %v3517
      %v3620 = vmul.f32 %v3518, %v3518
      %v3621 = vmul.f32 %v3519, %v3519
      %v3622 = vmul.f32 %v3520, %v3520
      %v3623 = vmul.f32 %v3521, %v3521
      %v3624 = vmul.f32 %v3522, %v3522
      %v3625 = vmul.f32 %v3523, %v3523
      %v3626 = vmul.f32 %v3524, %v3524
      %v3627 = vmul.f32 %v3525, %v3525
      %v3628 = vmul.f32 %v3526, %v3526
      %v3629 = vmul.f32 %v3527, %v3527
      %v3630 = vmul.f32 %v3528, %v3528
      %v3631 = vmul.f32 %v3529, %v3529
      %v3632 = vmul.f32 %v3530, %v3530
      %v3633 = vmul.f32 %v3531, %v3531
      %v3634 = vmul.f32 %v3532, %v3532
      %v3635 = vmul.f32 %v3533, %v3533
      %v3636 = vmul.f32 %v3534, %v3534
      %v3637 = vmul.f32 %v3535, %v3535
      %v3638 = vmul.f32 %v3536, %v3536
      %v3639 = vmul.f32 %v3537, %v3537
      %v3640 = vmul.f32 %v3538, %v3538
      %v3641 = vmul.f32 %v3539, %v3539
      %v3642 = vmul.f32 %v3540, %v3540
      %v3643 = vmul.f32 %v3541, %v3541
      %v3644 = vmul.f32 %v3542, %v3542
      %v3645 = vmul.f32 %v3543, %v3543
      %v3646 = vmul.f32 %v3544, %v3544
      %v3647 = vmul.f32 %v3545, %v3545
      %v3648 = vmul.f32 %v3546, %v3546
      %v3649 = vmul.f32 %v3547, %v3547
      %v3650 = vsel %vm3548, %v3618, 0.0
      %v3651 = vsel %vm3548, %v3619, 0.0
      %v3652 = vadd.f32 %v3650, %v3651
      %v3653 = vsel %vm3548, %v3620, 0.0
      %v3654 = vadd.f32 %v3652, %v3653
      %v3655 = vsel %vm3548, %v3621, 0.0
      %v3656 = vadd.f32 %v3654, %v3655
      %v3657 = vsel %vm3548, %v3622, 0.0
      %v3658 = vadd.f32 %v3656, %v3657
      %v3659 = vsel %vm3548, %v3623, 0.0
      %v3660 = vadd.f32 %v3658, %v3659
      %v3661 = vsel %vm3548, %v3624, 0.0
      %v3662 = vadd.f32 %v3660, %v3661
      %v3663 = vsel %vm3548, %v3625, 0.0
      %v3664 = vadd.f32 %v3662, %v3663
      %v3665 = vsel %vm3548, %v3626, 0.0
      %v3666 = vadd.f32 %v3664, %v3665
      %v3667 = vsel %vm3548, %v3627, 0.0
      %v3668 = vadd.f32 %v3666, %v3667
      %v3669 = vsel %vm3548, %v3628, 0.0
      %v3670 = vadd.f32 %v3668, %v3669
      %v3671 = vsel %vm3548, %v3629, 0.0
      %v3672 = vadd.f32 %v3670, %v3671
      %v3673 = vsel %vm3548, %v3630, 0.0
      %v3674 = vadd.f32 %v3672, %v3673
      %v3675 = vsel %vm3548, %v3631, 0.0
      %v3676 = vadd.f32 %v3674, %v3675
      %v3677 = vsel %vm3548, %v3632, 0.0
      %v3678 = vadd.f32 %v3676, %v3677
      %v3679 = vsel %vm3548, %v3633, 0.0
      %v3680 = vadd.f32 %v3678, %v3679
      %v3681 = vsel %vm3548, %v3634, 0.0
      %v3682 = vadd.f32 %v3680, %v3681
      %v3683 = vsel %vm3548, %v3635, 0.0
      %v3684 = vadd.f32 %v3682, %v3683
      %v3685 = vsel %vm3548, %v3636, 0.0
      %v3686 = vadd.f32 %v3684, %v3685
      %v3687 = vsel %vm3548, %v3637, 0.0
      %v3688 = vadd.f32 %v3686, %v3687
      %v3689 = vsel %vm3548, %v3638, 0.0
      %v3690 = vadd.f32 %v3688, %v3689
      %v3691 = vsel %vm3548, %v3639, 0.0
      %v3692 = vadd.f32 %v3690, %v3691
      %v3693 = vsel %vm3548, %v3640, 0.0
      %v3694 = vadd.f32 %v3692, %v3693
      %v3695 = vsel %vm3548, %v3641, 0.0
      %v3696 = vadd.f32 %v3694, %v3695
      %v3697 = vsel %vm3548, %v3642, 0.0
      %v3698 = vadd.f32 %v3696, %v3697
      %v3699 = vsel %vm3548, %v3643, 0.0
      %v3700 = vadd.f32 %v3698, %v3699
      %v3701 = vsel %vm3548, %v3644, 0.0
      %v3702 = vadd.f32 %v3700, %v3701
      %v3703 = vsel %vm3548, %v3645, 0.0
      %v3704 = vadd.f32 %v3702, %v3703
      %v3705 = vsel %vm3548, %v3646, 0.0
      %v3706 = vadd.f32 %v3704, %v3705
      %v3707 = vsel %vm3548, %v3647, 0.0
      %v3708 = vadd.f32 %v3706, %v3707
      %v3709 = vsel %vm3548, %v3648, 0.0
      %v3710 = vadd.f32 %v3708, %v3709
      %v3711 = vsel %vm3548, %v3649, 0.0
      %v3712 = vadd.f32 %v3710, %v3711
      %v3713 = vrot.slane %v3712, 4
      %v3714 = vadd.f32 %v3712, %v3713
      %v3715 = vrot.slane %v3714, 2
      %v3716 = vadd.f32 %v3714, %v3715
      %v3717 = vrot.slane %v3716, 1
      %v3718 = vadd.f32 %v3716, %v3717
      %v3719 = vmul.f32 %v3617, 0.00390625
      %v3720 = vmul.f32 %v3718, 0.00390625
      %v3721 = vmul.f32 %v3719, %v3719
      %v3722 = vsub.f32 %v3720, %v3721
      %v3723 = vmax.f32 %v3722, 0.0
      %v3724 = vsub.f32 %v3516, %v3719
      %v3725 = vsub.f32 %v3517, %v3719
      %v3726 = vsub.f32 %v3518, %v3719
      %v3727 = vsub.f32 %v3519, %v3719
      %v3728 = vsub.f32 %v3520, %v3719
      %v3729 = vsub.f32 %v3521, %v3719
      %v3730 = vsub.f32 %v3522, %v3719
      %v3731 = vsub.f32 %v3523, %v3719
      %v3732 = vsub.f32 %v3524, %v3719
      %v3733 = vsub.f32 %v3525, %v3719
      %v3734 = vsub.f32 %v3526, %v3719
      %v3735 = vsub.f32 %v3527, %v3719
      %v3736 = vsub.f32 %v3528, %v3719
      %v3737 = vsub.f32 %v3529, %v3719
      %v3738 = vsub.f32 %v3530, %v3719
      %v3739 = vsub.f32 %v3531, %v3719
      %v3740 = vsub.f32 %v3532, %v3719
      %v3741 = vsub.f32 %v3533, %v3719
      %v3742 = vsub.f32 %v3534, %v3719
      %v3743 = vsub.f32 %v3535, %v3719
      %v3744 = vsub.f32 %v3536, %v3719
      %v3745 = vsub.f32 %v3537, %v3719
      %v3746 = vsub.f32 %v3538, %v3719
      %v3747 = vsub.f32 %v3539, %v3719
      %v3748 = vsub.f32 %v3540, %v3719
      %v3749 = vsub.f32 %v3541, %v3719
      %v3750 = vsub.f32 %v3542, %v3719
      %v3751 = vsub.f32 %v3543, %v3719
      %v3752 = vsub.f32 %v3544, %v3719
      %v3753 = vsub.f32 %v3545, %v3719
      %v3754 = vsub.f32 %v3546, %v3719
      %v3755 = vsub.f32 %v3547, %v3719
      %v3756 = vadd.f32 %v3723, 1e-05
      %v3757 = vrsqrt.pop %v3756
      %v3758 = vmul.f32 %v3724, %v3757
      %v3759 = vmul.f32 %v3725, %v3757
      %v3760 = vmul.f32 %v3726, %v3757
      %v3761 = vmul.f32 %v3727, %v3757
      %v3762 = vmul.f32 %v3728, %v3757
      %v3763 = vmul.f32 %v3729, %v3757
      %v3764 = vmul.f32 %v3730, %v3757
      %v3765 = vmul.f32 %v3731, %v3757
      %v3766 = vmul.f32 %v3732, %v3757
      %v3767 = vmul.f32 %v3733, %v3757
      %v3768 = vmul.f32 %v3734, %v3757
      %v3769 = vmul.f32 %v3735, %v3757
      %v3770 = vmul.f32 %v3736, %v3757
      %v3771 = vmul.f32 %v3737, %v3757
      %v3772 = vmul.f32 %v3738, %v3757
      %v3773 = vmul.f32 %v3739, %v3757
      %v3774 = vmul.f32 %v3740, %v3757
      %v3775 = vmul.f32 %v3741, %v3757
      %v3776 = vmul.f32 %v3742, %v3757
      %v3777 = vmul.f32 %v3743, %v3757
      %v3778 = vmul.f32 %v3744, %v3757
      %v3779 = vmul.f32 %v3745, %v3757
      %v3780 = vmul.f32 %v3746, %v3757
      %v3781 = vmul.f32 %v3747, %v3757
      %v3782 = vmul.f32 %v3748, %v3757
      %v3783 = vmul.f32 %v3749, %v3757
      %v3784 = vmul.f32 %v3750, %v3757
      %v3785 = vmul.f32 %v3751, %v3757
      %v3786 = vmul.f32 %v3752, %v3757
      %v3787 = vmul.f32 %v3753, %v3757
      %v3788 = vmul.f32 %v3754, %v3757
      %v3789 = vmul.f32 %v3755, %v3757
      %v3790 = vmax.f32 %v3758, 0.0
      %v3791 = vmax.f32 %v3759, 0.0
      %v3792 = vmax.f32 %v3760, 0.0
      %v3793 = vmax.f32 %v3761, 0.0
      %v3794 = vmax.f32 %v3762, 0.0
      %v3795 = vmax.f32 %v3763, 0.0
      %v3796 = vmax.f32 %v3764, 0.0
      %v3797 = vmax.f32 %v3765, 0.0
      %v3798 = vmax.f32 %v3766, 0.0
      %v3799 = vmax.f32 %v3767, 0.0
      %v3800 = vmax.f32 %v3768, 0.0
      %v3801 = vmax.f32 %v3769, 0.0
      %v3802 = vmax.f32 %v3770, 0.0
      %v3803 = vmax.f32 %v3771, 0.0
      %v3804 = vmax.f32 %v3772, 0.0
      %v3805 = vmax.f32 %v3773, 0.0
      %v3806 = vmax.f32 %v3774, 0.0
      %v3807 = vmax.f32 %v3775, 0.0
      %v3808 = vmax.f32 %v3776, 0.0
      %v3809 = vmax.f32 %v3777, 0.0
      %v3810 = vmax.f32 %v3778, 0.0
      %v3811 = vmax.f32 %v3779, 0.0
      %v3812 = vmax.f32 %v3780, 0.0
      %v3813 = vmax.f32 %v3781, 0.0
      %v3814 = vmax.f32 %v3782, 0.0
      %v3815 = vmax.f32 %v3783, 0.0
      %v3816 = vmax.f32 %v3784, 0.0
      %v3817 = vmax.f32 %v3785, 0.0
      %v3818 = vmax.f32 %v3786, 0.0
      %v3819 = vmax.f32 %v3787, 0.0
      %v3820 = vmax.f32 %v3788, 0.0
      %v3821 = vmax.f32 %v3789, 0.0
      %v3822 = vpack.c.bf16 %v3791, %v3790
      %v3823 = vpack.c.bf16 %v3793, %v3792
      %v3824 = vpack.c.bf16 %v3795, %v3794
      %v3825 = vpack.c.bf16 %v3797, %v3796
      %v3826 = vpack.c.bf16 %v3799, %v3798
      %v3827 = vpack.c.bf16 %v3801, %v3800
      %v3828 = vpack.c.bf16 %v3803, %v3802
      %v3829 = vpack.c.bf16 %v3805, %v3804
      %v3830 = vpack.c.bf16 %v3807, %v3806
      %v3831 = vpack.c.bf16 %v3809, %v3808
      %v3832 = vpack.c.bf16 %v3811, %v3810
      %v3833 = vpack.c.bf16 %v3813, %v3812
      %v3834 = vpack.c.bf16 %v3815, %v3814
      %v3835 = vpack.c.bf16 %v3817, %v3816
      %v3836 = vpack.c.bf16 %v3819, %v3818
      %v3837 = vpack.c.bf16 %v3821, %v3820
      %v3838 = vld [vmem:[%s2] sm:$0xf]
      %v3839 = vld [vmem:[%s2 + $0x4] sm:$0xf]
      %3856 = vrot.lane.b32.xlu0 %v3822, 112
      %v3857 = vpop.permute.xlu0 %3856
      %3858 = vrot.lane.b32.xlu0 %v3823, 112
      %v3859 = vpop.permute.xlu0 %3858
      %3860 = vrot.lane.b32.xlu0 %v3824, 112
      %v3861 = vpop.permute.xlu0 %3860
      %3862 = vrot.lane.b32.xlu0 %v3825, 112
      %v3863 = vpop.permute.xlu0 %3862
      %3864 = vrot.lane.b32.xlu0 %v3826, 112
      %v3865 = vpop.permute.xlu0 %3864
      %3866 = vrot.lane.b32.xlu0 %v3827, 112
      %v3867 = vpop.permute.xlu0 %3866
      %3868 = vrot.lane.b32.xlu0 %v3828, 112
      %v3869 = vpop.permute.xlu0 %3868
      %3870 = vrot.lane.b32.xlu0 %v3829, 112
      %v3871 = vpop.permute.xlu0 %3870
      %3872 = vrot.lane.b32.xlu0 %v3830, 112
      %v3873 = vpop.permute.xlu0 %3872
      %3874 = vrot.lane.b32.xlu0 %v3831, 112
      %v3875 = vpop.permute.xlu0 %3874
      %3876 = vrot.lane.b32.xlu0 %v3832, 112
      %v3877 = vpop.permute.xlu0 %3876
      %3878 = vrot.lane.b32.xlu0 %v3833, 112
      %v3879 = vpop.permute.xlu0 %3878
      %3880 = vrot.lane.b32.xlu0 %v3834, 112
      %v3881 = vpop.permute.xlu0 %3880
      %3882 = vrot.lane.b32.xlu0 %v3835, 112
      %v3883 = vpop.permute.xlu0 %3882
      %3884 = vrot.lane.b32.xlu0 %v3836, 112
      %v3885 = vpop.permute.xlu0 %3884
      %3886 = vrot.lane.b32.xlu0 %v3837, 112
      %v3887 = vpop.permute.xlu0 %3886
      %v3890 = vunpack.c.l.b16 %v3838
      %v3891 = vunpack.c.l.b16 %v3839
      %v3892 = vpack.c.b16 %v3891, %v3890
      %vm3894 = vcmask 130048
      %v3896 = vsel %vm3894, %v3857, 0
      %v3899 = vsel %vm3894, %v3859, 0
      %v3902 = vsel %vm3894, %v3861, 0
      %v3905 = vsel %vm3894, %v3863, 0
      %v3908 = vsel %vm3894, %v3865, 0
      %v3911 = vsel %vm3894, %v3867, 0
      %v3914 = vsel %vm3894, %v3869, 0
      %v3917 = vsel %vm3894, %v3871, 0
      %v3920 = vsel %vm3894, %v3873, 0
      %v3923 = vsel %vm3894, %v3875, 0
      %v3926 = vsel %vm3894, %v3877, 0
      %v3929 = vsel %vm3894, %v3879, 0
      %v3932 = vsel %vm3894, %v3881, 0
      %v3935 = vsel %vm3894, %v3883, 0
      %v3938 = vsel %vm3894, %v3885, 0
      %v3941 = vsel %vm3894, %v3887, 0
      %3943 = vmatprep.subr.bf16.mxu0 0
      %3944 = vmatpush1.bf16.msra.mxu0 %v3892
      %3945 = vmatprep.subr.bf16.mxu0 0
      %3946 = vmatpush1.bf16.msra.mxu0 0
      %3947 = vmatprep.subr.bf16.mxu0 0
      %3948 = vmatpush1.bf16.msra.mxu0 0
      %3949 = vmatprep.subr.bf16.mxu0 0
      %3950 = vmatpush1.bf16.msra.mxu0 0
      %3951 = vmatprep.subr.bf16.mxu0 0
      %3952 = vmatpush1.bf16.msra.mxu0 0
      %3953 = vmatprep.subr.bf16.mxu0 0
      %3954 = vmatpush1.bf16.msra.mxu0 0
      %3955 = vmatprep.subr.bf16.mxu0 0
      %3956 = vmatpush1.bf16.msra.mxu0 0
      %3957 = vmatprep.subr.bf16.mxu0 0
      %3958 = vmatpush1.bf16.msra.mxu0 0
      %3959 = vmatprep.subr.bf16.mxu0 0
      %3960 = vmatpush1.bf16.msra.mxu0 0
      %3961 = vmatprep.subr.bf16.mxu0 0
      %3962 = vmatpush1.bf16.msra.mxu0 0
      %3963 = vmatprep.subr.bf16.mxu0 0
      %3964 = vmatpush1.bf16.msra.mxu0 0
      %3965 = vmatprep.subr.bf16.mxu0 0
      %3966 = vmatpush1.bf16.msra.mxu0 0
      %3967 = vmatprep.subr.bf16.mxu0 0
      %3968 = vmatpush1.bf16.msra.mxu0 0
      %3969 = vmatprep.subr.bf16.mxu0 0
      %3970 = vmatpush1.bf16.msra.mxu0 0
      %3971 = vmatprep.subr.bf16.mxu0 0
      %3972 = vmatpush1.bf16.msra.mxu0 0
      %3973 = vmatprep.subr.bf16.mxu0 0
      %3974 = vmatpush1.bf16.msra.mxu0 0
      %3975 = vmatprep.mubr.bf16.mxu0 0
      %3976 = vmatmul.mubr.bf16.gmra.mrb[0].mxu0 %v3896
      %v3977 = vpop.f32.mrb[0].mxu0
      %v3978 = vadd.f32 0.0, %v3977
      %v3979 = vpop.f32.mrb[0].mxu0
      %v3980 = vpop.f32.mrb[0].mxu0
      %v3981 = vadd.f32 0.0, %v3980
      %v3982 = vpop.f32.mrb[0].mxu0
      %3983 = vmatprep.mubr.bf16.mxu0 0
      %3984 = vmatmul.mubr.bf16.gmra.mrb[0].mxu0 %v3899
      %v3985 = vpop.f32.mrb[0].mxu0
      %v3986 = vadd.f32 0.0, %v3985
      %v3987 = vpop.f32.mrb[0].mxu0
      %v3988 = vpop.f32.mrb[0].mxu0
      %v3989 = vadd.f32 0.0, %v3988
      %v3990 = vpop.f32.mrb[0].mxu0
      %3991 = vmatprep.mubr.bf16.mxu0 0
      %3992 = vmatmul.mubr.bf16.gmra.mrb[0].mxu0 %v3902
      %v3993 = vpop.f32.mrb[0].mxu0
      %v3994 = vadd.f32 0.0, %v3993
      %v3995 = vpop.f32.mrb[0].mxu0
      %v3996 = vpop.f32.mrb[0].mxu0
      %v3997 = vadd.f32 0.0, %v3996
      %v3998 = vpop.f32.mrb[0].mxu0
      %3999 = vmatprep.mubr.bf16.mxu0 0
      %4000 = vmatmul.mubr.bf16.gmra.mrb[0].mxu0 %v3905
      %v4001 = vpop.f32.mrb[0].mxu0
      %v4002 = vadd.f32 0.0, %v4001
      %v4003 = vpop.f32.mrb[0].mxu0
      %v4004 = vpop.f32.mrb[0].mxu0
      %v4005 = vadd.f32 0.0, %v4004
      %v4006 = vpop.f32.mrb[0].mxu0
      %4007 = vmatprep.mubr.bf16.mxu0 0
      %4008 = vmatmul.mubr.bf16.gmra.mrb[0].mxu0 %v3908
      %v4009 = vpop.f32.mrb[0].mxu0
      %v4010 = vadd.f32 0.0, %v4009
      %v4011 = vpop.f32.mrb[0].mxu0
      %v4012 = vpop.f32.mrb[0].mxu0
      %v4013 = vadd.f32 0.0, %v4012
      %v4014 = vpop.f32.mrb[0].mxu0
      %4015 = vmatprep.mubr.bf16.mxu0 0
      %4016 = vmatmul.mubr.bf16.gmra.mrb[0].mxu0 %v3911
      %v4017 = vpop.f32.mrb[0].mxu0
      %v4018 = vadd.f32 0.0, %v4017
      %v4019 = vpop.f32.mrb[0].mxu0
      %v4020 = vpop.f32.mrb[0].mxu0
      %v4021 = vadd.f32 0.0, %v4020
      %v4022 = vpop.f32.mrb[0].mxu0
      %4023 = vmatprep.mubr.bf16.mxu0 0
      %4024 = vmatmul.mubr.bf16.gmra.mrb[0].mxu0 %v3914
      %v4025 = vpop.f32.mrb[0].mxu0
      %v4026 = vadd.f32 0.0, %v4025
      %v4027 = vpop.f32.mrb[0].mxu0
      %v4028 = vpop.f32.mrb[0].mxu0
      %v4029 = vadd.f32 0.0, %v4028
      %v4030 = vpop.f32.mrb[0].mxu0
      %4031 = vmatprep.mubr.bf16.mxu0 0
      %4032 = vmatmul.mubr.bf16.gmra.mrb[0].mxu0 %v3917
      %v4033 = vpop.f32.mrb[0].mxu0
      %v4034 = vadd.f32 0.0, %v4033
      %v4035 = vpop.f32.mrb[0].mxu0
      %v4036 = vpop.f32.mrb[0].mxu0
      %v4037 = vadd.f32 0.0, %v4036
      %v4038 = vpop.f32.mrb[0].mxu0
      %4039 = vmatprep.mubr.bf16.mxu0 0
      %4040 = vmatmul.mubr.bf16.gmra.mrb[0].mxu0 %v3920
      %v4041 = vpop.f32.mrb[0].mxu0
      %v4042 = vadd.f32 0.0, %v4041
      %v4043 = vpop.f32.mrb[0].mxu0
      %v4044 = vpop.f32.mrb[0].mxu0
      %v4045 = vadd.f32 0.0, %v4044
      %v4046 = vpop.f32.mrb[0].mxu0
      %4047 = vmatprep.mubr.bf16.mxu0 0
      %4048 = vmatmul.mubr.bf16.gmra.mrb[0].mxu0 %v3923
      %v4049 = vpop.f32.mrb[0].mxu0
      %v4050 = vadd.f32 0.0, %v4049
      %v4051 = vpop.f32.mrb[0].mxu0
      %v4052 = vpop.f32.mrb[0].mxu0
      %v4053 = vadd.f32 0.0, %v4052
      %v4054 = vpop.f32.mrb[0].mxu0
      %4055 = vmatprep.mubr.bf16.mxu0 0
      %4056 = vmatmul.mubr.bf16.gmra.mrb[0].mxu0 %v3926
      %v4057 = vpop.f32.mrb[0].mxu0
      %v4058 = vadd.f32 0.0, %v4057
      %v4059 = vpop.f32.mrb[0].mxu0
      %v4060 = vpop.f32.mrb[0].mxu0
      %v4061 = vadd.f32 0.0, %v4060
      %v4062 = vpop.f32.mrb[0].mxu0
      %4063 = vmatprep.mubr.bf16.mxu0 0
      %4064 = vmatmul.mubr.bf16.gmra.mrb[0].mxu0 %v3929
      %v4065 = vpop.f32.mrb[0].mxu0
      %v4066 = vadd.f32 0.0, %v4065
      %v4067 = vpop.f32.mrb[0].mxu0
      %v4068 = vpop.f32.mrb[0].mxu0
      %v4069 = vadd.f32 0.0, %v4068
      %v4070 = vpop.f32.mrb[0].mxu0
      %4071 = vmatprep.mubr.bf16.mxu0 0
      %4072 = vmatmul.mubr.bf16.gmra.mrb[0].mxu0 %v3932
      %v4073 = vpop.f32.mrb[0].mxu0
      %v4074 = vadd.f32 0.0, %v4073
      %v4075 = vpop.f32.mrb[0].mxu0
      %v4076 = vpop.f32.mrb[0].mxu0
      %v4077 = vadd.f32 0.0, %v4076
      %v4078 = vpop.f32.mrb[0].mxu0
      %4079 = vmatprep.mubr.bf16.mxu0 0
      %4080 = vmatmul.mubr.bf16.gmra.mrb[0].mxu0 %v3935
      %v4081 = vpop.f32.mrb[0].mxu0
      %v4082 = vadd.f32 0.0, %v4081
      %v4083 = vpop.f32.mrb[0].mxu0
      %v4084 = vpop.f32.mrb[0].mxu0
      %v4085 = vadd.f32 0.0, %v4084
      %v4086 = vpop.f32.mrb[0].mxu0
      %4087 = vmatprep.mubr.bf16.mxu0 0
      %4088 = vmatmul.mubr.bf16.gmra.mrb[0].mxu0 %v3938
      %v4089 = vpop.f32.mrb[0].mxu0
      %v4090 = vadd.f32 0.0, %v4089
      %v4091 = vpop.f32.mrb[0].mxu0
      %v4092 = vpop.f32.mrb[0].mxu0
      %v4093 = vadd.f32 0.0, %v4092
      %v4094 = vpop.f32.mrb[0].mxu0
      %4095 = vmatprep.mubr.bf16.mxu0 0
      %4096 = vmatmul.mubr.bf16.gmra.mrb[0].mxu0 %v3941
      %v4097 = vpop.f32.mrb[0].mxu0
      %v4098 = vadd.f32 0.0, %v4097
      %v4099 = vpop.f32.mrb[0].mxu0
      %v4100 = vpop.f32.mrb[0].mxu0
      %v4101 = vadd.f32 0.0, %v4100
      %v4102 = vpop.f32.mrb[0].mxu0
      %4103 = vdwg.mxu0
      %vm4104 = vcmask 523264
      %v4105 = vsel %vm4104, %v3978, 0.0
      %v4106 = vsel %vm4104, %v3981, 0.0
      %v4107 = vadd.f32 %v4105, %v4106
      %v4108 = vsel %vm4104, %v3986, 0.0
      %v4109 = vadd.f32 %v4107, %v4108
      %v4110 = vsel %vm4104, %v3989, 0.0
      %v4111 = vadd.f32 %v4109, %v4110
      %v4112 = vsel %vm4104, %v3994, 0.0
      %v4113 = vadd.f32 %v4111, %v4112
      %v4114 = vsel %vm4104, %v3997, 0.0
      %v4115 = vadd.f32 %v4113, %v4114
      %v4116 = vsel %vm4104, %v4002, 0.0
      %v4117 = vadd.f32 %v4115, %v4116
      %v4118 = vsel %vm4104, %v4005, 0.0
      %v4119 = vadd.f32 %v4117, %v4118
      %v4120 = vsel %vm4104, %v4010, 0.0
      %v4121 = vadd.f32 %v4119, %v4120
      %v4122 = vsel %vm4104, %v4013, 0.0
      %v4123 = vadd.f32 %v4121, %v4122
      %v4124 = vsel %vm4104, %v4018, 0.0
      %v4125 = vadd.f32 %v4123, %v4124
      %v4126 = vsel %vm4104, %v4021, 0.0
      %v4127 = vadd.f32 %v4125, %v4126
      %v4128 = vsel %vm4104, %v4026, 0.0
      %v4129 = vadd.f32 %v4127, %v4128
      %v4130 = vsel %vm4104, %v4029, 0.0
      %v4131 = vadd.f32 %v4129, %v4130
      %v4132 = vsel %vm4104, %v4034, 0.0
      %v4133 = vadd.f32 %v4131, %v4132
      %v4134 = vsel %vm4104, %v4037, 0.0
      %v4135 = vadd.f32 %v4133, %v4134
      %v4136 = vsel %vm4104, %v4042, 0.0
      %v4137 = vadd.f32 %v4135, %v4136
      %v4138 = vsel %vm4104, %v4045, 0.0
      %v4139 = vadd.f32 %v4137, %v4138
      %v4140 = vsel %vm4104, %v4050, 0.0
      %v4141 = vadd.f32 %v4139, %v4140
      %v4142 = vsel %vm4104, %v4053, 0.0
      %v4143 = vadd.f32 %v4141, %v4142
      %v4144 = vsel %vm4104, %v4058, 0.0
      %v4145 = vadd.f32 %v4143, %v4144
      %v4146 = vsel %vm4104, %v4061, 0.0
      %v4147 = vadd.f32 %v4145, %v4146
      %v4148 = vsel %vm4104, %v4066, 0.0
      %v4149 = vadd.f32 %v4147, %v4148
      %v4150 = vsel %vm4104, %v4069, 0.0
      %v4151 = vadd.f32 %v4149, %v4150
      %v4152 = vsel %vm4104, %v4074, 0.0
      %v4153 = vadd.f32 %v4151, %v4152
      %v4154 = vsel %vm4104, %v4077, 0.0
      %v4155 = vadd.f32 %v4153, %v4154
      %v4156 = vsel %vm4104, %v4082, 0.0
      %v4157 = vadd.f32 %v4155, %v4156
      %v4158 = vsel %vm4104, %v4085, 0.0
      %v4159 = vadd.f32 %v4157, %v4158
      %v4160 = vsel %vm4104, %v4090, 0.0
      %v4161 = vadd.f32 %v4159, %v4160
      %v4162 = vsel %vm4104, %v4093, 0.0
      %v4163 = vadd.f32 %v4161, %v4162
      %v4164 = vsel %vm4104, %v4098, 0.0
      %v4165 = vadd.f32 %v4163, %v4164
      %v4166 = vsel %vm4104, %v4101, 0.0
      %v4167 = vadd.f32 %v4165, %v4166
      %v4168 = vrot.slane %v4167, 4
      %v4169 = vadd.f32 %v4167, %v4168
      %v4170 = vrot.slane %v4169, 2
      %v4171 = vadd.f32 %v4169, %v4170
      %v4172 = vrot.slane %v4171, 1
      %v4173 = vadd.f32 %v4171, %v4172
      %v4174 = vmul.f32 %v3978, %v3978
      %v4175 = vmul.f32 %v3981, %v3981
      %v4176 = vmul.f32 %v3986, %v3986
      %v4177 = vmul.f32 %v3989, %v3989
      %v4178 = vmul.f32 %v3994, %v3994
      %v4179 = vmul.f32 %v3997, %v3997
      %v4180 = vmul.f32 %v4002, %v4002
      %v4181 = vmul.f32 %v4005, %v4005
      %v4182 = vmul.f32 %v4010, %v4010
      %v4183 = vmul.f32 %v4013, %v4013
      %v4184 = vmul.f32 %v4018, %v4018
      %v4185 = vmul.f32 %v4021, %v4021
      %v4186 = vmul.f32 %v4026, %v4026
      %v4187 = vmul.f32 %v4029, %v4029
      %v4188 = vmul.f32 %v4034, %v4034
      %v4189 = vmul.f32 %v4037, %v4037
      %v4190 = vmul.f32 %v4042, %v4042
      %v4191 = vmul.f32 %v4045, %v4045
      %v4192 = vmul.f32 %v4050, %v4050
      %v4193 = vmul.f32 %v4053, %v4053
      %v4194 = vmul.f32 %v4058, %v4058
      %v4195 = vmul.f32 %v4061, %v4061
      %v4196 = vmul.f32 %v4066, %v4066
      %v4197 = vmul.f32 %v4069, %v4069
      %v4198 = vmul.f32 %v4074, %v4074
      %v4199 = vmul.f32 %v4077, %v4077
      %v4200 = vmul.f32 %v4082, %v4082
      %v4201 = vmul.f32 %v4085, %v4085
      %v4202 = vmul.f32 %v4090, %v4090
      %v4203 = vmul.f32 %v4093, %v4093
      %v4204 = vmul.f32 %v4098, %v4098
      %v4205 = vmul.f32 %v4101, %v4101
      %v4206 = vsel %vm4104, %v4174, 0.0
      %v4207 = vsel %vm4104, %v4175, 0.0
      %v4208 = vadd.f32 %v4206, %v4207
      %v4209 = vsel %vm4104, %v4176, 0.0
      %v4210 = vadd.f32 %v4208, %v4209
      %v4211 = vsel %vm4104, %v4177, 0.0
      %v4212 = vadd.f32 %v4210, %v4211
      %v4213 = vsel %vm4104, %v4178, 0.0
      %v4214 = vadd.f32 %v4212, %v4213
      %v4215 = vsel %vm4104, %v4179, 0.0
      %v4216 = vadd.f32 %v4214, %v4215
      %v4217 = vsel %vm4104, %v4180, 0.0
      %v4218 = vadd.f32 %v4216, %v4217
      %v4219 = vsel %vm4104, %v4181, 0.0
      %v4220 = vadd.f32 %v4218, %v4219
      %v4221 = vsel %vm4104, %v4182, 0.0
      %v4222 = vadd.f32 %v4220, %v4221
      %v4223 = vsel %vm4104, %v4183, 0.0
      %v4224 = vadd.f32 %v4222, %v4223
      %v4225 = vsel %vm4104, %v4184, 0.0
      %v4226 = vadd.f32 %v4224, %v4225
      %v4227 = vsel %vm4104, %v4185, 0.0
      %v4228 = vadd.f32 %v4226, %v4227
      %v4229 = vsel %vm4104, %v4186, 0.0
      %v4230 = vadd.f32 %v4228, %v4229
      %v4231 = vsel %vm4104, %v4187, 0.0
      %v4232 = vadd.f32 %v4230, %v4231
      %v4233 = vsel %vm4104, %v4188, 0.0
      %v4234 = vadd.f32 %v4232, %v4233
      %v4235 = vsel %vm4104, %v4189, 0.0
      %v4236 = vadd.f32 %v4234, %v4235
      %v4237 = vsel %vm4104, %v4190, 0.0
      %v4238 = vadd.f32 %v4236, %v4237
      %v4239 = vsel %vm4104, %v4191, 0.0
      %v4240 = vadd.f32 %v4238, %v4239
      %v4241 = vsel %vm4104, %v4192, 0.0
      %v4242 = vadd.f32 %v4240, %v4241
      %v4243 = vsel %vm4104, %v4193, 0.0
      %v4244 = vadd.f32 %v4242, %v4243
      %v4245 = vsel %vm4104, %v4194, 0.0
      %v4246 = vadd.f32 %v4244, %v4245
      %v4247 = vsel %vm4104, %v4195, 0.0
      %v4248 = vadd.f32 %v4246, %v4247
      %v4249 = vsel %vm4104, %v4196, 0.0
      %v4250 = vadd.f32 %v4248, %v4249
      %v4251 = vsel %vm4104, %v4197, 0.0
      %v4252 = vadd.f32 %v4250, %v4251
      %v4253 = vsel %vm4104, %v4198, 0.0
      %v4254 = vadd.f32 %v4252, %v4253
      %v4255 = vsel %vm4104, %v4199, 0.0
      %v4256 = vadd.f32 %v4254, %v4255
      %v4257 = vsel %vm4104, %v4200, 0.0
      %v4258 = vadd.f32 %v4256, %v4257
      %v4259 = vsel %vm4104, %v4201, 0.0
      %v4260 = vadd.f32 %v4258, %v4259
      %v4261 = vsel %vm4104, %v4202, 0.0
      %v4262 = vadd.f32 %v4260, %v4261
      %v4263 = vsel %vm4104, %v4203, 0.0
      %v4264 = vadd.f32 %v4262, %v4263
      %v4265 = vsel %vm4104, %v4204, 0.0
      %v4266 = vadd.f32 %v4264, %v4265
      %v4267 = vsel %vm4104, %v4205, 0.0
      %v4268 = vadd.f32 %v4266, %v4267
      %v4269 = vrot.slane %v4268, 4
      %v4270 = vadd.f32 %v4268, %v4269
      %v4271 = vrot.slane %v4270, 2
      %v4272 = vadd.f32 %v4270, %v4271
      %v4273 = vrot.slane %v4272, 1
      %v4274 = vadd.f32 %v4272, %v4273
      %4276 = vrot.lane.b32.xlu0 %v4173, 112
      %v4277 = vpop.permute.xlu0 %4276
      %v4279 = vadd.f32 %v4173, %v4277
      %4280 = vrot.lane.b32.xlu0 %v4173, 96
      %v4281 = vpop.permute.xlu0 %4280
      %v4283 = vadd.f32 %v4279, %v4281
      %4284 = vrot.lane.b32.xlu0 %v4173, 80
      %v4285 = vpop.permute.xlu0 %4284
      %v4287 = vadd.f32 %v4283, %v4285
      %4289 = vrot.lane.b32.xlu0 %v4274, 112
      %v4290 = vpop.permute.xlu0 %4289
      %v4292 = vadd.f32 %v4274, %v4290
      %4293 = vrot.lane.b32.xlu0 %v4274, 96
      %v4294 = vpop.permute.xlu0 %4293
      %v4296 = vadd.f32 %v4292, %v4294
      %4297 = vrot.lane.b32.xlu0 %v4274, 80
      %v4298 = vpop.permute.xlu0 %4297
      %v4300 = vadd.f32 %v4296, %v4298
      %v4301 = vmul.f32 %v4287, 0.0009765625
      %v4302 = vmul.f32 %v4300, 0.0009765625
      %v4303 = vmul.f32 %v4301, %v4301
      %v4304 = vsub.f32 %v4302, %v4303
      %v4305 = vmax.f32 %v4304, 0.0
      %v4306 = vadd.f32 %v4305, 1e-05
      %v4307 = vrsqrt.pop %v4306
      %4309 = vrot.lane.b32.xlu0 %v4301, 16
      %v4310 = vpop.permute.xlu0 %4309
      %4312 = vrot.lane.b32.xlu0 %v4301, 32
      %v4313 = vpop.permute.xlu0 %4312
      %4315 = vrot.lane.b32.xlu0 %v4301, 48
      %v4316 = vpop.permute.xlu0 %4315
      %v4318 = vsel %vm3894, %v4301, %v4310
      %v4319 = vsel %vm740, %v4318, %v4313
      %vm4320 = vcmask 392192
      %v4321 = vsel %vm4320, %v4319, %v4316
      %4323 = vrot.lane.b32.xlu0 %v4307, 16
      %v4324 = vpop.permute.xlu0 %4323
      %4326 = vrot.lane.b32.xlu0 %v4307, 32
      %v4327 = vpop.permute.xlu0 %4326
      %4329 = vrot.lane.b32.xlu0 %v4307, 48
      %v4330 = vpop.permute.xlu0 %4329
      %v4332 = vsel %vm3894, %v4307, %v4324
      %v4333 = vsel %vm740, %v4332, %v4327
      %v4334 = vsel %vm4320, %v4333, %v4330
      %v4335 = vlaneseq
      %v4336 = vshrl.u32 %v4335, 7
      %v4337 = vsub.s32 0, %v4336
      %v4338 = vrot.slane %v4321, %v4337
      %v4339 = vsub.f32 %v3978, %v4338
      %v4340 = vsub.f32 %v3981, %v4338
      %v4341 = vsub.f32 %v3986, %v4338
      %v4342 = vsub.f32 %v3989, %v4338
      %v4343 = vsub.f32 %v3994, %v4338
      %v4344 = vsub.f32 %v3997, %v4338
      %v4345 = vsub.f32 %v4002, %v4338
      %v4346 = vsub.f32 %v4005, %v4338
      %v4347 = vsub.f32 %v4010, %v4338
      %v4348 = vsub.f32 %v4013, %v4338
      %v4349 = vsub.f32 %v4018, %v4338
      %v4350 = vsub.f32 %v4021, %v4338
      %v4351 = vsub.f32 %v4026, %v4338
      %v4352 = vsub.f32 %v4029, %v4338
      %v4353 = vsub.f32 %v4034, %v4338
      %v4354 = vsub.f32 %v4037, %v4338
      %v4355 = vsub.f32 %v4042, %v4338
      %v4356 = vsub.f32 %v4045, %v4338
      %v4357 = vsub.f32 %v4050, %v4338
      %v4358 = vsub.f32 %v4053, %v4338
      %v4359 = vsub.f32 %v4058, %v4338
      %v4360 = vsub.f32 %v4061, %v4338
      %v4361 = vsub.f32 %v4066, %v4338
      %v4362 = vsub.f32 %v4069, %v4338
      %v4363 = vsub.f32 %v4074, %v4338
      %v4364 = vsub.f32 %v4077, %v4338
      %v4365 = vsub.f32 %v4082, %v4338
      %v4366 = vsub.f32 %v4085, %v4338
      %v4367 = vsub.f32 %v4090, %v4338
      %v4368 = vsub.f32 %v4093, %v4338
      %v4369 = vsub.f32 %v4098, %v4338
      %v4370 = vsub.f32 %v4101, %v4338
      %v4371 = vlaneseq
      %v4372 = vshrl.u32 %v4371, 7
      %v4373 = vsub.s32 0, %v4372
      %v4374 = vrot.slane %v4334, %v4373
      %v4375 = vmul.f32 %v4339, %v4374
      %v4376 = vmul.f32 %v4340, %v4374
      %v4377 = vmul.f32 %v4341, %v4374
      %v4378 = vmul.f32 %v4342, %v4374
      %v4379 = vmul.f32 %v4343, %v4374
      %v4380 = vmul.f32 %v4344, %v4374
      %v4381 = vmul.f32 %v4345, %v4374
      %v4382 = vmul.f32 %v4346, %v4374
      %v4383 = vmul.f32 %v4347, %v4374
      %v4384 = vmul.f32 %v4348, %v4374
      %v4385 = vmul.f32 %v4349, %v4374
      %v4386 = vmul.f32 %v4350, %v4374
      %v4387 = vmul.f32 %v4351, %v4374
      %v4388 = vmul.f32 %v4352, %v4374
      %v4389 = vmul.f32 %v4353, %v4374
      %v4390 = vmul.f32 %v4354, %v4374
      %v4391 = vmul.f32 %v4355, %v4374
      %v4392 = vmul.f32 %v4356, %v4374
      %v4393 = vmul.f32 %v4357, %v4374
      %v4394 = vmul.f32 %v4358, %v4374
      %v4395 = vmul.f32 %v4359, %v4374
      %v4396 = vmul.f32 %v4360, %v4374
      %v4397 = vmul.f32 %v4361, %v4374
      %v4398 = vmul.f32 %v4362, %v4374
      %v4399 = vmul.f32 %v4363, %v4374
      %v4400 = vmul.f32 %v4364, %v4374
      %v4401 = vmul.f32 %v4365, %v4374
      %v4402 = vmul.f32 %v4366, %v4374
      %v4403 = vmul.f32 %v4367, %v4374
      %v4404 = vmul.f32 %v4368, %v4374
      %v4405 = vmul.f32 %v4369, %v4374
      %v4406 = vmul.f32 %v4370, %v4374
      %v4407 = vmax.f32 %v4375, 0.0
      %v4408 = vmax.f32 %v4376, 0.0
      %v4409 = vmax.f32 %v4377, 0.0
      %v4410 = vmax.f32 %v4378, 0.0
      %v4411 = vmax.f32 %v4379, 0.0
      %v4412 = vmax.f32 %v4380, 0.0
      %v4413 = vmax.f32 %v4381, 0.0
      %v4414 = vmax.f32 %v4382, 0.0
      %v4415 = vmax.f32 %v4383, 0.0
      %v4416 = vmax.f32 %v4384, 0.0
      %v4417 = vmax.f32 %v4385, 0.0
      %v4418 = vmax.f32 %v4386, 0.0
      %v4419 = vmax.f32 %v4387, 0.0
      %v4420 = vmax.f32 %v4388, 0.0
      %v4421 = vmax.f32 %v4389, 0.0
      %v4422 = vmax.f32 %v4390, 0.0
      %v4423 = vmax.f32 %v4391, 0.0
      %v4424 = vmax.f32 %v4392, 0.0
      %v4425 = vmax.f32 %v4393, 0.0
      %v4426 = vmax.f32 %v4394, 0.0
      %v4427 = vmax.f32 %v4395, 0.0
      %v4428 = vmax.f32 %v4396, 0.0
      %v4429 = vmax.f32 %v4397, 0.0
      %v4430 = vmax.f32 %v4398, 0.0
      %v4431 = vmax.f32 %v4399, 0.0
      %v4432 = vmax.f32 %v4400, 0.0
      %v4433 = vmax.f32 %v4401, 0.0
      %v4434 = vmax.f32 %v4402, 0.0
      %v4435 = vmax.f32 %v4403, 0.0
      %v4436 = vmax.f32 %v4404, 0.0
      %v4437 = vmax.f32 %v4405, 0.0
      %v4438 = vmax.f32 %v4406, 0.0
      %v4439 = vpack.c.bf16 %v4408, %v4407
      %v4440 = vpack.c.bf16 %v4410, %v4409
      %v4441 = vpack.c.bf16 %v4412, %v4411
      %v4442 = vpack.c.bf16 %v4414, %v4413
      %v4443 = vpack.c.bf16 %v4416, %v4415
      %v4444 = vpack.c.bf16 %v4418, %v4417
      %v4445 = vpack.c.bf16 %v4420, %v4419
      %v4446 = vpack.c.bf16 %v4422, %v4421
      %v4447 = vpack.c.bf16 %v4424, %v4423
      %v4448 = vpack.c.bf16 %v4426, %v4425
      %v4449 = vpack.c.bf16 %v4428, %v4427
      %v4450 = vpack.c.bf16 %v4430, %v4429
      %v4451 = vpack.c.bf16 %v4432, %v4431
      %v4452 = vpack.c.bf16 %v4434, %v4433
      %v4453 = vpack.c.bf16 %v4436, %v4435
      %v4454 = vpack.c.bf16 %v4438, %v4437
      %v4455 = vld [vmem:[%s3] sm:$0xf]
      %v4456 = vld [vmem:[%s3 + $0x4] sm:$0xf]
      %v4457 = vld [vmem:[%s3 + $0x8] sm:$0xf]
      %v4458 = vld [vmem:[%s3 + $0xc] sm:$0xf]
      %v4459 = vld [vmem:[%s3 + $0x10] sm:$0xf]
      %v4460 = vld [vmem:[%s3 + $0x14] sm:$0xf]
      %v4461 = vld [vmem:[%s3 + $0x18] sm:$0xf]
      %v4462 = vld [vmem:[%s3 + $0x1c] sm:$0xf]
      %v4463 = vld [vmem:[%s4] sm:$0x1]
      %v4465 = vlaneseq
      %v4466 = vshrl.u32 %v4465, 7
      %v4467 = vsub.s32 0, %v4466
      %v4468 = vrot.slane %v4463, %v4467
      %v4478 = vunpack.c.l.b16 %v4455
      %v4479 = vunpack.c.l.b16 %v4456
      %v4480 = vunpack.c.l.b16 %v4457
      %v4481 = vunpack.c.l.b16 %v4458
      %v4482 = vunpack.c.l.b16 %v4459
      %v4483 = vunpack.c.l.b16 %v4460
      %v4484 = vunpack.c.l.b16 %v4461
      %v4485 = vunpack.c.l.b16 %v4462
      %v4486 = vpack.c.b16 %v4479, %v4478
      %v4487 = vpack.c.b16 %v4481, %v4480
      %v4488 = vpack.c.b16 %v4483, %v4482
      %v4489 = vpack.c.b16 %v4485, %v4484
      %v4495 = vsel %vm4104, %v4439, 0
      %v4498 = vsel %vm4104, %v4440, 0
      %v4501 = vsel %vm4104, %v4441, 0
      %v4504 = vsel %vm4104, %v4442, 0
      %v4507 = vsel %vm4104, %v4443, 0
      %v4510 = vsel %vm4104, %v4444, 0
      %v4513 = vsel %vm4104, %v4445, 0
      %v4516 = vsel %vm4104, %v4446, 0
      %v4519 = vsel %vm4104, %v4447, 0
      %v4522 = vsel %vm4104, %v4448, 0
      %v4525 = vsel %vm4104, %v4449, 0
      %v4528 = vsel %vm4104, %v4450, 0
      %v4531 = vsel %vm4104, %v4451, 0
      %v4534 = vsel %vm4104, %v4452, 0
      %v4537 = vsel %vm4104, %v4453, 0
      %v4540 = vsel %vm4104, %v4454, 0
      %4542 = vmatprep.subr.bf16.mxu0 0
      %4543 = vmatpush1.bf16.msra.mxu0 %v4486
      %4544 = vmatprep.subr.bf16.mxu0 0
      %4545 = vmatpush1.bf16.msra.mxu0 %v4487
      %4546 = vmatprep.subr.bf16.mxu0 0
      %4547 = vmatpush1.bf16.msra.mxu0 %v4488
      %4548 = vmatprep.subr.bf16.mxu0 0
      %4549 = vmatpush1.bf16.msra.mxu0 %v4489
      %4550 = vmatprep.subr.bf16.mxu0 0
      %4551 = vmatpush1.bf16.msra.mxu0 0
      %4552 = vmatprep.subr.bf16.mxu0 0
      %4553 = vmatpush1.bf16.msra.mxu0 0
      %4554 = vmatprep.subr.bf16.mxu0 0
      %4555 = vmatpush1.bf16.msra.mxu0 0
      %4556 = vmatprep.subr.bf16.mxu0 0
      %4557 = vmatpush1.bf16.msra.mxu0 0
      %4558 = vmatprep.subr.bf16.mxu0 0
      %4559 = vmatpush1.bf16.msra.mxu0 0
      %4560 = vmatprep.subr.bf16.mxu0 0
      %4561 = vmatpush1.bf16.msra.mxu0 0
      %4562 = vmatprep.subr.bf16.mxu0 0
      %4563 = vmatpush1.bf16.msra.mxu0 0
      %4564 = vmatprep.subr.bf16.mxu0 0
      %4565 = vmatpush1.bf16.msra.mxu0 0
      %4566 = vmatprep.subr.bf16.mxu0 0
      %4567 = vmatpush1.bf16.msra.mxu0 0
      %4568 = vmatprep.subr.bf16.mxu0 0
      %4569 = vmatpush1.bf16.msra.mxu0 0
      %4570 = vmatprep.subr.bf16.mxu0 0
      %4571 = vmatpush1.bf16.msra.mxu0 0
      %4572 = vmatprep.subr.bf16.mxu0 0
      %4573 = vmatpush1.bf16.msra.mxu0 0
      %4574 = vmatprep.mubr.bf16.mxu0 0
      %4575 = vmatmul.mubr.bf16.gmra.mrb[0].mxu0 %v4495
      %v4576 = vpop.f32.mrb[0].mxu0
      %v4577 = vadd.f32 %v4468, %v4576
      %v4578 = vpop.f32.mrb[0].mxu0
      %v4579 = vpop.f32.mrb[0].mxu0
      %v4580 = vadd.f32 %v4468, %v4579
      %v4581 = vpop.f32.mrb[0].mxu0
      %4582 = vmatprep.mubr.bf16.mxu0 0
      %4583 = vmatmul.mubr.bf16.gmra.mrb[0].mxu0 %v4498
      %v4584 = vpop.f32.mrb[0].mxu0
      %v4585 = vadd.f32 %v4468, %v4584
      %v4586 = vpop.f32.mrb[0].mxu0
      %v4587 = vpop.f32.mrb[0].mxu0
      %v4588 = vadd.f32 %v4468, %v4587
      %v4589 = vpop.f32.mrb[0].mxu0
      %4590 = vmatprep.mubr.bf16.mxu0 0
      %4591 = vmatmul.mubr.bf16.gmra.mrb[0].mxu0 %v4501
      %v4592 = vpop.f32.mrb[0].mxu0
      %v4593 = vadd.f32 %v4468, %v4592
      %v4594 = vpop.f32.mrb[0].mxu0
      %v4595 = vpop.f32.mrb[0].mxu0
      %v4596 = vadd.f32 %v4468, %v4595
      %v4597 = vpop.f32.mrb[0].mxu0
      %4598 = vmatprep.mubr.bf16.mxu0 0
      %4599 = vmatmul.mubr.bf16.gmra.mrb[0].mxu0 %v4504
      %v4600 = vpop.f32.mrb[0].mxu0
      %v4601 = vadd.f32 %v4468, %v4600
      %v4602 = vpop.f32.mrb[0].mxu0
      %v4603 = vpop.f32.mrb[0].mxu0
      %v4604 = vadd.f32 %v4468, %v4603
      %v4605 = vpop.f32.mrb[0].mxu0
      %4606 = vmatprep.mubr.bf16.mxu0 0
      %4607 = vmatmul.mubr.bf16.gmra.mrb[0].mxu0 %v4507
      %v4608 = vpop.f32.mrb[0].mxu0
      %v4609 = vadd.f32 %v4468, %v4608
      %v4610 = vpop.f32.mrb[0].mxu0
      %v4611 = vpop.f32.mrb[0].mxu0
      %v4612 = vadd.f32 %v4468, %v4611
      %v4613 = vpop.f32.mrb[0].mxu0
      %4614 = vmatprep.mubr.bf16.mxu0 0
      %4615 = vmatmul.mubr.bf16.gmra.mrb[0].mxu0 %v4510
      %v4616 = vpop.f32.mrb[0].mxu0
      %v4617 = vadd.f32 %v4468, %v4616
      %v4618 = vpop.f32.mrb[0].mxu0
      %v4619 = vpop.f32.mrb[0].mxu0
      %v4620 = vadd.f32 %v4468, %v4619
      %v4621 = vpop.f32.mrb[0].mxu0
      %4622 = vmatprep.mubr.bf16.mxu0 0
      %4623 = vmatmul.mubr.bf16.gmra.mrb[0].mxu0 %v4513
      %v4624 = vpop.f32.mrb[0].mxu0
      %v4625 = vadd.f32 %v4468, %v4624
      %v4626 = vpop.f32.mrb[0].mxu0
      %v4627 = vpop.f32.mrb[0].mxu0
      %v4628 = vadd.f32 %v4468, %v4627
      %v4629 = vpop.f32.mrb[0].mxu0
      %4630 = vmatprep.mubr.bf16.mxu0 0
      %4631 = vmatmul.mubr.bf16.gmra.mrb[0].mxu0 %v4516
      %v4632 = vpop.f32.mrb[0].mxu0
      %v4633 = vadd.f32 %v4468, %v4632
      %v4634 = vpop.f32.mrb[0].mxu0
      %v4635 = vpop.f32.mrb[0].mxu0
      %v4636 = vadd.f32 %v4468, %v4635
      %v4637 = vpop.f32.mrb[0].mxu0
      %4638 = vmatprep.mubr.bf16.mxu0 0
      %4639 = vmatmul.mubr.bf16.gmra.mrb[0].mxu0 %v4519
      %v4640 = vpop.f32.mrb[0].mxu0
      %v4641 = vadd.f32 %v4468, %v4640
      %v4642 = vpop.f32.mrb[0].mxu0
      %v4643 = vpop.f32.mrb[0].mxu0
      %v4644 = vadd.f32 %v4468, %v4643
      %v4645 = vpop.f32.mrb[0].mxu0
      %4646 = vmatprep.mubr.bf16.mxu0 0
      %4647 = vmatmul.mubr.bf16.gmra.mrb[0].mxu0 %v4522
      %v4648 = vpop.f32.mrb[0].mxu0
      %v4649 = vadd.f32 %v4468, %v4648
      %v4650 = vpop.f32.mrb[0].mxu0
      %v4651 = vpop.f32.mrb[0].mxu0
      %v4652 = vadd.f32 %v4468, %v4651
      %v4653 = vpop.f32.mrb[0].mxu0
      %4654 = vmatprep.mubr.bf16.mxu0 0
      %4655 = vmatmul.mubr.bf16.gmra.mrb[0].mxu0 %v4525
      %v4656 = vpop.f32.mrb[0].mxu0
      %v4657 = vadd.f32 %v4468, %v4656
      %v4658 = vpop.f32.mrb[0].mxu0
      %v4659 = vpop.f32.mrb[0].mxu0
      %v4660 = vadd.f32 %v4468, %v4659
      %v4661 = vpop.f32.mrb[0].mxu0
      %4662 = vmatprep.mubr.bf16.mxu0 0
      %4663 = vmatmul.mubr.bf16.gmra.mrb[0].mxu0 %v4528
      %v4664 = vpop.f32.mrb[0].mxu0
      %v4665 = vadd.f32 %v4468, %v4664
      %v4666 = vpop.f32.mrb[0].mxu0
      %v4667 = vpop.f32.mrb[0].mxu0
      %v4668 = vadd.f32 %v4468, %v4667
      %v4669 = vpop.f32.mrb[0].mxu0
      %4670 = vmatprep.mubr.bf16.mxu0 0
      %4671 = vmatmul.mubr.bf16.gmra.mrb[0].mxu0 %v4531
      %v4672 = vpop.f32.mrb[0].mxu0
      %v4673 = vadd.f32 %v4468, %v4672
      %v4674 = vpop.f32.mrb[0].mxu0
      %v4675 = vpop.f32.mrb[0].mxu0
      %v4676 = vadd.f32 %v4468, %v4675
      %v4677 = vpop.f32.mrb[0].mxu0
      %4678 = vmatprep.mubr.bf16.mxu0 0
      %4679 = vmatmul.mubr.bf16.gmra.mrb[0].mxu0 %v4534
      %v4680 = vpop.f32.mrb[0].mxu0
      %v4681 = vadd.f32 %v4468, %v4680
      %v4682 = vpop.f32.mrb[0].mxu0
      %v4683 = vpop.f32.mrb[0].mxu0
      %v4684 = vadd.f32 %v4468, %v4683
      %v4685 = vpop.f32.mrb[0].mxu0
      %4686 = vmatprep.mubr.bf16.mxu0 0
      %4687 = vmatmul.mubr.bf16.gmra.mrb[0].mxu0 %v4537
      %v4688 = vpop.f32.mrb[0].mxu0
      %v4689 = vadd.f32 %v4468, %v4688
      %v4690 = vpop.f32.mrb[0].mxu0
      %v4691 = vpop.f32.mrb[0].mxu0
      %v4692 = vadd.f32 %v4468, %v4691
      %v4693 = vpop.f32.mrb[0].mxu0
      %4694 = vmatprep.mubr.bf16.mxu0 0
      %4695 = vmatmul.mubr.bf16.gmra.mrb[0].mxu0 %v4540
      %v4696 = vpop.f32.mrb[0].mxu0
      %v4697 = vadd.f32 %v4468, %v4696
      %v4698 = vpop.f32.mrb[0].mxu0
      %v4699 = vpop.f32.mrb[0].mxu0
      %v4700 = vadd.f32 %v4468, %v4699
      %v4701 = vpop.f32.mrb[0].mxu0
      %4702 = vdwg.mxu0
      %4703 = vst.msk [vmem:[%s224] sm:$0xff] %vm4104, %v4577
      %4704 = vst.msk [vmem:[%s224 + $0x8] sm:$0xff] %vm4104, %v4580
      %4705 = vst.msk [vmem:[%s224 + $0x10] sm:$0xff] %vm4104, %v4585
      %4706 = vst.msk [vmem:[%s224 + $0x18] sm:$0xff] %vm4104, %v4588
      %4707 = vst.msk [vmem:[%s224 + $0x20] sm:$0xff] %vm4104, %v4593
      %4708 = vst.msk [vmem:[%s224 + $0x28] sm:$0xff] %vm4104, %v4596
      %4709 = vst.msk [vmem:[%s224 + $0x30] sm:$0xff] %vm4104, %v4601
      %4710 = vst.msk [vmem:[%s224 + $0x38] sm:$0xff] %vm4104, %v4604
      %4711 = vst.msk [vmem:[%s224 + $0x40] sm:$0xff] %vm4104, %v4609
      %4712 = vst.msk [vmem:[%s224 + $0x48] sm:$0xff] %vm4104, %v4612
      %4713 = vst.msk [vmem:[%s224 + $0x50] sm:$0xff] %vm4104, %v4617
      %4714 = vst.msk [vmem:[%s224 + $0x58] sm:$0xff] %vm4104, %v4620
      %4715 = vst.msk [vmem:[%s224 + $0x60] sm:$0xff] %vm4104, %v4625
      %4716 = vst.msk [vmem:[%s224 + $0x68] sm:$0xff] %vm4104, %v4628
      %4717 = vst.msk [vmem:[%s224 + $0x70] sm:$0xff] %vm4104, %v4633
      %4718 = vst.msk [vmem:[%s224 + $0x78] sm:$0xff] %vm4104, %v4636
      %4719 = vst.msk [vmem:[%s224 + $0x80] sm:$0xff] %vm4104, %v4641
      %4720 = vst.msk [vmem:[%s224 + $0x88] sm:$0xff] %vm4104, %v4644
      %4721 = vst.msk [vmem:[%s224 + $0x90] sm:$0xff] %vm4104, %v4649
      %4722 = vst.msk [vmem:[%s224 + $0x98] sm:$0xff] %vm4104, %v4652
      %4723 = vst.msk [vmem:[%s224 + $0xa0] sm:$0xff] %vm4104, %v4657
      %4724 = vst.msk [vmem:[%s224 + $0xa8] sm:$0xff] %vm4104, %v4660
      %4725 = vst.msk [vmem:[%s224 + $0xb0] sm:$0xff] %vm4104, %v4665
      %4726 = vst.msk [vmem:[%s224 + $0xb8] sm:$0xff] %vm4104, %v4668
      %4727 = vst.msk [vmem:[%s224 + $0xc0] sm:$0xff] %vm4104, %v4673
      %4728 = vst.msk [vmem:[%s224 + $0xc8] sm:$0xff] %vm4104, %v4676
      %4729 = vst.msk [vmem:[%s224 + $0xd0] sm:$0xff] %vm4104, %v4681
      %4730 = vst.msk [vmem:[%s224 + $0xd8] sm:$0xff] %vm4104, %v4684
      %4731 = vst.msk [vmem:[%s224 + $0xe0] sm:$0xff] %vm4104, %v4689
      %4732 = vst.msk [vmem:[%s224 + $0xe8] sm:$0xff] %vm4104, %v4692
      %4733 = vst.msk [vmem:[%s224 + $0xf0] sm:$0xff] %vm4104, %v4697
      %4734 = vst.msk [vmem:[%s224 + $0xf8] sm:$0xff] %vm4104, %v4700
      %p4735 = scmp.lt.s32.totalorder %s16, 1
      %s4736 = scalar_select %p4735, %s16, 1
      %s4737 = smul.addr %s4736, 32
      %s4738 = smul.addr %s4737, 8
      %s4739 = scalar_lea.vmem %s5, %s4738
      // Predicated region
      $region41: #{tpu_custom_call.1} parent=39 // pred_check
        %p4740 = pneg %p144
      $region42: #{tpu_custom_call.1} parent=39 // pred_check_branch
        %4742 = sbr.rel (%p4740) target = $region44
      $region43: #{tpu_custom_call.1} parent=39 // pred_region
        _
      $region44: #{tpu_custom_call.1} parent=39 // pred_fallthru
        _
    $region40: #{tpu_custom_call.1} parent=5 // pred_fallthru
      _
    %p4743 = scmp.le.s32.totalorder 2, %s11
    // Predicated region
    $region45: #{tpu_custom_call.1} parent=5 // pred_check
      %p4744 = pneg %p4743
    $region46: #{tpu_custom_call.1} parent=5 // pred_check_branch
      %4746 = sbr.rel (%p4744) target = $region48
    $region47: #{tpu_custom_call.1} parent=5 // pred_region
      %s4747 = ssub.s32 %s11, 2
      // Predicated region
      $region49: #{tpu_custom_call.1} parent=47 // pred_check
        %p4748 = pneg %p150
      $region50: #{tpu_custom_call.1} parent=47 // pred_check_branch
        %4750 = sbr.rel (%p4748) target = $region52
      $region51: #{tpu_custom_call.1} parent=47 // pred_region
        %p4751 = scmp.lt.s32.totalorder %s17, 1
        %s4752 = scalar_select %p4751, %s17, 1
        %s4753 = smul.addr %s4752, 32
        %s4754 = smul.addr %s4753, 8
        %s4755 = scalar_lea.vmem %s5, %s4754
      $region52: #{tpu_custom_call.1} parent=47 // pred_fallthru
        _
    $region48: #{tpu_custom_call.1} parent=5 // pred_fallthru
      _
  $region6: #{tpu_custom_call.1} parent=0 // loop_footer
    %s15 = sadd.s32 1, %s11
  $region7: #{tpu_custom_call.1} parent=0 // loop_footer_branch
    %10 = sbr.rel target = $region3
  $region8: #{tpu_custom_call.1} parent=0 // loop_exit
    _

</llo_original>
